<compile_context>
chip_gen: v5e
topology: v5e:2x2
jax: 0.10.0
libtpu: 0.0.40
codegen_flags: <defaults>
</compile_context>

<pallas_src>
import jax
import jax.numpy as jnp
from jax.experimental import pallas as pl
from jax.experimental.pallas import tpu as pltpu

LANES = 128        # lane width (last dim)
SUBLANES = 8       # sublane granularity (second-to-last dim)
TILE_ROWS = 2048   # default rows per grid step; (2048,128) f32 = 1 MiB / input


def _make_ewc_kernel(red_axis):
    """Build the streaming-reduction kernel with the reduction grid axis fixed."""

    def kernel(p_ref, mean_ref, fisher_ref, out_ref, acc_ref):
        i = pl.program_id(red_axis)

        @pl.when(i == 0)
        def _():
            acc_ref[...] = jnp.zeros_like(acc_ref)

        # Inputs may be bf16 (or f32); cast to f32 on the VPU — free under DMA.
        p = p_ref[...].astype(jnp.float32)
        m = mean_ref[...].astype(jnp.float32)
        f = fisher_ref[...].astype(jnp.float32)
        d = p - m
        acc_ref[...] += f * d * d

        @pl.when(i == pl.num_programs(red_axis) - 1)
        def _():
            out_ref[...] = jnp.sum(acc_ref[...]).reshape(out_ref.shape)

    return kernel


def pack_ewc_buffers(tensors, *, dtype=None, tile_rows=TILE_ROWS):
    """Flatten+concat arrays into a zero-padded (rows, 128) slab (native dtype).

    Padding is adaptive: at most one (8,128) tile for small models, at most one
    `tile_rows` block for large ones.  Call this ONCE per task for the constant
    prev-task means / Fisher buffers and reuse the packed slabs; for the live
    params, prefer keeping a flat parameter vector (e.g. ravel_pytree once)
    rather than re-concatenating every training step.
    """
    flats = [jnp.ravel(t) for t in tensors]
    vec = flats[0] if len(flats) == 1 else jnp.concatenate(flats)
    if dtype is not None:
        vec = vec.astype(dtype)
    n = vec.shape[0]
    rows = pl.cdiv(n, LANES)
    rows = pl.cdiv(rows, SUBLANES) * SUBLANES          # multiple of 8 sublanes
    tr = min(tile_rows, rows)
    rows = pl.cdiv(rows, tr) * tr                      # multiple of the tile
    pad = rows * LANES - n
    if pad:
        vec = jnp.pad(vec, (0, pad))                   # zero Fisher tail => 0 loss
    return vec.reshape(rows, LANES)


def ewc_loss_packed(p_tiles, mean_tiles, fisher_tiles, *, gamma=1.0,
                    online=True, tile_rows=TILE_ROWS, num_cores=1):
    """EWC loss from already-packed (rows, 128) slabs (any float dtype)."""
    rows, lanes = p_tiles.shape
    assert lanes == LANES
    assert mean_tiles.shape == p_tiles.shape
    assert fisher_tiles.shape == p_tiles.shape

    tr = min(tile_rows, rows)
    if rows % tr != 0:
        raise ValueError(
            f"packed slab rows={rows} not compatible with tile_rows={tile_rows}; "
            "pack with the same tile_rows used at call time.")
    steps = rows // tr

    n_elems = rows * LANES
    bytes_accessed = n_elems * (p_tiles.dtype.itemsize
                                + mean_tiles.dtype.itemsize
                                + fisher_tiles.dtype.itemsize) + 4
    cost = pl.CostEstimate(flops=4 * n_elems, transcendentals=0,
                           bytes_accessed=bytes_accessed)

    if num_cores > 1 and steps % num_cores == 0:
        # Optional v7x path: shard the row stream across the 2 TensorCores.
        steps_per_core = steps // num_cores
        tile_spec = pl.BlockSpec((tr, LANES),
                                 lambda c, i: (c * steps_per_core + i, 0))
        partials = pl.pallas_call(
            _make_ewc_kernel(1),
            out_shape=jax.ShapeDtypeStruct((num_cores, 1, 1), jnp.float32),
            grid_spec=pltpu.PrefetchScalarGridSpec(
                num_scalar_prefetch=0,
                grid=(num_cores, steps_per_core),
                in_specs=[tile_spec, tile_spec, tile_spec],
                out_specs=pl.BlockSpec((1, 1, 1), lambda c, i: (c, 0, 0)),
                scratch_shapes=[pltpu.VMEM((tr, LANES), jnp.float32)],
            ),
            compiler_params=pltpu.CompilerParams(
                dimension_semantics=(pltpu.CORE_PARALLEL, "arbitrary")),
            cost_estimate=cost,
        )(p_tiles, mean_tiles, fisher_tiles)
    else:
        # Default single-axis streaming reduction (v5e / v6e, or v7x single TC).
        tile_spec = pl.BlockSpec((tr, LANES), lambda i: (i, 0))
        partials = pl.pallas_call(
            _make_ewc_kernel(0),
            out_shape=jax.ShapeDtypeStruct((1, 1), jnp.float32),
            grid_spec=pltpu.PrefetchScalarGridSpec(
                num_scalar_prefetch=0,
                grid=(steps,),
                in_specs=[tile_spec, tile_spec, tile_spec],
                out_specs=pl.BlockSpec((1, 1), lambda i: (0, 0)),
                scratch_shapes=[pltpu.VMEM((tr, LANES), jnp.float32)],
            ),
            compiler_params=pltpu.CompilerParams(
                dimension_semantics=("arbitrary",)),
            cost_estimate=cost,
        )(p_tiles, mean_tiles, fisher_tiles)

    # `fisher = gamma * fisher if online else fisher`; 0.5 * sum(losses).
    # gamma may be a traced jnp scalar — keep it as array arithmetic.
    scale = jnp.asarray(gamma, jnp.float32) if online else jnp.float32(1.0)
    return 0.5 * scale * jnp.sum(partials)


def ewc_loss(params, prev_params, fishers, *, gamma=1.0, online=True,
             ewc_task_count=1, tile_rows=TILE_ROWS, num_cores=1):
    """JAX/Pallas equivalent of ContinualLearner.ewc_loss().

    params / prev_params / fishers: lists of arrays with matching shapes
    (current params, `*_EWC_prev_task` buffers, `*_EWC_estimated_fisher`
    buffers).  For best performance pre-pack the constant prev_params / fishers
    once per task with `pack_ewc_buffers` and call `ewc_loss_packed` directly
    (avoids re-concatenating the live params every step).
    For non-online EWC with multiple tasks, append each task's buffers to the
    lists (the sum over tasks is the same sum over entries).
    """
    if ewc_task_count == 0:
        return jnp.float32(0.0)
    p = pack_ewc_buffers(params, tile_rows=tile_rows)
    m = pack_ewc_buffers(prev_params, tile_rows=tile_rows)
    f = pack_ewc_buffers(fishers, tile_rows=tile_rows)
    return ewc_loss_packed(p, m, f, gamma=gamma, online=online,
                           tile_rows=tile_rows, num_cores=num_cores)


def ewc_loss_reference(params, prev_params, fishers, *, gamma=1.0, online=True,
                       ewc_task_count=1):
    """Pure-JAX reference mirroring the PyTorch loop (f32 accumulation)."""
    if ewc_task_count == 0:
        return jnp.float32(0.0)
    losses = []
    for p, mean, fisher in zip(params, prev_params, fishers):
        p = p.astype(jnp.float32)
        mean = mean.astype(jnp.float32)
        fisher = fisher.astype(jnp.float32)
        fisher = gamma * fisher if online else fisher
        losses.append(jnp.sum(fisher * (p - mean) ** 2))
    return 0.5 * sum(losses)


if __name__ == "__main__":
    # Deterministic synthetic parameters for a small classifier subclass:
    # hidden weight (768, 768), linear head weight (10, 256) and bias (10,),
    # plus matching prev-task means and (non-negative) Fisher estimates.
    key = jax.random.PRNGKey(0)
    ks = jax.random.split(key, 9)

    w1 = jax.random.normal(ks[0], (768, 768), dtype=jnp.float32) * 0.05
    w2 = jax.random.normal(ks[1], (10, 256), dtype=jnp.float32) * 0.1
    b2 = jax.random.normal(ks[2], (10,), dtype=jnp.float32) * 0.1
    params = [w1, w2, b2]

    prev_params = [p + 0.05 * jax.random.normal(k, p.shape, dtype=jnp.float32)
                   for p, k in zip(params, ks[3:6])]
    fishers = [jax.random.normal(k, p.shape, dtype=jnp.float32) ** 2
               for p, k in zip(params, ks[6:9])]

    # ---- f32 path: pack constant per-task buffers once, params per step. ----
    mean_tiles = pack_ewc_buffers(prev_params)
    fisher_tiles = pack_ewc_buffers(fishers)
    p_tiles = pack_ewc_buffers(params)

    loss = jax.block_until_ready(
        ewc_loss_packed(p_tiles, mean_tiles, fisher_tiles,
                        gamma=1.0, online=True))
    ref = ewc_loss_reference(params, prev_params, fishers,
                             gamma=1.0, online=True, ewc_task_count=1)
    assert jnp.allclose(loss, ref, rtol=1e-4, atol=1e-5), (loss, ref)

    # ---- bf16 path: native-dtype slabs, in-kernel f32 cast (half the bytes). ----
    params_bf = [p.astype(jnp.bfloat16) for p in params]
    prev_bf = [p.astype(jnp.bfloat16) for p in prev_params]
    fish_bf = [p.astype(jnp.bfloat16) for p in fishers]
    loss_bf = jax.block_until_ready(
        ewc_loss(params_bf, prev_bf, fish_bf, gamma=0.9, online=True,
                 ewc_task_count=1))
    ref_bf = ewc_loss_reference(params_bf, prev_bf, fish_bf,
                                gamma=0.9, online=True, ewc_task_count=1)
    assert jnp.allclose(loss_bf, ref_bf, rtol=1e-3, atol=1e-5), (loss_bf, ref_bf)

    # ---- traced gamma under jit (no float() cast inside). ----
    jit_loss = jax.jit(lambda g: ewc_loss_packed(
        p_tiles, mean_tiles, fisher_tiles, gamma=g, online=True))
    lj = jax.block_until_ready(jit_loss(jnp.float32(1.0)))
    assert jnp.allclose(lj, ref, rtol=1e-4, atol=1e-5), (lj, ref)

    # ---- EWC_task_count == 0 path returns 0.0 (no kernel launch), as in PyTorch. ----
    zero = ewc_loss(params, prev_params, fishers, ewc_task_count=0)
    assert float(zero) == 0.0

    print("KERNEL_OK")
</pallas_src>

<mosaic_0001>
module attributes {stable_mosaic.version = 11 : i64} {
  func.func @kernel(%arg0: i32, %arg1: memref<2048x128xf32, #tpu.memory_space<vmem>>, %arg2: memref<2048x128xf32, #tpu.memory_space<vmem>>, %arg3: memref<2048x128xf32, #tpu.memory_space<vmem>>, %arg4: memref<1x1xf32, #tpu.memory_space<vmem>>, %arg5: memref<2048x128xf32, #tpu.memory_space<vmem>>) attributes {dimension_semantics = [#tpu.dimension_semantics<arbitrary>], iteration_bounds = array<i64: 3>, scalar_prefetch = 0 : i64, scratch_operands = 1 : i64, tpu.core_type = #tpu.core_type<tc>, window_params = [{transform_indices = @transform_0, window_bounds = array<i64: 2048, 128>}, {transform_indices = @transform_1, window_bounds = array<i64: 2048, 128>}, {transform_indices = @transform_2, window_bounds = array<i64: 2048, 128>}, {pipeline_mode = #tpu.pipeline_mode<synchronous>, transform_indices = @transform_3, window_bounds = array<i64: 1, 1>}]} {
    %c0_i32 = arith.constant 0 : i32
    %0 = arith.cmpi eq, %arg0, %c0_i32 : i32
    %1 = arith.extui %0 : i1 to i32
    %c0_i32_0 = arith.constant 0 : i32
    %2 = arith.cmpi ne, %1, %c0_i32_0 : i32
    scf.if %2 {
      %cst = arith.constant 0.000000e+00 : f32
      %15 = vector.broadcast %cst : f32 to vector<2048x128xf32>
      %c0_11 = arith.constant 0 : index
      %c0_12 = arith.constant 0 : index
      %16 = vector.load %arg5[%c0_11, %c0_12] : memref<2048x128xf32, #tpu.memory_space<vmem>>, vector<2048x128xf32>
      tpu.vector_store %arg5[%c0_11, %c0_12], %15 {strides = array<i32>} : memref<2048x128xf32, #tpu.memory_space<vmem>>, vector<2048x128xf32>,
    } else {
    }
    %c0 = arith.constant 0 : index
    %c0_1 = arith.constant 0 : index
    %3 = vector.load %arg1[%c0, %c0_1] : memref<2048x128xf32, #tpu.memory_space<vmem>>, vector<2048x128xf32>
    %c0_2 = arith.constant 0 : index
    %c0_3 = arith.constant 0 : index
    %4 = vector.load %arg2[%c0_2, %c0_3] : memref<2048x128xf32, #tpu.memory_space<vmem>>, vector<2048x128xf32>
    %c0_4 = arith.constant 0 : index
    %c0_5 = arith.constant 0 : index
    %5 = vector.load %arg3[%c0_4, %c0_5] : memref<2048x128xf32, #tpu.memory_space<vmem>>, vector<2048x128xf32>
    %6 = arith.subf %3, %4 : vector<2048x128xf32>
    %c0_6 = arith.constant 0 : index
    %c0_7 = arith.constant 0 : index
    %7 = vector.load %arg5[%c0_6, %c0_7] : memref<2048x128xf32, #tpu.memory_space<vmem>>, vector<2048x128xf32>
    %8 = arith.mulf %5, %6 : vector<2048x128xf32>
    %9 = arith.mulf %8, %6 : vector<2048x128xf32>
    %10 = arith.addf %7, %9 : vector<2048x128xf32>
    %c0_8 = arith.constant 0 : index
    %c0_9 = arith.constant 0 : index
    %11 = vector.load %arg5[%c0_8, %c0_9] : memref<2048x128xf32, #tpu.memory_space<vmem>>, vector<2048x128xf32>
    tpu.vector_store %arg5[%c0_8, %c0_9], %10 {strides = array<i32>} : memref<2048x128xf32, #tpu.memory_space<vmem>>, vector<2048x128xf32>,
    %c2_i32 = arith.constant 2 : i32
    %12 = arith.cmpi eq, %arg0, %c2_i32 : i32
    %13 = arith.extui %12 : i1 to i32
    %c0_i32_10 = arith.constant 0 : i32
    %14 = arith.cmpi ne, %13, %c0_i32_10 : i32
    scf.if %14 {
      %c0_11 = arith.constant 0 : index
      %c0_12 = arith.constant 0 : index
      %15 = vector.load %arg5[%c0_11, %c0_12] : memref<2048x128xf32, #tpu.memory_space<vmem>>, vector<2048x128xf32>
      %16 = vector.shape_cast %15 : vector<2048x128xf32> to vector<1x2048x128xf32>
      %cst = arith.constant dense<0.000000e+00> : vector<1xf32>
      %17 = vector.multi_reduction <add>, %16, %cst [1, 2] : vector<1x2048x128xf32> to vector<1xf32>
      %18 = vector.shape_cast %17 : vector<1xf32> to vector<1x1x1xf32>
      %19 = vector.extract %18[0, 0, 0] : f32 from vector<1x1x1xf32>
      %20 = vector.broadcast %19 : f32 to vector<1x1xf32>
      %c0_13 = arith.constant 0 : index
      %c0_14 = arith.constant 0 : index
      %21 = vector.load %arg4[%c0_13, %c0_14] : memref<1x1xf32, #tpu.memory_space<vmem>>, vector<1x1xf32>
      tpu.vector_store %arg4[%c0_13, %c0_14], %20 {strides = array<i32>} : memref<1x1xf32, #tpu.memory_space<vmem>>, vector<1x1xf32>,
    } else {
    }
    return
  }
  func.func @transform_0(%arg0: i32) -> (i32, i32) {
    %c0_i32 = arith.constant 0 : i32
    %c0_i32_0 = arith.constant 0 : i32
    return %arg0, %c0_i32 : i32, i32
  }
  func.func @transform_1(%arg0: i32) -> (i32, i32) {
    %c0_i32 = arith.constant 0 : i32
    %c0_i32_0 = arith.constant 0 : i32
    return %arg0, %c0_i32 : i32, i32
  }
  func.func @transform_2(%arg0: i32) -> (i32, i32) {
    %c0_i32 = arith.constant 0 : i32
    %c0_i32_0 = arith.constant 0 : i32
    return %arg0, %c0_i32 : i32, i32
  }
  func.func @transform_3(%arg0: i32) -> (i32, i32) {
    %c0_i32 = arith.constant 0 : i32
    %c0_i32_0 = arith.constant 0 : i32
    %c0_i32_1 = arith.constant 0 : i32
    return %c0_i32, %c0_i32_0 : i32, i32
  }
}

</mosaic_0001>

<llo_original>
// kernel: tpu_custom_call.1
$region0: #{tpu_custom_call.1}
  #allocation0 [shape = 'u32[]', space=smem, size = 0x4, offset = 0x4, fixed_abs, tag = 'smem constant byte address 0x4 - core index']
  #allocation1 [shape = 'u32[72,128]{1,0:T(1,128)}', space=vmem, size = 0x9000, scoped, tag = 'internal scratch']
  #allocation2 [shape = 'f32[2048,128]{1,0:T(8,128)}', space=vmem, size = 0x100000, scoped, tag = 'scratch operand']
  %s0 = inlined_call_operand.hbm [shape: f32[6144,128], index: 0, kind: input, shape index: {}]
  %s1 = inlined_call_operand.hbm [shape: f32[6144,128], index: 1, kind: input, shape index: {}]
  %s2 = inlined_call_operand.hbm [shape: f32[6144,128], index: 2, kind: input, shape index: {}]
  %s3 = inlined_call_operand.hbm [shape: f32[1,1], index: 3, kind: output, shape index: {}]
  %s4 = sld [smem:[#allocation0]]
  $region65: #{tpu_custom_call.1} parent=0
    _
  %s6 = ssub.s32 1, %s4
  %s7 = scalar_select 0, %s6, %s4
  $region1: #{tpu_custom_call.1} parent=0
    #allocation3 [shape = 'u8[2097152]{0}', space=vmem, size = 0x200000, scoped, tag = 'input window, operand 0']
    #allocation4 [shape = 's32[2]{0}', space=sflag, size = 0x8, scoped, tag = 'scoped memory for tpu_custom_call.1']
    #allocation5 [shape = 's32[2]{0}', space=sflag, size = 0x8, scoped, tag = 'scoped memory for tpu_custom_call.1']
    #allocation6 [shape = 'u8[2097152]{0}', space=vmem, size = 0x200000, scoped, tag = 'input window, operand 1']
    #allocation7 [shape = 's32[2]{0}', space=sflag, size = 0x8, scoped, tag = 'scoped memory for tpu_custom_call.1']
    #allocation8 [shape = 'u8[2097152]{0}', space=vmem, size = 0x200000, scoped, tag = 'input window, operand 2']
    #allocation9 [shape = 'u8[512]{0}', space=vmem, size = 0x400, scoped, tag = 'output window, operand 0, single buffered']
    %8 = vsyncpa [#allocation4], 0
    %s9 = scalar_lea.sflag [#allocation4], 1
    %10 = vsyncpa %s9, 0
    %11 = vsyncpa [#allocation7], 0
    %s12 = scalar_lea.sflag [#allocation7], 1
    %13 = vsyncpa %s12, 0
    %14 = vsyncpa [#allocation5], 0
    loop: start=0, step=1, limit=5
    $region2: #{tpu_custom_call.1} parent=1 // loop_pre_header
      _
    $region3: #{tpu_custom_call.1} parent=1 // loop_header
      %s16 = sphi 0, %s20
      %p17 = scmp.ge.s32.totalorder %s16, 5
      %s26 = sphi 0, %s28
      %s29 = sphi 0, %s26
      %s30 = sphi 0, %s29
      %s46 = sphi 0, %s30
      %s52 = sphi 0, %s54
      %s55 = sphi 0, %s52
      %s56 = sphi 0, %s55
      %s72 = sphi 0, %s56
      %s78 = sphi 0, %s80
      %s81 = sphi 0, %s78
      %s82 = sphi 0, %s81
      %s98 = sphi 0, %s82
      %s102 = sphi 0, %s102
      %s104 = sphi 0, %s102
      %s105 = sphi 0, %s104
      %s119 = sphi 0, %s105
    $region4: #{tpu_custom_call.1} parent=1 // loop_header_branch
      %19 = sbr.rel (%p17) target = $region8
    $region5: #{tpu_custom_call.1} parent=1 // loop_body
      %s21 = ssub.s32 %s16, 1
      %s22 = ssub.s32 %s16, 2
      %s23 = sadd.s32 %s16, 1
      %s24 = ssub.s32 %s16, %s23
      %p25 = scmp.eq.s32.totalorder %s24, 0
      %s27 = sadd.s32 %s26, 1
      %s28 = scalar_select %p25, %s26, %s27
      %p31 = pneg %p25
      %p32 = scmp.eq.s32.totalorder %s16, 2
      %p33 = por %p31, %p32
      %p34 = scmp.ne.s32.totalorder %s26, %s29
      %p35 = scmp.eq.s32.totalorder %s16, 0
      %p36 = por %p34, %p35
      %p37 = scmp.ne.s32.totalorder %s26, %s29
      %p38 = scmp.eq.s32.totalorder %s21, 2
      %p39 = por %p37, %p38
      %p40 = scmp.ne.s32.totalorder %s29, %s30
      %p41 = scmp.eq.s32.totalorder %s21, 0
      %p42 = por %p40, %p41
      %p43 = scmp.ne.s32.totalorder %s29, %s30
      %p44 = scmp.eq.s32.totalorder %s22, 2
      %p45 = por %p43, %p44
      %p47 = scmp.ne.s32.totalorder %s30, %s46
      %p48 = scmp.eq.s32.totalorder %s22, 0
      %p49 = por %p47, %p48
      %s50 = ssub.s32 %s16, %s23
      %p51 = scmp.eq.s32.totalorder %s50, 0
      %s53 = sadd.s32 %s52, 1
      %s54 = scalar_select %p51, %s52, %s53
      %p57 = pneg %p51
      %p58 = scmp.eq.s32.totalorder %s16, 2
      %p59 = por %p57, %p58
      %p60 = scmp.ne.s32.totalorder %s52, %s55
      %p61 = scmp.eq.s32.totalorder %s16, 0
      %p62 = por %p60, %p61
      %p63 = scmp.ne.s32.totalorder %s52, %s55
      %p64 = scmp.eq.s32.totalorder %s21, 2
      %p65 = por %p63, %p64
      %p66 = scmp.ne.s32.totalorder %s55, %s56
      %p67 = scmp.eq.s32.totalorder %s21, 0
      %p68 = por %p66, %p67
      %p69 = scmp.ne.s32.totalorder %s55, %s56
      %p70 = scmp.eq.s32.totalorder %s22, 2
      %p71 = por %p69, %p70
      %p73 = scmp.ne.s32.totalorder %s56, %s72
      %p74 = scmp.eq.s32.totalorder %s22, 0
      %p75 = por %p73, %p74
      %s76 = ssub.s32 %s16, %s23
      %p77 = scmp.eq.s32.totalorder %s76, 0
      %s79 = sadd.s32 %s78, 1
      %s80 = scalar_select %p77, %s78, %s79
      %p83 = pneg %p77
      %p84 = scmp.eq.s32.totalorder %s16, 2
      %p85 = por %p83, %p84
      %p86 = scmp.ne.s32.totalorder %s78, %s81
      %p87 = scmp.eq.s32.totalorder %s16, 0
      %p88 = por %p86, %p87
      %p89 = scmp.ne.s32.totalorder %s78, %s81
      %p90 = scmp.eq.s32.totalorder %s21, 2
      %p91 = por %p89, %p90
      %p92 = scmp.ne.s32.totalorder %s81, %s82
      %p93 = scmp.eq.s32.totalorder %s21, 0
      %p94 = por %p92, %p93
      %p95 = scmp.ne.s32.totalorder %s81, %s82
      %p96 = scmp.eq.s32.totalorder %s22, 2
      %p97 = por %p95, %p96
      %p99 = scmp.ne.s32.totalorder %s82, %s98
      %p100 = scmp.eq.s32.totalorder %s22, 0
      %p101 = por %p99, %p100
      %s103 = sadd.s32 %s102, 1
      %p106 = scmp.eq.s32.totalorder %s16, 2
      %p107 = scmp.ne.s32.totalorder %s102, %s104
      %p108 = scmp.eq.s32.totalorder %s16, 0
      %p109 = por %p107, %p108
      %p110 = scmp.ne.s32.totalorder %s102, %s104
      %p111 = scmp.eq.s32.totalorder %s21, 2
      %p112 = por %p110, %p111
      %p113 = scmp.ne.s32.totalorder %s104, %s105
      %p114 = scmp.eq.s32.totalorder %s21, 0
      %p115 = por %p113, %p114
      %p116 = scmp.ne.s32.totalorder %s104, %s105
      %p117 = scmp.eq.s32.totalorder %s22, 2
      %p118 = por %p116, %p117
      %p120 = scmp.ne.s32.totalorder %s105, %s119
      %p121 = scmp.eq.s32.totalorder %s22, 0
      %p122 = por %p120, %p121
      %p123 = scmp.le.s32.totalorder 1, %s16
      %p124 = scmp.lt.s32.totalorder %s16, 4
      %p125 = pnand %p123, %p124
      %p126 = pneg %p125
      // Predicated region
      $region9: #{tpu_custom_call.1} parent=5 // pred_check
        _
      $region10: #{tpu_custom_call.1} parent=5 // pred_check_branch
        %128 = sbr.rel (%p125) target = $region12
      $region11: #{tpu_custom_call.1} parent=5 // pred_region
        %s129 = ssub.s32 %s16, 1
      $region12: #{tpu_custom_call.1} parent=5 // pred_fallthru
        _
      %p130 = scmp.lt.s32.totalorder %s16, 3
      // Predicated region
      $region13: #{tpu_custom_call.1} parent=5 // pred_check
        %p131 = pneg %p130
      $region14: #{tpu_custom_call.1} parent=5 // pred_check_branch
        %133 = sbr.rel (%p131) target = $region16
      $region15: #{tpu_custom_call.1} parent=5 // pred_region
        // Predicated region
        $region17: #{tpu_custom_call.1} parent=15 // pred_check
          %p134 = pneg %p36
        $region18: #{tpu_custom_call.1} parent=15 // pred_check_branch
          %136 = sbr.rel (%p134) target = $region20
        $region19: #{tpu_custom_call.1} parent=15 // pred_region
          %s137 = sand.u32 %s26, 1
          %s138 = scalar_lea.sflag [#allocation4], %s137
          %s139 = sand.u32 %s26, 1
          %s140 = smul.addr %s139, 2048
          %s141 = scalar_lea.vmem [#allocation3], %s140
          %s142 = smul.u32 256, %s16
          %144 = vsyncadd %s138, 0
          %s145 = smul.addr %s142, 8
          %s146 = scalar_lea.hbm %s0, %s145
          %s147 = sshll.u32 %s146, 4
          %s148 = int_to_ptr.hbm [resolvable:$true] %s147
          %s149 = sshll.u32 %s141, 4
          %s150 = int_to_ptr.vmem [resolvable:$true] %s149
          %155 = dma.hbm_to_vmem [thread:$0]  %s148, 32768, %s150, %s138, 128, 128, 8
        $region20: #{tpu_custom_call.1} parent=15 // pred_fallthru
          _
        // Predicated region
        $region21: #{tpu_custom_call.1} parent=15 // pred_check
          %p156 = pneg %p62
        $region22: #{tpu_custom_call.1} parent=15 // pred_check_branch
          %158 = sbr.rel (%p156) target = $region24
        $region23: #{tpu_custom_call.1} parent=15 // pred_region
          %s159 = sand.u32 %s16, 1
          %s160 = scalar_lea.sflag [#allocation7], %s159
          %s161 = sand.u32 %s52, 1
          %s162 = smul.addr %s161, 2048
          %s163 = scalar_lea.vmem [#allocation6], %s162
          %s164 = smul.u32 256, %s16
          %166 = vsyncadd %s160, 0
          %s167 = smul.addr %s164, 8
          %s168 = scalar_lea.hbm %s1, %s167
          %s169 = sshll.u32 %s168, 4
          %s170 = int_to_ptr.hbm [resolvable:$true] %s169
          %s171 = sshll.u32 %s163, 4
          %s172 = int_to_ptr.vmem [resolvable:$true] %s171
          %177 = dma.hbm_to_vmem [thread:$0]  %s170, 32768, %s172, %s160, 128, 128, 8
        $region24: #{tpu_custom_call.1} parent=15 // pred_fallthru
          _
        // Predicated region
        $region25: #{tpu_custom_call.1} parent=15 // pred_check
          %p178 = pneg %p88
        $region26: #{tpu_custom_call.1} parent=15 // pred_check_branch
          %180 = sbr.rel (%p178) target = $region28
        $region27: #{tpu_custom_call.1} parent=15 // pred_region
          %s181 = sand.u32 %s16, 1
          %s182 = scalar_lea.sflag [#allocation7], %s181
          %s183 = sand.u32 %s78, 1
          %s184 = smul.addr %s183, 2048
          %s185 = scalar_lea.vmem [#allocation8], %s184
          %s186 = smul.u32 256, %s16
          %188 = vsyncadd %s182, 0
          %s189 = smul.addr %s186, 8
          %s190 = scalar_lea.hbm %s2, %s189
          %s191 = sshll.u32 %s190, 4
          %s192 = int_to_ptr.hbm [resolvable:$true] %s191
          %s193 = sshll.u32 %s185, 4
          %s194 = int_to_ptr.vmem [resolvable:$true] %s193
          %199 = dma.hbm_to_vmem [thread:$0]  %s192, 32768, %s194, %s182, 128, 128, 8
        $region28: #{tpu_custom_call.1} parent=15 // pred_fallthru
          _
      $region16: #{tpu_custom_call.1} parent=5 // pred_fallthru
        _
      %p200 = scmp.le.s32.totalorder 1, %s16
      %p201 = scmp.lt.s32.totalorder %s16, 4
      %p202 = pnand %p200, %p201
      %p203 = pneg %p202
      // Predicated region
      $region29: #{tpu_custom_call.1} parent=5 // pred_check
        _
      $region30: #{tpu_custom_call.1} parent=5 // pred_check_branch
        %205 = sbr.rel (%p202) target = $region32
      $region31: #{tpu_custom_call.1} parent=5 // pred_region
        %s206 = ssub.s32 %s16, 1
        %s207 = sand.u32 %s29, 1
        %s208 = scalar_lea.sflag [#allocation4], %s207
        %s209 = sand.u32 %s29, 1
        %s210 = smul.addr %s209, 2048
        %s211 = scalar_lea.vmem [#allocation3], %s210
        // Predicated region
        $region33: #{tpu_custom_call.1} parent=31 // pred_check
          %p212 = pneg %p42
        $region34: #{tpu_custom_call.1} parent=31 // pred_check_branch
          %214 = sbr.rel (%p212) target = $region36
        $region35: #{tpu_custom_call.1} parent=31 // pred_region
          %216 = dma.done %s208, 32768
        $region36: #{tpu_custom_call.1} parent=31 // pred_fallthru
          _
        %s217 = sand.u32 %s21, 1
        %s218 = scalar_lea.sflag [#allocation7], %s217
        %s219 = sand.u32 %s55, 1
        %s220 = smul.addr %s219, 2048
        %s221 = scalar_lea.vmem [#allocation6], %s220
        // Predicated region
        $region37: #{tpu_custom_call.1} parent=31 // pred_check
          %p222 = pneg %p68
        $region38: #{tpu_custom_call.1} parent=31 // pred_check_branch
          %224 = sbr.rel (%p222) target = $region40
        $region39: #{tpu_custom_call.1} parent=31 // pred_region
          %226 = dma.done %s218, 32768
        $region40: #{tpu_custom_call.1} parent=31 // pred_fallthru
          _
        %s227 = sand.u32 %s21, 1
        %s228 = scalar_lea.sflag [#allocation7], %s227
        %s229 = sand.u32 %s81, 1
        %s230 = smul.addr %s229, 2048
        %s231 = scalar_lea.vmem [#allocation8], %s230
        // Predicated region
        $region41: #{tpu_custom_call.1} parent=31 // pred_check
          %p232 = pneg %p94
        $region42: #{tpu_custom_call.1} parent=31 // pred_check_branch
          %234 = sbr.rel (%p232) target = $region44
        $region43: #{tpu_custom_call.1} parent=31 // pred_region
          %236 = dma.done %s228, 32768
        $region44: #{tpu_custom_call.1} parent=31 // pred_fallthru
          _
        %s237 = sand.u32 %s29, 1
        %s238 = scalar_lea.sflag [#allocation4], %s237
        %s239 = sand.u32 %s29, 1
        %s240 = smul.addr %s239, 2048
        %s241 = scalar_lea.vmem [#allocation3], %s240
        %p242 = pneg %p42
        %p243 = pneg %p39
        %s244 = sand.u32 %s21, 1
        %s245 = scalar_lea.sflag [#allocation7], %s244
        %s246 = sand.u32 %s55, 1
        %s247 = smul.addr %s246, 2048
        %s248 = scalar_lea.vmem [#allocation6], %s247
        %p249 = pneg %p68
        %p250 = pneg %p65
        %s251 = sand.u32 %s21, 1
        %s252 = scalar_lea.sflag [#allocation7], %s251
        %s253 = sand.u32 %s81, 1
        %s254 = smul.addr %s253, 2048
        %s255 = scalar_lea.vmem [#allocation8], %s254
        %p256 = pneg %p94
        %p257 = pneg %p91
        %p258 = pneg %p115
        %p259 = pneg %p112
        %s260 = smul.u32 256, %s21
        %s261 = smul.u32 256, %s21
        %s262 = smul.u32 256, %s21
        %p263 = scmp.eq.s32.totalorder %s21, 0
        // Predicated region
        $region45: #{tpu_custom_call.1} parent=31 // pred_check
          %p264 = pneg %p263
        $region46: #{tpu_custom_call.1} parent=31 // pred_check_branch
          %266 = sbr.rel (%p264) target = $region48
        $region47: #{tpu_custom_call.1} parent=31 // pred_region
          %267 = vst [vmem:[#allocation2] sm:$0xff] 0.0
          %268 = vst [vmem:[#allocation2 + $0x8] sm:$0xff] 0.0
          %269 = vst [vmem:[#allocation2 + $0x10] sm:$0xff] 0.0
          %270 = vst [vmem:[#allocation2 + $0x18] sm:$0xff] 0.0
          %271 = vst [vmem:[#allocation2 + $0x20] sm:$0xff] 0.0
          %272 = vst [vmem:[#allocation2 + $0x28] sm:$0xff] 0.0
          %273 = vst [vmem:[#allocation2 + $0x30] sm:$0xff] 0.0
          %274 = vst [vmem:[#allocation2 + $0x38] sm:$0xff] 0.0
          %275 = vst [vmem:[#allocation2 + $0x40] sm:$0xff] 0.0
          %276 = vst [vmem:[#allocation2 + $0x48] sm:$0xff] 0.0
          %277 = vst [vmem:[#allocation2 + $0x50] sm:$0xff] 0.0
          %278 = vst [vmem:[#allocation2 + $0x58] sm:$0xff] 0.0
          %279 = vst [vmem:[#allocation2 + $0x60] sm:$0xff] 0.0
          %280 = vst [vmem:[#allocation2 + $0x68] sm:$0xff] 0.0
          %281 = vst [vmem:[#allocation2 + $0x70] sm:$0xff] 0.0
          %282 = vst [vmem:[#allocation2 + $0x78] sm:$0xff] 0.0
          %283 = vst [vmem:[#allocation2 + $0x80] sm:$0xff] 0.0
          %284 = vst [vmem:[#allocation2 + $0x88] sm:$0xff] 0.0
          %285 = vst [vmem:[#allocation2 + $0x90] sm:$0xff] 0.0
          %286 = vst [vmem:[#allocation2 + $0x98] sm:$0xff] 0.0
          %287 = vst [vmem:[#allocation2 + $0xa0] sm:$0xff] 0.0
          %288 = vst [vmem:[#allocation2 + $0xa8] sm:$0xff] 0.0
          %289 = vst [vmem:[#allocation2 + $0xb0] sm:$0xff] 0.0
          %290 = vst [vmem:[#allocation2 + $0xb8] sm:$0xff] 0.0
          %291 = vst [vmem:[#allocation2 + $0xc0] sm:$0xff] 0.0
          %292 = vst [vmem:[#allocation2 + $0xc8] sm:$0xff] 0.0
          %293 = vst [vmem:[#allocation2 + $0xd0] sm:$0xff] 0.0
          %294 = vst [vmem:[#allocation2 + $0xd8] sm:$0xff] 0.0
          %295 = vst [vmem:[#allocation2 + $0xe0] sm:$0xff] 0.0
          %296 = vst [vmem:[#allocation2 + $0xe8] sm:$0xff] 0.0
          %297 = vst [vmem:[#allocation2 + $0xf0] sm:$0xff] 0.0
          %298 = vst [vmem:[#allocation2 + $0xf8] sm:$0xff] 0.0
          %299 = vst [vmem:[#allocation2 + $0x100] sm:$0xff] 0.0
          %300 = vst [vmem:[#allocation2 + $0x108] sm:$0xff] 0.0
          %301 = vst [vmem:[#allocation2 + $0x110] sm:$0xff] 0.0
          %302 = vst [vmem:[#allocation2 + $0x118] sm:$0xff] 0.0
          %303 = vst [vmem:[#allocation2 + $0x120] sm:$0xff] 0.0
          %304 = vst [vmem:[#allocation2 + $0x128] sm:$0xff] 0.0
          %305 = vst [vmem:[#allocation2 + $0x130] sm:$0xff] 0.0
          %306 = vst [vmem:[#allocation2 + $0x138] sm:$0xff] 0.0
          %307 = vst [vmem:[#allocation2 + $0x140] sm:$0xff] 0.0
          %308 = vst [vmem:[#allocation2 + $0x148] sm:$0xff] 0.0
          %309 = vst [vmem:[#allocation2 + $0x150] sm:$0xff] 0.0
          %310 = vst [vmem:[#allocation2 + $0x158] sm:$0xff] 0.0
          %311 = vst [vmem:[#allocation2 + $0x160] sm:$0xff] 0.0
          %312 = vst [vmem:[#allocation2 + $0x168] sm:$0xff] 0.0
          %313 = vst [vmem:[#allocation2 + $0x170] sm:$0xff] 0.0
          %314 = vst [vmem:[#allocation2 + $0x178] sm:$0xff] 0.0
          %315 = vst [vmem:[#allocation2 + $0x180] sm:$0xff] 0.0
          %316 = vst [vmem:[#allocation2 + $0x188] sm:$0xff] 0.0
          %317 = vst [vmem:[#allocation2 + $0x190] sm:$0xff] 0.0
          %318 = vst [vmem:[#allocation2 + $0x198] sm:$0xff] 0.0
          %319 = vst [vmem:[#allocation2 + $0x1a0] sm:$0xff] 0.0
          %320 = vst [vmem:[#allocation2 + $0x1a8] sm:$0xff] 0.0
          %321 = vst [vmem:[#allocation2 + $0x1b0] sm:$0xff] 0.0
          %322 = vst [vmem:[#allocation2 + $0x1b8] sm:$0xff] 0.0
          %323 = vst [vmem:[#allocation2 + $0x1c0] sm:$0xff] 0.0
          %324 = vst [vmem:[#allocation2 + $0x1c8] sm:$0xff] 0.0
          %325 = vst [vmem:[#allocation2 + $0x1d0] sm:$0xff] 0.0
          %326 = vst [vmem:[#allocation2 + $0x1d8] sm:$0xff] 0.0
          %327 = vst [vmem:[#allocation2 + $0x1e0] sm:$0xff] 0.0
          %328 = vst [vmem:[#allocation2 + $0x1e8] sm:$0xff] 0.0
          %329 = vst [vmem:[#allocation2 + $0x1f0] sm:$0xff] 0.0
          %330 = vst [vmem:[#allocation2 + $0x1f8] sm:$0xff] 0.0
          %331 = vst [vmem:[#allocation2 + $0x200] sm:$0xff] 0.0
          %332 = vst [vmem:[#allocation2 + $0x208] sm:$0xff] 0.0
          %333 = vst [vmem:[#allocation2 + $0x210] sm:$0xff] 0.0
          %334 = vst [vmem:[#allocation2 + $0x218] sm:$0xff] 0.0
          %335 = vst [vmem:[#allocation2 + $0x220] sm:$0xff] 0.0
          %336 = vst [vmem:[#allocation2 + $0x228] sm:$0xff] 0.0
          %337 = vst [vmem:[#allocation2 + $0x230] sm:$0xff] 0.0
          %338 = vst [vmem:[#allocation2 + $0x238] sm:$0xff] 0.0
          %339 = vst [vmem:[#allocation2 + $0x240] sm:$0xff] 0.0
          %340 = vst [vmem:[#allocation2 + $0x248] sm:$0xff] 0.0
          %341 = vst [vmem:[#allocation2 + $0x250] sm:$0xff] 0.0
          %342 = vst [vmem:[#allocation2 + $0x258] sm:$0xff] 0.0
          %343 = vst [vmem:[#allocation2 + $0x260] sm:$0xff] 0.0
          %344 = vst [vmem:[#allocation2 + $0x268] sm:$0xff] 0.0
          %345 = vst [vmem:[#allocation2 + $0x270] sm:$0xff] 0.0
          %346 = vst [vmem:[#allocation2 + $0x278] sm:$0xff] 0.0
          %347 = vst [vmem:[#allocation2 + $0x280] sm:$0xff] 0.0
          %348 = vst [vmem:[#allocation2 + $0x288] sm:$0xff] 0.0
          %349 = vst [vmem:[#allocation2 + $0x290] sm:$0xff] 0.0
          %350 = vst [vmem:[#allocation2 + $0x298] sm:$0xff] 0.0
          %351 = vst [vmem:[#allocation2 + $0x2a0] sm:$0xff] 0.0
          %352 = vst [vmem:[#allocation2 + $0x2a8] sm:$0xff] 0.0
          %353 = vst [vmem:[#allocation2 + $0x2b0] sm:$0xff] 0.0
          %354 = vst [vmem:[#allocation2 + $0x2b8] sm:$0xff] 0.0
          %355 = vst [vmem:[#allocation2 + $0x2c0] sm:$0xff] 0.0
          %356 = vst [vmem:[#allocation2 + $0x2c8] sm:$0xff] 0.0
          %357 = vst [vmem:[#allocation2 + $0x2d0] sm:$0xff] 0.0
          %358 = vst [vmem:[#allocation2 + $0x2d8] sm:$0xff] 0.0
          %359 = vst [vmem:[#allocation2 + $0x2e0] sm:$0xff] 0.0
          %360 = vst [vmem:[#allocation2 + $0x2e8] sm:$0xff] 0.0
          %361 = vst [vmem:[#allocation2 + $0x2f0] sm:$0xff] 0.0
          %362 = vst [vmem:[#allocation2 + $0x2f8] sm:$0xff] 0.0
          %363 = vst [vmem:[#allocation2 + $0x300] sm:$0xff] 0.0
          %364 = vst [vmem:[#allocation2 + $0x308] sm:$0xff] 0.0
          %365 = vst [vmem:[#allocation2 + $0x310] sm:$0xff] 0.0
          %366 = vst [vmem:[#allocation2 + $0x318] sm:$0xff] 0.0
          %367 = vst [vmem:[#allocation2 + $0x320] sm:$0xff] 0.0
          %368 = vst [vmem:[#allocation2 + $0x328] sm:$0xff] 0.0
          %369 = vst [vmem:[#allocation2 + $0x330] sm:$0xff] 0.0
          %370 = vst [vmem:[#allocation2 + $0x338] sm:$0xff] 0.0
          %371 = vst [vmem:[#allocation2 + $0x340] sm:$0xff] 0.0
          %372 = vst [vmem:[#allocation2 + $0x348] sm:$0xff] 0.0
          %373 = vst [vmem:[#allocation2 + $0x350] sm:$0xff] 0.0
          %374 = vst [vmem:[#allocation2 + $0x358] sm:$0xff] 0.0
          %375 = vst [vmem:[#allocation2 + $0x360] sm:$0xff] 0.0
          %376 = vst [vmem:[#allocation2 + $0x368] sm:$0xff] 0.0
          %377 = vst [vmem:[#allocation2 + $0x370] sm:$0xff] 0.0
          %378 = vst [vmem:[#allocation2 + $0x378] sm:$0xff] 0.0
          %379 = vst [vmem:[#allocation2 + $0x380] sm:$0xff] 0.0
          %380 = vst [vmem:[#allocation2 + $0x388] sm:$0xff] 0.0
          %381 = vst [vmem:[#allocation2 + $0x390] sm:$0xff] 0.0
          %382 = vst [vmem:[#allocation2 + $0x398] sm:$0xff] 0.0
          %383 = vst [vmem:[#allocation2 + $0x3a0] sm:$0xff] 0.0
          %384 = vst [vmem:[#allocation2 + $0x3a8] sm:$0xff] 0.0
          %385 = vst [vmem:[#allocation2 + $0x3b0] sm:$0xff] 0.0
          %386 = vst [vmem:[#allocation2 + $0x3b8] sm:$0xff] 0.0
          %387 = vst [vmem:[#allocation2 + $0x3c0] sm:$0xff] 0.0
          %388 = vst [vmem:[#allocation2 + $0x3c8] sm:$0xff] 0.0
          %389 = vst [vmem:[#allocation2 + $0x3d0] sm:$0xff] 0.0
          %390 = vst [vmem:[#allocation2 + $0x3d8] sm:$0xff] 0.0
          %391 = vst [vmem:[#allocation2 + $0x3e0] sm:$0xff] 0.0
          %392 = vst [vmem:[#allocation2 + $0x3e8] sm:$0xff] 0.0
          %393 = vst [vmem:[#allocation2 + $0x3f0] sm:$0xff] 0.0
          %394 = vst [vmem:[#allocation2 + $0x3f8] sm:$0xff] 0.0
          %395 = vst [vmem:[#allocation2 + $0x400] sm:$0xff] 0.0
          %396 = vst [vmem:[#allocation2 + $0x408] sm:$0xff] 0.0
          %397 = vst [vmem:[#allocation2 + $0x410] sm:$0xff] 0.0
          %398 = vst [vmem:[#allocation2 + $0x418] sm:$0xff] 0.0
          %399 = vst [vmem:[#allocation2 + $0x420] sm:$0xff] 0.0
          %400 = vst [vmem:[#allocation2 + $0x428] sm:$0xff] 0.0
          %401 = vst [vmem:[#allocation2 + $0x430] sm:$0xff] 0.0
          %402 = vst [vmem:[#allocation2 + $0x438] sm:$0xff] 0.0
          %403 = vst [vmem:[#allocation2 + $0x440] sm:$0xff] 0.0
          %404 = vst [vmem:[#allocation2 + $0x448] sm:$0xff] 0.0
          %405 = vst [vmem:[#allocation2 + $0x450] sm:$0xff] 0.0
          %406 = vst [vmem:[#allocation2 + $0x458] sm:$0xff] 0.0
          %407 = vst [vmem:[#allocation2 + $0x460] sm:$0xff] 0.0
          %408 = vst [vmem:[#allocation2 + $0x468] sm:$0xff] 0.0
          %409 = vst [vmem:[#allocation2 + $0x470] sm:$0xff] 0.0
          %410 = vst [vmem:[#allocation2 + $0x478] sm:$0xff] 0.0
          %411 = vst [vmem:[#allocation2 + $0x480] sm:$0xff] 0.0
          %412 = vst [vmem:[#allocation2 + $0x488] sm:$0xff] 0.0
          %413 = vst [vmem:[#allocation2 + $0x490] sm:$0xff] 0.0
          %414 = vst [vmem:[#allocation2 + $0x498] sm:$0xff] 0.0
          %415 = vst [vmem:[#allocation2 + $0x4a0] sm:$0xff] 0.0
          %416 = vst [vmem:[#allocation2 + $0x4a8] sm:$0xff] 0.0
          %417 = vst [vmem:[#allocation2 + $0x4b0] sm:$0xff] 0.0
          %418 = vst [vmem:[#allocation2 + $0x4b8] sm:$0xff] 0.0
          %419 = vst [vmem:[#allocation2 + $0x4c0] sm:$0xff] 0.0
          %420 = vst [vmem:[#allocation2 + $0x4c8] sm:$0xff] 0.0
          %421 = vst [vmem:[#allocation2 + $0x4d0] sm:$0xff] 0.0
          %422 = vst [vmem:[#allocation2 + $0x4d8] sm:$0xff] 0.0
          %423 = vst [vmem:[#allocation2 + $0x4e0] sm:$0xff] 0.0
          %424 = vst [vmem:[#allocation2 + $0x4e8] sm:$0xff] 0.0
          %425 = vst [vmem:[#allocation2 + $0x4f0] sm:$0xff] 0.0
          %426 = vst [vmem:[#allocation2 + $0x4f8] sm:$0xff] 0.0
          %427 = vst [vmem:[#allocation2 + $0x500] sm:$0xff] 0.0
          %428 = vst [vmem:[#allocation2 + $0x508] sm:$0xff] 0.0
          %429 = vst [vmem:[#allocation2 + $0x510] sm:$0xff] 0.0
          %430 = vst [vmem:[#allocation2 + $0x518] sm:$0xff] 0.0
          %431 = vst [vmem:[#allocation2 + $0x520] sm:$0xff] 0.0
          %432 = vst [vmem:[#allocation2 + $0x528] sm:$0xff] 0.0
          %433 = vst [vmem:[#allocation2 + $0x530] sm:$0xff] 0.0
          %434 = vst [vmem:[#allocation2 + $0x538] sm:$0xff] 0.0
          %435 = vst [vmem:[#allocation2 + $0x540] sm:$0xff] 0.0
          %436 = vst [vmem:[#allocation2 + $0x548] sm:$0xff] 0.0
          %437 = vst [vmem:[#allocation2 + $0x550] sm:$0xff] 0.0
          %438 = vst [vmem:[#allocation2 + $0x558] sm:$0xff] 0.0
          %439 = vst [vmem:[#allocation2 + $0x560] sm:$0xff] 0.0
          %440 = vst [vmem:[#allocation2 + $0x568] sm:$0xff] 0.0
          %441 = vst [vmem:[#allocation2 + $0x570] sm:$0xff] 0.0
          %442 = vst [vmem:[#allocation2 + $0x578] sm:$0xff] 0.0
          %443 = vst [vmem:[#allocation2 + $0x580] sm:$0xff] 0.0
          %444 = vst [vmem:[#allocation2 + $0x588] sm:$0xff] 0.0
          %445 = vst [vmem:[#allocation2 + $0x590] sm:$0xff] 0.0
          %446 = vst [vmem:[#allocation2 + $0x598] sm:$0xff] 0.0
          %447 = vst [vmem:[#allocation2 + $0x5a0] sm:$0xff] 0.0
          %448 = vst [vmem:[#allocation2 + $0x5a8] sm:$0xff] 0.0
          %449 = vst [vmem:[#allocation2 + $0x5b0] sm:$0xff] 0.0
          %450 = vst [vmem:[#allocation2 + $0x5b8] sm:$0xff] 0.0
          %451 = vst [vmem:[#allocation2 + $0x5c0] sm:$0xff] 0.0
          %452 = vst [vmem:[#allocation2 + $0x5c8] sm:$0xff] 0.0
          %453 = vst [vmem:[#allocation2 + $0x5d0] sm:$0xff] 0.0
          %454 = vst [vmem:[#allocation2 + $0x5d8] sm:$0xff] 0.0
          %455 = vst [vmem:[#allocation2 + $0x5e0] sm:$0xff] 0.0
          %456 = vst [vmem:[#allocation2 + $0x5e8] sm:$0xff] 0.0
          %457 = vst [vmem:[#allocation2 + $0x5f0] sm:$0xff] 0.0
          %458 = vst [vmem:[#allocation2 + $0x5f8] sm:$0xff] 0.0
          %459 = vst [vmem:[#allocation2 + $0x600] sm:$0xff] 0.0
          %460 = vst [vmem:[#allocation2 + $0x608] sm:$0xff] 0.0
          %461 = vst [vmem:[#allocation2 + $0x610] sm:$0xff] 0.0
          %462 = vst [vmem:[#allocation2 + $0x618] sm:$0xff] 0.0
          %463 = vst [vmem:[#allocation2 + $0x620] sm:$0xff] 0.0
          %464 = vst [vmem:[#allocation2 + $0x628] sm:$0xff] 0.0
          %465 = vst [vmem:[#allocation2 + $0x630] sm:$0xff] 0.0
          %466 = vst [vmem:[#allocation2 + $0x638] sm:$0xff] 0.0
          %467 = vst [vmem:[#allocation2 + $0x640] sm:$0xff] 0.0
          %468 = vst [vmem:[#allocation2 + $0x648] sm:$0xff] 0.0
          %469 = vst [vmem:[#allocation2 + $0x650] sm:$0xff] 0.0
          %470 = vst [vmem:[#allocation2 + $0x658] sm:$0xff] 0.0
          %471 = vst [vmem:[#allocation2 + $0x660] sm:$0xff] 0.0
          %472 = vst [vmem:[#allocation2 + $0x668] sm:$0xff] 0.0
          %473 = vst [vmem:[#allocation2 + $0x670] sm:$0xff] 0.0
          %474 = vst [vmem:[#allocation2 + $0x678] sm:$0xff] 0.0
          %475 = vst [vmem:[#allocation2 + $0x680] sm:$0xff] 0.0
          %476 = vst [vmem:[#allocation2 + $0x688] sm:$0xff] 0.0
          %477 = vst [vmem:[#allocation2 + $0x690] sm:$0xff] 0.0
          %478 = vst [vmem:[#allocation2 + $0x698] sm:$0xff] 0.0
          %479 = vst [vmem:[#allocation2 + $0x6a0] sm:$0xff] 0.0
          %480 = vst [vmem:[#allocation2 + $0x6a8] sm:$0xff] 0.0
          %481 = vst [vmem:[#allocation2 + $0x6b0] sm:$0xff] 0.0
          %482 = vst [vmem:[#allocation2 + $0x6b8] sm:$0xff] 0.0
          %483 = vst [vmem:[#allocation2 + $0x6c0] sm:$0xff] 0.0
          %484 = vst [vmem:[#allocation2 + $0x6c8] sm:$0xff] 0.0
          %485 = vst [vmem:[#allocation2 + $0x6d0] sm:$0xff] 0.0
          %486 = vst [vmem:[#allocation2 + $0x6d8] sm:$0xff] 0.0
          %487 = vst [vmem:[#allocation2 + $0x6e0] sm:$0xff] 0.0
          %488 = vst [vmem:[#allocation2 + $0x6e8] sm:$0xff] 0.0
          %489 = vst [vmem:[#allocation2 + $0x6f0] sm:$0xff] 0.0
          %490 = vst [vmem:[#allocation2 + $0x6f8] sm:$0xff] 0.0
          %491 = vst [vmem:[#allocation2 + $0x700] sm:$0xff] 0.0
          %492 = vst [vmem:[#allocation2 + $0x708] sm:$0xff] 0.0
          %493 = vst [vmem:[#allocation2 + $0x710] sm:$0xff] 0.0
          %494 = vst [vmem:[#allocation2 + $0x718] sm:$0xff] 0.0
          %495 = vst [vmem:[#allocation2 + $0x720] sm:$0xff] 0.0
          %496 = vst [vmem:[#allocation2 + $0x728] sm:$0xff] 0.0
          %497 = vst [vmem:[#allocation2 + $0x730] sm:$0xff] 0.0
          %498 = vst [vmem:[#allocation2 + $0x738] sm:$0xff] 0.0
          %499 = vst [vmem:[#allocation2 + $0x740] sm:$0xff] 0.0
          %500 = vst [vmem:[#allocation2 + $0x748] sm:$0xff] 0.0
          %501 = vst [vmem:[#allocation2 + $0x750] sm:$0xff] 0.0
          %502 = vst [vmem:[#allocation2 + $0x758] sm:$0xff] 0.0
          %503 = vst [vmem:[#allocation2 + $0x760] sm:$0xff] 0.0
          %504 = vst [vmem:[#allocation2 + $0x768] sm:$0xff] 0.0
          %505 = vst [vmem:[#allocation2 + $0x770] sm:$0xff] 0.0
          %506 = vst [vmem:[#allocation2 + $0x778] sm:$0xff] 0.0
          %507 = vst [vmem:[#allocation2 + $0x780] sm:$0xff] 0.0
          %508 = vst [vmem:[#allocation2 + $0x788] sm:$0xff] 0.0
          %509 = vst [vmem:[#allocation2 + $0x790] sm:$0xff] 0.0
          %510 = vst [vmem:[#allocation2 + $0x798] sm:$0xff] 0.0
          %511 = vst [vmem:[#allocation2 + $0x7a0] sm:$0xff] 0.0
          %512 = vst [vmem:[#allocation2 + $0x7a8] sm:$0xff] 0.0
          %513 = vst [vmem:[#allocation2 + $0x7b0] sm:$0xff] 0.0
          %514 = vst [vmem:[#allocation2 + $0x7b8] sm:$0xff] 0.0
          %515 = vst [vmem:[#allocation2 + $0x7c0] sm:$0xff] 0.0
          %516 = vst [vmem:[#allocation2 + $0x7c8] sm:$0xff] 0.0
          %517 = vst [vmem:[#allocation2 + $0x7d0] sm:$0xff] 0.0
          %518 = vst [vmem:[#allocation2 + $0x7d8] sm:$0xff] 0.0
          %519 = vst [vmem:[#allocation2 + $0x7e0] sm:$0xff] 0.0
          %520 = vst [vmem:[#allocation2 + $0x7e8] sm:$0xff] 0.0
          %521 = vst [vmem:[#allocation2 + $0x7f0] sm:$0xff] 0.0
          %522 = vst [vmem:[#allocation2 + $0x7f8] sm:$0xff] 0.0
        $region48: #{tpu_custom_call.1} parent=31 // pred_fallthru
          _
        %v523 = vld [vmem:[%s211] sm:$0xff]
        %v524 = vld [vmem:[%s211 + $0x8] sm:$0xff]
        %v525 = vld [vmem:[%s211 + $0x10] sm:$0xff]
        %v526 = vld [vmem:[%s211 + $0x18] sm:$0xff]
        %v527 = vld [vmem:[%s211 + $0x20] sm:$0xff]
        %v528 = vld [vmem:[%s211 + $0x28] sm:$0xff]
        %v529 = vld [vmem:[%s211 + $0x30] sm:$0xff]
        %v530 = vld [vmem:[%s211 + $0x38] sm:$0xff]
        %v531 = vld [vmem:[%s211 + $0x40] sm:$0xff]
        %v532 = vld [vmem:[%s211 + $0x48] sm:$0xff]
        %v533 = vld [vmem:[%s211 + $0x50] sm:$0xff]
        %v534 = vld [vmem:[%s211 + $0x58] sm:$0xff]
        %v535 = vld [vmem:[%s211 + $0x60] sm:$0xff]
        %v536 = vld [vmem:[%s211 + $0x68] sm:$0xff]
        %v537 = vld [vmem:[%s211 + $0x70] sm:$0xff]
        %v538 = vld [vmem:[%s211 + $0x78] sm:$0xff]
        %v539 = vld [vmem:[%s211 + $0x80] sm:$0xff]
        %v540 = vld [vmem:[%s211 + $0x88] sm:$0xff]
        %v541 = vld [vmem:[%s211 + $0x90] sm:$0xff]
        %v542 = vld [vmem:[%s211 + $0x98] sm:$0xff]
        %v543 = vld [vmem:[%s211 + $0xa0] sm:$0xff]
        %v544 = vld [vmem:[%s211 + $0xa8] sm:$0xff]
        %v545 = vld [vmem:[%s211 + $0xb0] sm:$0xff]
        %v546 = vld [vmem:[%s211 + $0xb8] sm:$0xff]
        %v547 = vld [vmem:[%s211 + $0xc0] sm:$0xff]
        %v548 = vld [vmem:[%s211 + $0xc8] sm:$0xff]
        %v549 = vld [vmem:[%s211 + $0xd0] sm:$0xff]
        %v550 = vld [vmem:[%s211 + $0xd8] sm:$0xff]
        %v551 = vld [vmem:[%s211 + $0xe0] sm:$0xff]
        %v552 = vld [vmem:[%s211 + $0xe8] sm:$0xff]
        %v553 = vld [vmem:[%s211 + $0xf0] sm:$0xff]
        %v554 = vld [vmem:[%s211 + $0xf8] sm:$0xff]
        %v555 = vld [vmem:[%s211 + $0x100] sm:$0xff]
        %v556 = vld [vmem:[%s211 + $0x108] sm:$0xff]
        %v557 = vld [vmem:[%s211 + $0x110] sm:$0xff]
        %v558 = vld [vmem:[%s211 + $0x118] sm:$0xff]
        %v559 = vld [vmem:[%s211 + $0x120] sm:$0xff]
        %v560 = vld [vmem:[%s211 + $0x128] sm:$0xff]
        %v561 = vld [vmem:[%s211 + $0x130] sm:$0xff]
        %v562 = vld [vmem:[%s211 + $0x138] sm:$0xff]
        %v563 = vld [vmem:[%s211 + $0x140] sm:$0xff]
        %v564 = vld [vmem:[%s211 + $0x148] sm:$0xff]
        %v565 = vld [vmem:[%s211 + $0x150] sm:$0xff]
        %v566 = vld [vmem:[%s211 + $0x158] sm:$0xff]
        %v567 = vld [vmem:[%s211 + $0x160] sm:$0xff]
        %v568 = vld [vmem:[%s211 + $0x168] sm:$0xff]
        %v569 = vld [vmem:[%s211 + $0x170] sm:$0xff]
        %v570 = vld [vmem:[%s211 + $0x178] sm:$0xff]
        %v571 = vld [vmem:[%s211 + $0x180] sm:$0xff]
        %v572 = vld [vmem:[%s211 + $0x188] sm:$0xff]
        %v573 = vld [vmem:[%s211 + $0x190] sm:$0xff]
        %v574 = vld [vmem:[%s211 + $0x198] sm:$0xff]
        %v575 = vld [vmem:[%s211 + $0x1a0] sm:$0xff]
        %v576 = vld [vmem:[%s211 + $0x1a8] sm:$0xff]
        %v577 = vld [vmem:[%s211 + $0x1b0] sm:$0xff]
        %v578 = vld [vmem:[%s211 + $0x1b8] sm:$0xff]
        %v579 = vld [vmem:[%s211 + $0x1c0] sm:$0xff]
        %v580 = vld [vmem:[%s211 + $0x1c8] sm:$0xff]
        %v581 = vld [vmem:[%s211 + $0x1d0] sm:$0xff]
        %v582 = vld [vmem:[%s211 + $0x1d8] sm:$0xff]
        %v583 = vld [vmem:[%s211 + $0x1e0] sm:$0xff]
        %v584 = vld [vmem:[%s211 + $0x1e8] sm:$0xff]
        %v585 = vld [vmem:[%s211 + $0x1f0] sm:$0xff]
        %v586 = vld [vmem:[%s211 + $0x1f8] sm:$0xff]
        %v587 = vld [vmem:[%s211 + $0x200] sm:$0xff]
        %v588 = vld [vmem:[%s211 + $0x208] sm:$0xff]
        %v589 = vld [vmem:[%s211 + $0x210] sm:$0xff]
        %v590 = vld [vmem:[%s211 + $0x218] sm:$0xff]
        %v591 = vld [vmem:[%s211 + $0x220] sm:$0xff]
        %v592 = vld [vmem:[%s211 + $0x228] sm:$0xff]
        %v593 = vld [vmem:[%s211 + $0x230] sm:$0xff]
        %v594 = vld [vmem:[%s211 + $0x238] sm:$0xff]
        %v595 = vld [vmem:[%s211 + $0x240] sm:$0xff]
        %v596 = vld [vmem:[%s211 + $0x248] sm:$0xff]
        %v597 = vld [vmem:[%s211 + $0x250] sm:$0xff]
        %v598 = vld [vmem:[%s211 + $0x258] sm:$0xff]
        %v599 = vld [vmem:[%s211 + $0x260] sm:$0xff]
        %v600 = vld [vmem:[%s211 + $0x268] sm:$0xff]
        %v601 = vld [vmem:[%s211 + $0x270] sm:$0xff]
        %v602 = vld [vmem:[%s211 + $0x278] sm:$0xff]
        %v603 = vld [vmem:[%s211 + $0x280] sm:$0xff]
        %v604 = vld [vmem:[%s211 + $0x288] sm:$0xff]
        %v605 = vld [vmem:[%s211 + $0x290] sm:$0xff]
        %v606 = vld [vmem:[%s211 + $0x298] sm:$0xff]
        %v607 = vld [vmem:[%s211 + $0x2a0] sm:$0xff]
        %v608 = vld [vmem:[%s211 + $0x2a8] sm:$0xff]
        %v609 = vld [vmem:[%s211 + $0x2b0] sm:$0xff]
        %v610 = vld [vmem:[%s211 + $0x2b8] sm:$0xff]
        %v611 = vld [vmem:[%s211 + $0x2c0] sm:$0xff]
        %v612 = vld [vmem:[%s211 + $0x2c8] sm:$0xff]
        %v613 = vld [vmem:[%s211 + $0x2d0] sm:$0xff]
        %v614 = vld [vmem:[%s211 + $0x2d8] sm:$0xff]
        %v615 = vld [vmem:[%s211 + $0x2e0] sm:$0xff]
        %v616 = vld [vmem:[%s211 + $0x2e8] sm:$0xff]
        %v617 = vld [vmem:[%s211 + $0x2f0] sm:$0xff]
        %v618 = vld [vmem:[%s211 + $0x2f8] sm:$0xff]
        %v619 = vld [vmem:[%s211 + $0x300] sm:$0xff]
        %v620 = vld [vmem:[%s211 + $0x308] sm:$0xff]
        %v621 = vld [vmem:[%s211 + $0x310] sm:$0xff]
        %v622 = vld [vmem:[%s211 + $0x318] sm:$0xff]
        %v623 = vld [vmem:[%s211 + $0x320] sm:$0xff]
        %v624 = vld [vmem:[%s211 + $0x328] sm:$0xff]
        %v625 = vld [vmem:[%s211 + $0x330] sm:$0xff]
        %v626 = vld [vmem:[%s211 + $0x338] sm:$0xff]
        %v627 = vld [vmem:[%s211 + $0x340] sm:$0xff]
        %v628 = vld [vmem:[%s211 + $0x348] sm:$0xff]
        %v629 = vld [vmem:[%s211 + $0x350] sm:$0xff]
        %v630 = vld [vmem:[%s211 + $0x358] sm:$0xff]
        %v631 = vld [vmem:[%s211 + $0x360] sm:$0xff]
        %v632 = vld [vmem:[%s211 + $0x368] sm:$0xff]
        %v633 = vld [vmem:[%s211 + $0x370] sm:$0xff]
        %v634 = vld [vmem:[%s211 + $0x378] sm:$0xff]
        %v635 = vld [vmem:[%s211 + $0x380] sm:$0xff]
        %v636 = vld [vmem:[%s211 + $0x388] sm:$0xff]
        %v637 = vld [vmem:[%s211 + $0x390] sm:$0xff]
        %v638 = vld [vmem:[%s211 + $0x398] sm:$0xff]
        %v639 = vld [vmem:[%s211 + $0x3a0] sm:$0xff]
        %v640 = vld [vmem:[%s211 + $0x3a8] sm:$0xff]
        %v641 = vld [vmem:[%s211 + $0x3b0] sm:$0xff]
        %v642 = vld [vmem:[%s211 + $0x3b8] sm:$0xff]
        %v643 = vld [vmem:[%s211 + $0x3c0] sm:$0xff]
        %v644 = vld [vmem:[%s211 + $0x3c8] sm:$0xff]
        %v645 = vld [vmem:[%s211 + $0x3d0] sm:$0xff]
        %v646 = vld [vmem:[%s211 + $0x3d8] sm:$0xff]
        %v647 = vld [vmem:[%s211 + $0x3e0] sm:$0xff]
        %v648 = vld [vmem:[%s211 + $0x3e8] sm:$0xff]
        %v649 = vld [vmem:[%s211 + $0x3f0] sm:$0xff]
        %v650 = vld [vmem:[%s211 + $0x3f8] sm:$0xff]
        %v651 = vld [vmem:[%s211 + $0x400] sm:$0xff]
        %v652 = vld [vmem:[%s211 + $0x408] sm:$0xff]
        %v653 = vld [vmem:[%s211 + $0x410] sm:$0xff]
        %v654 = vld [vmem:[%s211 + $0x418] sm:$0xff]
        %v655 = vld [vmem:[%s211 + $0x420] sm:$0xff]
        %v656 = vld [vmem:[%s211 + $0x428] sm:$0xff]
        %v657 = vld [vmem:[%s211 + $0x430] sm:$0xff]
        %v658 = vld [vmem:[%s211 + $0x438] sm:$0xff]
        %v659 = vld [vmem:[%s211 + $0x440] sm:$0xff]
        %v660 = vld [vmem:[%s211 + $0x448] sm:$0xff]
        %v661 = vld [vmem:[%s211 + $0x450] sm:$0xff]
        %v662 = vld [vmem:[%s211 + $0x458] sm:$0xff]
        %v663 = vld [vmem:[%s211 + $0x460] sm:$0xff]
        %v664 = vld [vmem:[%s211 + $0x468] sm:$0xff]
        %v665 = vld [vmem:[%s211 + $0x470] sm:$0xff]
        %v666 = vld [vmem:[%s211 + $0x478] sm:$0xff]
        %v667 = vld [vmem:[%s211 + $0x480] sm:$0xff]
        %v668 = vld [vmem:[%s211 + $0x488] sm:$0xff]
        %v669 = vld [vmem:[%s211 + $0x490] sm:$0xff]
        %v670 = vld [vmem:[%s211 + $0x498] sm:$0xff]
        %v671 = vld [vmem:[%s211 + $0x4a0] sm:$0xff]
        %v672 = vld [vmem:[%s211 + $0x4a8] sm:$0xff]
        %v673 = vld [vmem:[%s211 + $0x4b0] sm:$0xff]
        %v674 = vld [vmem:[%s211 + $0x4b8] sm:$0xff]
        %v675 = vld [vmem:[%s211 + $0x4c0] sm:$0xff]
        %v676 = vld [vmem:[%s211 + $0x4c8] sm:$0xff]
        %v677 = vld [vmem:[%s211 + $0x4d0] sm:$0xff]
        %v678 = vld [vmem:[%s211 + $0x4d8] sm:$0xff]
        %v679 = vld [vmem:[%s211 + $0x4e0] sm:$0xff]
        %v680 = vld [vmem:[%s211 + $0x4e8] sm:$0xff]
        %v681 = vld [vmem:[%s211 + $0x4f0] sm:$0xff]
        %v682 = vld [vmem:[%s211 + $0x4f8] sm:$0xff]
        %v683 = vld [vmem:[%s211 + $0x500] sm:$0xff]
        %v684 = vld [vmem:[%s211 + $0x508] sm:$0xff]
        %v685 = vld [vmem:[%s211 + $0x510] sm:$0xff]
        %v686 = vld [vmem:[%s211 + $0x518] sm:$0xff]
        %v687 = vld [vmem:[%s211 + $0x520] sm:$0xff]
        %v688 = vld [vmem:[%s211 + $0x528] sm:$0xff]
        %v689 = vld [vmem:[%s211 + $0x530] sm:$0xff]
        %v690 = vld [vmem:[%s211 + $0x538] sm:$0xff]
        %v691 = vld [vmem:[%s211 + $0x540] sm:$0xff]
        %v692 = vld [vmem:[%s211 + $0x548] sm:$0xff]
        %v693 = vld [vmem:[%s211 + $0x550] sm:$0xff]
        %v694 = vld [vmem:[%s211 + $0x558] sm:$0xff]
        %v695 = vld [vmem:[%s211 + $0x560] sm:$0xff]
        %v696 = vld [vmem:[%s211 + $0x568] sm:$0xff]
        %v697 = vld [vmem:[%s211 + $0x570] sm:$0xff]
        %v698 = vld [vmem:[%s211 + $0x578] sm:$0xff]
        %v699 = vld [vmem:[%s211 + $0x580] sm:$0xff]
        %v700 = vld [vmem:[%s211 + $0x588] sm:$0xff]
        %v701 = vld [vmem:[%s211 + $0x590] sm:$0xff]
        %v702 = vld [vmem:[%s211 + $0x598] sm:$0xff]
        %v703 = vld [vmem:[%s211 + $0x5a0] sm:$0xff]
        %v704 = vld [vmem:[%s211 + $0x5a8] sm:$0xff]
        %v705 = vld [vmem:[%s211 + $0x5b0] sm:$0xff]
        %v706 = vld [vmem:[%s211 + $0x5b8] sm:$0xff]
        %v707 = vld [vmem:[%s211 + $0x5c0] sm:$0xff]
        %v708 = vld [vmem:[%s211 + $0x5c8] sm:$0xff]
        %v709 = vld [vmem:[%s211 + $0x5d0] sm:$0xff]
        %v710 = vld [vmem:[%s211 + $0x5d8] sm:$0xff]
        %v711 = vld [vmem:[%s211 + $0x5e0] sm:$0xff]
        %v712 = vld [vmem:[%s211 + $0x5e8] sm:$0xff]
        %v713 = vld [vmem:[%s211 + $0x5f0] sm:$0xff]
        %v714 = vld [vmem:[%s211 + $0x5f8] sm:$0xff]
        %v715 = vld [vmem:[%s211 + $0x600] sm:$0xff]
        %v716 = vld [vmem:[%s211 + $0x608] sm:$0xff]
        %v717 = vld [vmem:[%s211 + $0x610] sm:$0xff]
        %v718 = vld [vmem:[%s211 + $0x618] sm:$0xff]
        %v719 = vld [vmem:[%s211 + $0x620] sm:$0xff]
        %v720 = vld [vmem:[%s211 + $0x628] sm:$0xff]
        %v721 = vld [vmem:[%s211 + $0x630] sm:$0xff]
        %v722 = vld [vmem:[%s211 + $0x638] sm:$0xff]
        %v723 = vld [vmem:[%s211 + $0x640] sm:$0xff]
        %v724 = vld [vmem:[%s211 + $0x648] sm:$0xff]
        %v725 = vld [vmem:[%s211 + $0x650] sm:$0xff]
        %v726 = vld [vmem:[%s211 + $0x658] sm:$0xff]
        %v727 = vld [vmem:[%s211 + $0x660] sm:$0xff]
        %v728 = vld [vmem:[%s211 + $0x668] sm:$0xff]
        %v729 = vld [vmem:[%s211 + $0x670] sm:$0xff]
        %v730 = vld [vmem:[%s211 + $0x678] sm:$0xff]
        %v731 = vld [vmem:[%s211 + $0x680] sm:$0xff]
        %v732 = vld [vmem:[%s211 + $0x688] sm:$0xff]
        %v733 = vld [vmem:[%s211 + $0x690] sm:$0xff]
        %v734 = vld [vmem:[%s211 + $0x698] sm:$0xff]
        %v735 = vld [vmem:[%s211 + $0x6a0] sm:$0xff]
        %v736 = vld [vmem:[%s211 + $0x6a8] sm:$0xff]
        %v737 = vld [vmem:[%s211 + $0x6b0] sm:$0xff]
        %v738 = vld [vmem:[%s211 + $0x6b8] sm:$0xff]
        %v739 = vld [vmem:[%s211 + $0x6c0] sm:$0xff]
        %v740 = vld [vmem:[%s211 + $0x6c8] sm:$0xff]
        %v741 = vld [vmem:[%s211 + $0x6d0] sm:$0xff]
        %v742 = vld [vmem:[%s211 + $0x6d8] sm:$0xff]
        %v743 = vld [vmem:[%s211 + $0x6e0] sm:$0xff]
        %v744 = vld [vmem:[%s211 + $0x6e8] sm:$0xff]
        %v745 = vld [vmem:[%s211 + $0x6f0] sm:$0xff]
        %v746 = vld [vmem:[%s211 + $0x6f8] sm:$0xff]
        %v747 = vld [vmem:[%s211 + $0x700] sm:$0xff]
        %v748 = vld [vmem:[%s211 + $0x708] sm:$0xff]
        %v749 = vld [vmem:[%s211 + $0x710] sm:$0xff]
        %v750 = vld [vmem:[%s211 + $0x718] sm:$0xff]
        %v751 = vld [vmem:[%s211 + $0x720] sm:$0xff]
        %v752 = vld [vmem:[%s211 + $0x728] sm:$0xff]
        %v753 = vld [vmem:[%s211 + $0x730] sm:$0xff]
        %v754 = vld [vmem:[%s211 + $0x738] sm:$0xff]
        %v755 = vld [vmem:[%s211 + $0x740] sm:$0xff]
        %v756 = vld [vmem:[%s211 + $0x748] sm:$0xff]
        %v757 = vld [vmem:[%s211 + $0x750] sm:$0xff]
        %v758 = vld [vmem:[%s211 + $0x758] sm:$0xff]
        %v759 = vld [vmem:[%s211 + $0x760] sm:$0xff]
        %v760 = vld [vmem:[%s211 + $0x768] sm:$0xff]
        %v761 = vld [vmem:[%s211 + $0x770] sm:$0xff]
        %v762 = vld [vmem:[%s211 + $0x778] sm:$0xff]
        %v763 = vld [vmem:[%s211 + $0x780] sm:$0xff]
        %v764 = vld [vmem:[%s211 + $0x788] sm:$0xff]
        %v765 = vld [vmem:[%s211 + $0x790] sm:$0xff]
        %v766 = vld [vmem:[%s211 + $0x798] sm:$0xff]
        %v767 = vld [vmem:[%s211 + $0x7a0] sm:$0xff]
        %v768 = vld [vmem:[%s211 + $0x7a8] sm:$0xff]
        %v769 = vld [vmem:[%s211 + $0x7b0] sm:$0xff]
        %v770 = vld [vmem:[%s211 + $0x7b8] sm:$0xff]
        %v771 = vld [vmem:[%s211 + $0x7c0] sm:$0xff]
        %v772 = vld [vmem:[%s211 + $0x7c8] sm:$0xff]
        %v773 = vld [vmem:[%s211 + $0x7d0] sm:$0xff]
        %v774 = vld [vmem:[%s211 + $0x7d8] sm:$0xff]
        %v775 = vld [vmem:[%s211 + $0x7e0] sm:$0xff]
        %v776 = vld [vmem:[%s211 + $0x7e8] sm:$0xff]
        %v777 = vld [vmem:[%s211 + $0x7f0] sm:$0xff]
        %v778 = vld [vmem:[%s211 + $0x7f8] sm:$0xff]
        %v779 = vld [vmem:[%s221] sm:$0xff]
        %v780 = vld [vmem:[%s221 + $0x8] sm:$0xff]
        %v781 = vld [vmem:[%s221 + $0x10] sm:$0xff]
        %v782 = vld [vmem:[%s221 + $0x18] sm:$0xff]
        %v783 = vld [vmem:[%s221 + $0x20] sm:$0xff]
        %v784 = vld [vmem:[%s221 + $0x28] sm:$0xff]
        %v785 = vld [vmem:[%s221 + $0x30] sm:$0xff]
        %v786 = vld [vmem:[%s221 + $0x38] sm:$0xff]
        %v787 = vld [vmem:[%s221 + $0x40] sm:$0xff]
        %v788 = vld [vmem:[%s221 + $0x48] sm:$0xff]
        %v789 = vld [vmem:[%s221 + $0x50] sm:$0xff]
        %v790 = vld [vmem:[%s221 + $0x58] sm:$0xff]
        %v791 = vld [vmem:[%s221 + $0x60] sm:$0xff]
        %v792 = vld [vmem:[%s221 + $0x68] sm:$0xff]
        %v793 = vld [vmem:[%s221 + $0x70] sm:$0xff]
        %v794 = vld [vmem:[%s221 + $0x78] sm:$0xff]
        %v795 = vld [vmem:[%s221 + $0x80] sm:$0xff]
        %v796 = vld [vmem:[%s221 + $0x88] sm:$0xff]
        %v797 = vld [vmem:[%s221 + $0x90] sm:$0xff]
        %v798 = vld [vmem:[%s221 + $0x98] sm:$0xff]
        %v799 = vld [vmem:[%s221 + $0xa0] sm:$0xff]
        %v800 = vld [vmem:[%s221 + $0xa8] sm:$0xff]
        %v801 = vld [vmem:[%s221 + $0xb0] sm:$0xff]
        %v802 = vld [vmem:[%s221 + $0xb8] sm:$0xff]
        %v803 = vld [vmem:[%s221 + $0xc0] sm:$0xff]
        %v804 = vld [vmem:[%s221 + $0xc8] sm:$0xff]
        %v805 = vld [vmem:[%s221 + $0xd0] sm:$0xff]
        %v806 = vld [vmem:[%s221 + $0xd8] sm:$0xff]
        %v807 = vld [vmem:[%s221 + $0xe0] sm:$0xff]
        %v808 = vld [vmem:[%s221 + $0xe8] sm:$0xff]
        %v809 = vld [vmem:[%s221 + $0xf0] sm:$0xff]
        %v810 = vld [vmem:[%s221 + $0xf8] sm:$0xff]
        %v811 = vld [vmem:[%s221 + $0x100] sm:$0xff]
        %v812 = vld [vmem:[%s221 + $0x108] sm:$0xff]
        %v813 = vld [vmem:[%s221 + $0x110] sm:$0xff]
        %v814 = vld [vmem:[%s221 + $0x118] sm:$0xff]
        %v815 = vld [vmem:[%s221 + $0x120] sm:$0xff]
        %v816 = vld [vmem:[%s221 + $0x128] sm:$0xff]
        %v817 = vld [vmem:[%s221 + $0x130] sm:$0xff]
        %v818 = vld [vmem:[%s221 + $0x138] sm:$0xff]
        %v819 = vld [vmem:[%s221 + $0x140] sm:$0xff]
        %v820 = vld [vmem:[%s221 + $0x148] sm:$0xff]
        %v821 = vld [vmem:[%s221 + $0x150] sm:$0xff]
        %v822 = vld [vmem:[%s221 + $0x158] sm:$0xff]
        %v823 = vld [vmem:[%s221 + $0x160] sm:$0xff]
        %v824 = vld [vmem:[%s221 + $0x168] sm:$0xff]
        %v825 = vld [vmem:[%s221 + $0x170] sm:$0xff]
        %v826 = vld [vmem:[%s221 + $0x178] sm:$0xff]
        %v827 = vld [vmem:[%s221 + $0x180] sm:$0xff]
        %v828 = vld [vmem:[%s221 + $0x188] sm:$0xff]
        %v829 = vld [vmem:[%s221 + $0x190] sm:$0xff]
        %v830 = vld [vmem:[%s221 + $0x198] sm:$0xff]
        %v831 = vld [vmem:[%s221 + $0x1a0] sm:$0xff]
        %v832 = vld [vmem:[%s221 + $0x1a8] sm:$0xff]
        %v833 = vld [vmem:[%s221 + $0x1b0] sm:$0xff]
        %v834 = vld [vmem:[%s221 + $0x1b8] sm:$0xff]
        %v835 = vld [vmem:[%s221 + $0x1c0] sm:$0xff]
        %v836 = vld [vmem:[%s221 + $0x1c8] sm:$0xff]
        %v837 = vld [vmem:[%s221 + $0x1d0] sm:$0xff]
        %v838 = vld [vmem:[%s221 + $0x1d8] sm:$0xff]
        %v839 = vld [vmem:[%s221 + $0x1e0] sm:$0xff]
        %v840 = vld [vmem:[%s221 + $0x1e8] sm:$0xff]
        %v841 = vld [vmem:[%s221 + $0x1f0] sm:$0xff]
        %v842 = vld [vmem:[%s221 + $0x1f8] sm:$0xff]
        %v843 = vld [vmem:[%s221 + $0x200] sm:$0xff]
        %v844 = vld [vmem:[%s221 + $0x208] sm:$0xff]
        %v845 = vld [vmem:[%s221 + $0x210] sm:$0xff]
        %v846 = vld [vmem:[%s221 + $0x218] sm:$0xff]
        %v847 = vld [vmem:[%s221 + $0x220] sm:$0xff]
        %v848 = vld [vmem:[%s221 + $0x228] sm:$0xff]
        %v849 = vld [vmem:[%s221 + $0x230] sm:$0xff]
        %v850 = vld [vmem:[%s221 + $0x238] sm:$0xff]
        %v851 = vld [vmem:[%s221 + $0x240] sm:$0xff]
        %v852 = vld [vmem:[%s221 + $0x248] sm:$0xff]
        %v853 = vld [vmem:[%s221 + $0x250] sm:$0xff]
        %v854 = vld [vmem:[%s221 + $0x258] sm:$0xff]
        %v855 = vld [vmem:[%s221 + $0x260] sm:$0xff]
        %v856 = vld [vmem:[%s221 + $0x268] sm:$0xff]
        %v857 = vld [vmem:[%s221 + $0x270] sm:$0xff]
        %v858 = vld [vmem:[%s221 + $0x278] sm:$0xff]
        %v859 = vld [vmem:[%s221 + $0x280] sm:$0xff]
        %v860 = vld [vmem:[%s221 + $0x288] sm:$0xff]
        %v861 = vld [vmem:[%s221 + $0x290] sm:$0xff]
        %v862 = vld [vmem:[%s221 + $0x298] sm:$0xff]
        %v863 = vld [vmem:[%s221 + $0x2a0] sm:$0xff]
        %v864 = vld [vmem:[%s221 + $0x2a8] sm:$0xff]
        %v865 = vld [vmem:[%s221 + $0x2b0] sm:$0xff]
        %v866 = vld [vmem:[%s221 + $0x2b8] sm:$0xff]
        %v867 = vld [vmem:[%s221 + $0x2c0] sm:$0xff]
        %v868 = vld [vmem:[%s221 + $0x2c8] sm:$0xff]
        %v869 = vld [vmem:[%s221 + $0x2d0] sm:$0xff]
        %v870 = vld [vmem:[%s221 + $0x2d8] sm:$0xff]
        %v871 = vld [vmem:[%s221 + $0x2e0] sm:$0xff]
        %v872 = vld [vmem:[%s221 + $0x2e8] sm:$0xff]
        %v873 = vld [vmem:[%s221 + $0x2f0] sm:$0xff]
        %v874 = vld [vmem:[%s221 + $0x2f8] sm:$0xff]
        %v875 = vld [vmem:[%s221 + $0x300] sm:$0xff]
        %v876 = vld [vmem:[%s221 + $0x308] sm:$0xff]
        %v877 = vld [vmem:[%s221 + $0x310] sm:$0xff]
        %v878 = vld [vmem:[%s221 + $0x318] sm:$0xff]
        %v879 = vld [vmem:[%s221 + $0x320] sm:$0xff]
        %v880 = vld [vmem:[%s221 + $0x328] sm:$0xff]
        %v881 = vld [vmem:[%s221 + $0x330] sm:$0xff]
        %v882 = vld [vmem:[%s221 + $0x338] sm:$0xff]
        %v883 = vld [vmem:[%s221 + $0x340] sm:$0xff]
        %v884 = vld [vmem:[%s221 + $0x348] sm:$0xff]
        %v885 = vld [vmem:[%s221 + $0x350] sm:$0xff]
        %v886 = vld [vmem:[%s221 + $0x358] sm:$0xff]
        %v887 = vld [vmem:[%s221 + $0x360] sm:$0xff]
        %v888 = vld [vmem:[%s221 + $0x368] sm:$0xff]
        %v889 = vld [vmem:[%s221 + $0x370] sm:$0xff]
        %v890 = vld [vmem:[%s221 + $0x378] sm:$0xff]
        %v891 = vld [vmem:[%s221 + $0x380] sm:$0xff]
        %v892 = vld [vmem:[%s221 + $0x388] sm:$0xff]
        %v893 = vld [vmem:[%s221 + $0x390] sm:$0xff]
        %v894 = vld [vmem:[%s221 + $0x398] sm:$0xff]
        %v895 = vld [vmem:[%s221 + $0x3a0] sm:$0xff]
        %v896 = vld [vmem:[%s221 + $0x3a8] sm:$0xff]
        %v897 = vld [vmem:[%s221 + $0x3b0] sm:$0xff]
        %v898 = vld [vmem:[%s221 + $0x3b8] sm:$0xff]
        %v899 = vld [vmem:[%s221 + $0x3c0] sm:$0xff]
        %v900 = vld [vmem:[%s221 + $0x3c8] sm:$0xff]
        %v901 = vld [vmem:[%s221 + $0x3d0] sm:$0xff]
        %v902 = vld [vmem:[%s221 + $0x3d8] sm:$0xff]
        %v903 = vld [vmem:[%s221 + $0x3e0] sm:$0xff]
        %v904 = vld [vmem:[%s221 + $0x3e8] sm:$0xff]
        %v905 = vld [vmem:[%s221 + $0x3f0] sm:$0xff]
        %v906 = vld [vmem:[%s221 + $0x3f8] sm:$0xff]
        %v907 = vld [vmem:[%s221 + $0x400] sm:$0xff]
        %v908 = vld [vmem:[%s221 + $0x408] sm:$0xff]
        %v909 = vld [vmem:[%s221 + $0x410] sm:$0xff]
        %v910 = vld [vmem:[%s221 + $0x418] sm:$0xff]
        %v911 = vld [vmem:[%s221 + $0x420] sm:$0xff]
        %v912 = vld [vmem:[%s221 + $0x428] sm:$0xff]
        %v913 = vld [vmem:[%s221 + $0x430] sm:$0xff]
        %v914 = vld [vmem:[%s221 + $0x438] sm:$0xff]
        %v915 = vld [vmem:[%s221 + $0x440] sm:$0xff]
        %v916 = vld [vmem:[%s221 + $0x448] sm:$0xff]
        %v917 = vld [vmem:[%s221 + $0x450] sm:$0xff]
        %v918 = vld [vmem:[%s221 + $0x458] sm:$0xff]
        %v919 = vld [vmem:[%s221 + $0x460] sm:$0xff]
        %v920 = vld [vmem:[%s221 + $0x468] sm:$0xff]
        %v921 = vld [vmem:[%s221 + $0x470] sm:$0xff]
        %v922 = vld [vmem:[%s221 + $0x478] sm:$0xff]
        %v923 = vld [vmem:[%s221 + $0x480] sm:$0xff]
        %v924 = vld [vmem:[%s221 + $0x488] sm:$0xff]
        %v925 = vld [vmem:[%s221 + $0x490] sm:$0xff]
        %v926 = vld [vmem:[%s221 + $0x498] sm:$0xff]
        %v927 = vld [vmem:[%s221 + $0x4a0] sm:$0xff]
        %v928 = vld [vmem:[%s221 + $0x4a8] sm:$0xff]
        %v929 = vld [vmem:[%s221 + $0x4b0] sm:$0xff]
        %v930 = vld [vmem:[%s221 + $0x4b8] sm:$0xff]
        %v931 = vld [vmem:[%s221 + $0x4c0] sm:$0xff]
        %v932 = vld [vmem:[%s221 + $0x4c8] sm:$0xff]
        %v933 = vld [vmem:[%s221 + $0x4d0] sm:$0xff]
        %v934 = vld [vmem:[%s221 + $0x4d8] sm:$0xff]
        %v935 = vld [vmem:[%s221 + $0x4e0] sm:$0xff]
        %v936 = vld [vmem:[%s221 + $0x4e8] sm:$0xff]
        %v937 = vld [vmem:[%s221 + $0x4f0] sm:$0xff]
        %v938 = vld [vmem:[%s221 + $0x4f8] sm:$0xff]
        %v939 = vld [vmem:[%s221 + $0x500] sm:$0xff]
        %v940 = vld [vmem:[%s221 + $0x508] sm:$0xff]
        %v941 = vld [vmem:[%s221 + $0x510] sm:$0xff]
        %v942 = vld [vmem:[%s221 + $0x518] sm:$0xff]
        %v943 = vld [vmem:[%s221 + $0x520] sm:$0xff]
        %v944 = vld [vmem:[%s221 + $0x528] sm:$0xff]
        %v945 = vld [vmem:[%s221 + $0x530] sm:$0xff]
        %v946 = vld [vmem:[%s221 + $0x538] sm:$0xff]
        %v947 = vld [vmem:[%s221 + $0x540] sm:$0xff]
        %v948 = vld [vmem:[%s221 + $0x548] sm:$0xff]
        %v949 = vld [vmem:[%s221 + $0x550] sm:$0xff]
        %v950 = vld [vmem:[%s221 + $0x558] sm:$0xff]
        %v951 = vld [vmem:[%s221 + $0x560] sm:$0xff]
        %v952 = vld [vmem:[%s221 + $0x568] sm:$0xff]
        %v953 = vld [vmem:[%s221 + $0x570] sm:$0xff]
        %v954 = vld [vmem:[%s221 + $0x578] sm:$0xff]
        %v955 = vld [vmem:[%s221 + $0x580] sm:$0xff]
        %v956 = vld [vmem:[%s221 + $0x588] sm:$0xff]
        %v957 = vld [vmem:[%s221 + $0x590] sm:$0xff]
        %v958 = vld [vmem:[%s221 + $0x598] sm:$0xff]
        %v959 = vld [vmem:[%s221 + $0x5a0] sm:$0xff]
        %v960 = vld [vmem:[%s221 + $0x5a8] sm:$0xff]
        %v961 = vld [vmem:[%s221 + $0x5b0] sm:$0xff]
        %v962 = vld [vmem:[%s221 + $0x5b8] sm:$0xff]
        %v963 = vld [vmem:[%s221 + $0x5c0] sm:$0xff]
        %v964 = vld [vmem:[%s221 + $0x5c8] sm:$0xff]
        %v965 = vld [vmem:[%s221 + $0x5d0] sm:$0xff]
        %v966 = vld [vmem:[%s221 + $0x5d8] sm:$0xff]
        %v967 = vld [vmem:[%s221 + $0x5e0] sm:$0xff]
        %v968 = vld [vmem:[%s221 + $0x5e8] sm:$0xff]
        %v969 = vld [vmem:[%s221 + $0x5f0] sm:$0xff]
        %v970 = vld [vmem:[%s221 + $0x5f8] sm:$0xff]
        %v971 = vld [vmem:[%s221 + $0x600] sm:$0xff]
        %v972 = vld [vmem:[%s221 + $0x608] sm:$0xff]
        %v973 = vld [vmem:[%s221 + $0x610] sm:$0xff]
        %v974 = vld [vmem:[%s221 + $0x618] sm:$0xff]
        %v975 = vld [vmem:[%s221 + $0x620] sm:$0xff]
        %v976 = vld [vmem:[%s221 + $0x628] sm:$0xff]
        %v977 = vld [vmem:[%s221 + $0x630] sm:$0xff]
        %v978 = vld [vmem:[%s221 + $0x638] sm:$0xff]
        %v979 = vld [vmem:[%s221 + $0x640] sm:$0xff]
        %v980 = vld [vmem:[%s221 + $0x648] sm:$0xff]
        %v981 = vld [vmem:[%s221 + $0x650] sm:$0xff]
        %v982 = vld [vmem:[%s221 + $0x658] sm:$0xff]
        %v983 = vld [vmem:[%s221 + $0x660] sm:$0xff]
        %v984 = vld [vmem:[%s221 + $0x668] sm:$0xff]
        %v985 = vld [vmem:[%s221 + $0x670] sm:$0xff]
        %v986 = vld [vmem:[%s221 + $0x678] sm:$0xff]
        %v987 = vld [vmem:[%s221 + $0x680] sm:$0xff]
        %v988 = vld [vmem:[%s221 + $0x688] sm:$0xff]
        %v989 = vld [vmem:[%s221 + $0x690] sm:$0xff]
        %v990 = vld [vmem:[%s221 + $0x698] sm:$0xff]
        %v991 = vld [vmem:[%s221 + $0x6a0] sm:$0xff]
        %v992 = vld [vmem:[%s221 + $0x6a8] sm:$0xff]
        %v993 = vld [vmem:[%s221 + $0x6b0] sm:$0xff]
        %v994 = vld [vmem:[%s221 + $0x6b8] sm:$0xff]
        %v995 = vld [vmem:[%s221 + $0x6c0] sm:$0xff]
        %v996 = vld [vmem:[%s221 + $0x6c8] sm:$0xff]
        %v997 = vld [vmem:[%s221 + $0x6d0] sm:$0xff]
        %v998 = vld [vmem:[%s221 + $0x6d8] sm:$0xff]
        %v999 = vld [vmem:[%s221 + $0x6e0] sm:$0xff]
        %v1000 = vld [vmem:[%s221 + $0x6e8] sm:$0xff]
        %v1001 = vld [vmem:[%s221 + $0x6f0] sm:$0xff]
        %v1002 = vld [vmem:[%s221 + $0x6f8] sm:$0xff]
        %v1003 = vld [vmem:[%s221 + $0x700] sm:$0xff]
        %v1004 = vld [vmem:[%s221 + $0x708] sm:$0xff]
        %v1005 = vld [vmem:[%s221 + $0x710] sm:$0xff]
        %v1006 = vld [vmem:[%s221 + $0x718] sm:$0xff]
        %v1007 = vld [vmem:[%s221 + $0x720] sm:$0xff]
        %v1008 = vld [vmem:[%s221 + $0x728] sm:$0xff]
        %v1009 = vld [vmem:[%s221 + $0x730] sm:$0xff]
        %v1010 = vld [vmem:[%s221 + $0x738] sm:$0xff]
        %v1011 = vld [vmem:[%s221 + $0x740] sm:$0xff]
        %v1012 = vld [vmem:[%s221 + $0x748] sm:$0xff]
        %v1013 = vld [vmem:[%s221 + $0x750] sm:$0xff]
        %v1014 = vld [vmem:[%s221 + $0x758] sm:$0xff]
        %v1015 = vld [vmem:[%s221 + $0x760] sm:$0xff]
        %v1016 = vld [vmem:[%s221 + $0x768] sm:$0xff]
        %v1017 = vld [vmem:[%s221 + $0x770] sm:$0xff]
        %v1018 = vld [vmem:[%s221 + $0x778] sm:$0xff]
        %v1019 = vld [vmem:[%s221 + $0x780] sm:$0xff]
        %v1020 = vld [vmem:[%s221 + $0x788] sm:$0xff]
        %v1021 = vld [vmem:[%s221 + $0x790] sm:$0xff]
        %v1022 = vld [vmem:[%s221 + $0x798] sm:$0xff]
        %v1023 = vld [vmem:[%s221 + $0x7a0] sm:$0xff]
        %v1024 = vld [vmem:[%s221 + $0x7a8] sm:$0xff]
        %v1025 = vld [vmem:[%s221 + $0x7b0] sm:$0xff]
        %v1026 = vld [vmem:[%s221 + $0x7b8] sm:$0xff]
        %v1027 = vld [vmem:[%s221 + $0x7c0] sm:$0xff]
        %v1028 = vld [vmem:[%s221 + $0x7c8] sm:$0xff]
        %v1029 = vld [vmem:[%s221 + $0x7d0] sm:$0xff]
        %v1030 = vld [vmem:[%s221 + $0x7d8] sm:$0xff]
        %v1031 = vld [vmem:[%s221 + $0x7e0] sm:$0xff]
        %v1032 = vld [vmem:[%s221 + $0x7e8] sm:$0xff]
        %v1033 = vld [vmem:[%s221 + $0x7f0] sm:$0xff]
        %v1034 = vld [vmem:[%s221 + $0x7f8] sm:$0xff]
        %v1035 = vld [vmem:[%s231] sm:$0xff]
        %v1036 = vld [vmem:[%s231 + $0x8] sm:$0xff]
        %v1037 = vld [vmem:[%s231 + $0x10] sm:$0xff]
        %v1038 = vld [vmem:[%s231 + $0x18] sm:$0xff]
        %v1039 = vld [vmem:[%s231 + $0x20] sm:$0xff]
        %v1040 = vld [vmem:[%s231 + $0x28] sm:$0xff]
        %v1041 = vld [vmem:[%s231 + $0x30] sm:$0xff]
        %v1042 = vld [vmem:[%s231 + $0x38] sm:$0xff]
        %v1043 = vld [vmem:[%s231 + $0x40] sm:$0xff]
        %v1044 = vld [vmem:[%s231 + $0x48] sm:$0xff]
        %v1045 = vld [vmem:[%s231 + $0x50] sm:$0xff]
        %v1046 = vld [vmem:[%s231 + $0x58] sm:$0xff]
        %v1047 = vld [vmem:[%s231 + $0x60] sm:$0xff]
        %v1048 = vld [vmem:[%s231 + $0x68] sm:$0xff]
        %v1049 = vld [vmem:[%s231 + $0x70] sm:$0xff]
        %v1050 = vld [vmem:[%s231 + $0x78] sm:$0xff]
        %v1051 = vld [vmem:[%s231 + $0x80] sm:$0xff]
        %v1052 = vld [vmem:[%s231 + $0x88] sm:$0xff]
        %v1053 = vld [vmem:[%s231 + $0x90] sm:$0xff]
        %v1054 = vld [vmem:[%s231 + $0x98] sm:$0xff]
        %v1055 = vld [vmem:[%s231 + $0xa0] sm:$0xff]
        %v1056 = vld [vmem:[%s231 + $0xa8] sm:$0xff]
        %v1057 = vld [vmem:[%s231 + $0xb0] sm:$0xff]
        %v1058 = vld [vmem:[%s231 + $0xb8] sm:$0xff]
        %v1059 = vld [vmem:[%s231 + $0xc0] sm:$0xff]
        %v1060 = vld [vmem:[%s231 + $0xc8] sm:$0xff]
        %v1061 = vld [vmem:[%s231 + $0xd0] sm:$0xff]
        %v1062 = vld [vmem:[%s231 + $0xd8] sm:$0xff]
        %v1063 = vld [vmem:[%s231 + $0xe0] sm:$0xff]
        %v1064 = vld [vmem:[%s231 + $0xe8] sm:$0xff]
        %v1065 = vld [vmem:[%s231 + $0xf0] sm:$0xff]
        %v1066 = vld [vmem:[%s231 + $0xf8] sm:$0xff]
        %v1067 = vld [vmem:[%s231 + $0x100] sm:$0xff]
        %v1068 = vld [vmem:[%s231 + $0x108] sm:$0xff]
        %v1069 = vld [vmem:[%s231 + $0x110] sm:$0xff]
        %v1070 = vld [vmem:[%s231 + $0x118] sm:$0xff]
        %v1071 = vld [vmem:[%s231 + $0x120] sm:$0xff]
        %v1072 = vld [vmem:[%s231 + $0x128] sm:$0xff]
        %v1073 = vld [vmem:[%s231 + $0x130] sm:$0xff]
        %v1074 = vld [vmem:[%s231 + $0x138] sm:$0xff]
        %v1075 = vld [vmem:[%s231 + $0x140] sm:$0xff]
        %v1076 = vld [vmem:[%s231 + $0x148] sm:$0xff]
        %v1077 = vld [vmem:[%s231 + $0x150] sm:$0xff]
        %v1078 = vld [vmem:[%s231 + $0x158] sm:$0xff]
        %v1079 = vld [vmem:[%s231 + $0x160] sm:$0xff]
        %v1080 = vld [vmem:[%s231 + $0x168] sm:$0xff]
        %v1081 = vld [vmem:[%s231 + $0x170] sm:$0xff]
        %v1082 = vld [vmem:[%s231 + $0x178] sm:$0xff]
        %v1083 = vld [vmem:[%s231 + $0x180] sm:$0xff]
        %v1084 = vld [vmem:[%s231 + $0x188] sm:$0xff]
        %v1085 = vld [vmem:[%s231 + $0x190] sm:$0xff]
        %v1086 = vld [vmem:[%s231 + $0x198] sm:$0xff]
        %v1087 = vld [vmem:[%s231 + $0x1a0] sm:$0xff]
        %v1088 = vld [vmem:[%s231 + $0x1a8] sm:$0xff]
        %v1089 = vld [vmem:[%s231 + $0x1b0] sm:$0xff]
        %v1090 = vld [vmem:[%s231 + $0x1b8] sm:$0xff]
        %v1091 = vld [vmem:[%s231 + $0x1c0] sm:$0xff]
        %v1092 = vld [vmem:[%s231 + $0x1c8] sm:$0xff]
        %v1093 = vld [vmem:[%s231 + $0x1d0] sm:$0xff]
        %v1094 = vld [vmem:[%s231 + $0x1d8] sm:$0xff]
        %v1095 = vld [vmem:[%s231 + $0x1e0] sm:$0xff]
        %v1096 = vld [vmem:[%s231 + $0x1e8] sm:$0xff]
        %v1097 = vld [vmem:[%s231 + $0x1f0] sm:$0xff]
        %v1098 = vld [vmem:[%s231 + $0x1f8] sm:$0xff]
        %v1099 = vld [vmem:[%s231 + $0x200] sm:$0xff]
        %v1100 = vld [vmem:[%s231 + $0x208] sm:$0xff]
        %v1101 = vld [vmem:[%s231 + $0x210] sm:$0xff]
        %v1102 = vld [vmem:[%s231 + $0x218] sm:$0xff]
        %v1103 = vld [vmem:[%s231 + $0x220] sm:$0xff]
        %v1104 = vld [vmem:[%s231 + $0x228] sm:$0xff]
        %v1105 = vld [vmem:[%s231 + $0x230] sm:$0xff]
        %v1106 = vld [vmem:[%s231 + $0x238] sm:$0xff]
        %v1107 = vld [vmem:[%s231 + $0x240] sm:$0xff]
        %v1108 = vld [vmem:[%s231 + $0x248] sm:$0xff]
        %v1109 = vld [vmem:[%s231 + $0x250] sm:$0xff]
        %v1110 = vld [vmem:[%s231 + $0x258] sm:$0xff]
        %v1111 = vld [vmem:[%s231 + $0x260] sm:$0xff]
        %v1112 = vld [vmem:[%s231 + $0x268] sm:$0xff]
        %v1113 = vld [vmem:[%s231 + $0x270] sm:$0xff]
        %v1114 = vld [vmem:[%s231 + $0x278] sm:$0xff]
        %v1115 = vld [vmem:[%s231 + $0x280] sm:$0xff]
        %v1116 = vld [vmem:[%s231 + $0x288] sm:$0xff]
        %v1117 = vld [vmem:[%s231 + $0x290] sm:$0xff]
        %v1118 = vld [vmem:[%s231 + $0x298] sm:$0xff]
        %v1119 = vld [vmem:[%s231 + $0x2a0] sm:$0xff]
        %v1120 = vld [vmem:[%s231 + $0x2a8] sm:$0xff]
        %v1121 = vld [vmem:[%s231 + $0x2b0] sm:$0xff]
        %v1122 = vld [vmem:[%s231 + $0x2b8] sm:$0xff]
        %v1123 = vld [vmem:[%s231 + $0x2c0] sm:$0xff]
        %v1124 = vld [vmem:[%s231 + $0x2c8] sm:$0xff]
        %v1125 = vld [vmem:[%s231 + $0x2d0] sm:$0xff]
        %v1126 = vld [vmem:[%s231 + $0x2d8] sm:$0xff]
        %v1127 = vld [vmem:[%s231 + $0x2e0] sm:$0xff]
        %v1128 = vld [vmem:[%s231 + $0x2e8] sm:$0xff]
        %v1129 = vld [vmem:[%s231 + $0x2f0] sm:$0xff]
        %v1130 = vld [vmem:[%s231 + $0x2f8] sm:$0xff]
        %v1131 = vld [vmem:[%s231 + $0x300] sm:$0xff]
        %v1132 = vld [vmem:[%s231 + $0x308] sm:$0xff]
        %v1133 = vld [vmem:[%s231 + $0x310] sm:$0xff]
        %v1134 = vld [vmem:[%s231 + $0x318] sm:$0xff]
        %v1135 = vld [vmem:[%s231 + $0x320] sm:$0xff]
        %v1136 = vld [vmem:[%s231 + $0x328] sm:$0xff]
        %v1137 = vld [vmem:[%s231 + $0x330] sm:$0xff]
        %v1138 = vld [vmem:[%s231 + $0x338] sm:$0xff]
        %v1139 = vld [vmem:[%s231 + $0x340] sm:$0xff]
        %v1140 = vld [vmem:[%s231 + $0x348] sm:$0xff]
        %v1141 = vld [vmem:[%s231 + $0x350] sm:$0xff]
        %v1142 = vld [vmem:[%s231 + $0x358] sm:$0xff]
        %v1143 = vld [vmem:[%s231 + $0x360] sm:$0xff]
        %v1144 = vld [vmem:[%s231 + $0x368] sm:$0xff]
        %v1145 = vld [vmem:[%s231 + $0x370] sm:$0xff]
        %v1146 = vld [vmem:[%s231 + $0x378] sm:$0xff]
        %v1147 = vld [vmem:[%s231 + $0x380] sm:$0xff]
        %v1148 = vld [vmem:[%s231 + $0x388] sm:$0xff]
        %v1149 = vld [vmem:[%s231 + $0x390] sm:$0xff]
        %v1150 = vld [vmem:[%s231 + $0x398] sm:$0xff]
        %v1151 = vld [vmem:[%s231 + $0x3a0] sm:$0xff]
        %v1152 = vld [vmem:[%s231 + $0x3a8] sm:$0xff]
        %v1153 = vld [vmem:[%s231 + $0x3b0] sm:$0xff]
        %v1154 = vld [vmem:[%s231 + $0x3b8] sm:$0xff]
        %v1155 = vld [vmem:[%s231 + $0x3c0] sm:$0xff]
        %v1156 = vld [vmem:[%s231 + $0x3c8] sm:$0xff]
        %v1157 = vld [vmem:[%s231 + $0x3d0] sm:$0xff]
        %v1158 = vld [vmem:[%s231 + $0x3d8] sm:$0xff]
        %v1159 = vld [vmem:[%s231 + $0x3e0] sm:$0xff]
        %v1160 = vld [vmem:[%s231 + $0x3e8] sm:$0xff]
        %v1161 = vld [vmem:[%s231 + $0x3f0] sm:$0xff]
        %v1162 = vld [vmem:[%s231 + $0x3f8] sm:$0xff]
        %v1163 = vld [vmem:[%s231 + $0x400] sm:$0xff]
        %v1164 = vld [vmem:[%s231 + $0x408] sm:$0xff]
        %v1165 = vld [vmem:[%s231 + $0x410] sm:$0xff]
        %v1166 = vld [vmem:[%s231 + $0x418] sm:$0xff]
        %v1167 = vld [vmem:[%s231 + $0x420] sm:$0xff]
        %v1168 = vld [vmem:[%s231 + $0x428] sm:$0xff]
        %v1169 = vld [vmem:[%s231 + $0x430] sm:$0xff]
        %v1170 = vld [vmem:[%s231 + $0x438] sm:$0xff]
        %v1171 = vld [vmem:[%s231 + $0x440] sm:$0xff]
        %v1172 = vld [vmem:[%s231 + $0x448] sm:$0xff]
        %v1173 = vld [vmem:[%s231 + $0x450] sm:$0xff]
        %v1174 = vld [vmem:[%s231 + $0x458] sm:$0xff]
        %v1175 = vld [vmem:[%s231 + $0x460] sm:$0xff]
        %v1176 = vld [vmem:[%s231 + $0x468] sm:$0xff]
        %v1177 = vld [vmem:[%s231 + $0x470] sm:$0xff]
        %v1178 = vld [vmem:[%s231 + $0x478] sm:$0xff]
        %v1179 = vld [vmem:[%s231 + $0x480] sm:$0xff]
        %v1180 = vld [vmem:[%s231 + $0x488] sm:$0xff]
        %v1181 = vld [vmem:[%s231 + $0x490] sm:$0xff]
        %v1182 = vld [vmem:[%s231 + $0x498] sm:$0xff]
        %v1183 = vld [vmem:[%s231 + $0x4a0] sm:$0xff]
        %v1184 = vld [vmem:[%s231 + $0x4a8] sm:$0xff]
        %v1185 = vld [vmem:[%s231 + $0x4b0] sm:$0xff]
        %v1186 = vld [vmem:[%s231 + $0x4b8] sm:$0xff]
        %v1187 = vld [vmem:[%s231 + $0x4c0] sm:$0xff]
        %v1188 = vld [vmem:[%s231 + $0x4c8] sm:$0xff]
        %v1189 = vld [vmem:[%s231 + $0x4d0] sm:$0xff]
        %v1190 = vld [vmem:[%s231 + $0x4d8] sm:$0xff]
        %v1191 = vld [vmem:[%s231 + $0x4e0] sm:$0xff]
        %v1192 = vld [vmem:[%s231 + $0x4e8] sm:$0xff]
        %v1193 = vld [vmem:[%s231 + $0x4f0] sm:$0xff]
        %v1194 = vld [vmem:[%s231 + $0x4f8] sm:$0xff]
        %v1195 = vld [vmem:[%s231 + $0x500] sm:$0xff]
        %v1196 = vld [vmem:[%s231 + $0x508] sm:$0xff]
        %v1197 = vld [vmem:[%s231 + $0x510] sm:$0xff]
        %v1198 = vld [vmem:[%s231 + $0x518] sm:$0xff]
        %v1199 = vld [vmem:[%s231 + $0x520] sm:$0xff]
        %v1200 = vld [vmem:[%s231 + $0x528] sm:$0xff]
        %v1201 = vld [vmem:[%s231 + $0x530] sm:$0xff]
        %v1202 = vld [vmem:[%s231 + $0x538] sm:$0xff]
        %v1203 = vld [vmem:[%s231 + $0x540] sm:$0xff]
        %v1204 = vld [vmem:[%s231 + $0x548] sm:$0xff]
        %v1205 = vld [vmem:[%s231 + $0x550] sm:$0xff]
        %v1206 = vld [vmem:[%s231 + $0x558] sm:$0xff]
        %v1207 = vld [vmem:[%s231 + $0x560] sm:$0xff]
        %v1208 = vld [vmem:[%s231 + $0x568] sm:$0xff]
        %v1209 = vld [vmem:[%s231 + $0x570] sm:$0xff]
        %v1210 = vld [vmem:[%s231 + $0x578] sm:$0xff]
        %v1211 = vld [vmem:[%s231 + $0x580] sm:$0xff]
        %v1212 = vld [vmem:[%s231 + $0x588] sm:$0xff]
        %v1213 = vld [vmem:[%s231 + $0x590] sm:$0xff]
        %v1214 = vld [vmem:[%s231 + $0x598] sm:$0xff]
        %v1215 = vld [vmem:[%s231 + $0x5a0] sm:$0xff]
        %v1216 = vld [vmem:[%s231 + $0x5a8] sm:$0xff]
        %v1217 = vld [vmem:[%s231 + $0x5b0] sm:$0xff]
        %v1218 = vld [vmem:[%s231 + $0x5b8] sm:$0xff]
        %v1219 = vld [vmem:[%s231 + $0x5c0] sm:$0xff]
        %v1220 = vld [vmem:[%s231 + $0x5c8] sm:$0xff]
        %v1221 = vld [vmem:[%s231 + $0x5d0] sm:$0xff]
        %v1222 = vld [vmem:[%s231 + $0x5d8] sm:$0xff]
        %v1223 = vld [vmem:[%s231 + $0x5e0] sm:$0xff]
        %v1224 = vld [vmem:[%s231 + $0x5e8] sm:$0xff]
        %v1225 = vld [vmem:[%s231 + $0x5f0] sm:$0xff]
        %v1226 = vld [vmem:[%s231 + $0x5f8] sm:$0xff]
        %v1227 = vld [vmem:[%s231 + $0x600] sm:$0xff]
        %v1228 = vld [vmem:[%s231 + $0x608] sm:$0xff]
        %v1229 = vld [vmem:[%s231 + $0x610] sm:$0xff]
        %v1230 = vld [vmem:[%s231 + $0x618] sm:$0xff]
        %v1231 = vld [vmem:[%s231 + $0x620] sm:$0xff]
        %v1232 = vld [vmem:[%s231 + $0x628] sm:$0xff]
        %v1233 = vld [vmem:[%s231 + $0x630] sm:$0xff]
        %v1234 = vld [vmem:[%s231 + $0x638] sm:$0xff]
        %v1235 = vld [vmem:[%s231 + $0x640] sm:$0xff]
        %v1236 = vld [vmem:[%s231 + $0x648] sm:$0xff]
        %v1237 = vld [vmem:[%s231 + $0x650] sm:$0xff]
        %v1238 = vld [vmem:[%s231 + $0x658] sm:$0xff]
        %v1239 = vld [vmem:[%s231 + $0x660] sm:$0xff]
        %v1240 = vld [vmem:[%s231 + $0x668] sm:$0xff]
        %v1241 = vld [vmem:[%s231 + $0x670] sm:$0xff]
        %v1242 = vld [vmem:[%s231 + $0x678] sm:$0xff]
        %v1243 = vld [vmem:[%s231 + $0x680] sm:$0xff]
        %v1244 = vld [vmem:[%s231 + $0x688] sm:$0xff]
        %v1245 = vld [vmem:[%s231 + $0x690] sm:$0xff]
        %v1246 = vld [vmem:[%s231 + $0x698] sm:$0xff]
        %v1247 = vld [vmem:[%s231 + $0x6a0] sm:$0xff]
        %v1248 = vld [vmem:[%s231 + $0x6a8] sm:$0xff]
        %v1249 = vld [vmem:[%s231 + $0x6b0] sm:$0xff]
        %v1250 = vld [vmem:[%s231 + $0x6b8] sm:$0xff]
        %v1251 = vld [vmem:[%s231 + $0x6c0] sm:$0xff]
        %v1252 = vld [vmem:[%s231 + $0x6c8] sm:$0xff]
        %v1253 = vld [vmem:[%s231 + $0x6d0] sm:$0xff]
        %v1254 = vld [vmem:[%s231 + $0x6d8] sm:$0xff]
        %v1255 = vld [vmem:[%s231 + $0x6e0] sm:$0xff]
        %v1256 = vld [vmem:[%s231 + $0x6e8] sm:$0xff]
        %v1257 = vld [vmem:[%s231 + $0x6f0] sm:$0xff]
        %v1258 = vld [vmem:[%s231 + $0x6f8] sm:$0xff]
        %v1259 = vld [vmem:[%s231 + $0x700] sm:$0xff]
        %v1260 = vld [vmem:[%s231 + $0x708] sm:$0xff]
        %v1261 = vld [vmem:[%s231 + $0x710] sm:$0xff]
        %v1262 = vld [vmem:[%s231 + $0x718] sm:$0xff]
        %v1263 = vld [vmem:[%s231 + $0x720] sm:$0xff]
        %v1264 = vld [vmem:[%s231 + $0x728] sm:$0xff]
        %v1265 = vld [vmem:[%s231 + $0x730] sm:$0xff]
        %v1266 = vld [vmem:[%s231 + $0x738] sm:$0xff]
        %v1267 = vld [vmem:[%s231 + $0x740] sm:$0xff]
        %v1268 = vld [vmem:[%s231 + $0x748] sm:$0xff]
        %v1269 = vld [vmem:[%s231 + $0x750] sm:$0xff]
        %v1270 = vld [vmem:[%s231 + $0x758] sm:$0xff]
        %v1271 = vld [vmem:[%s231 + $0x760] sm:$0xff]
        %v1272 = vld [vmem:[%s231 + $0x768] sm:$0xff]
        %v1273 = vld [vmem:[%s231 + $0x770] sm:$0xff]
        %v1274 = vld [vmem:[%s231 + $0x778] sm:$0xff]
        %v1275 = vld [vmem:[%s231 + $0x780] sm:$0xff]
        %v1276 = vld [vmem:[%s231 + $0x788] sm:$0xff]
        %v1277 = vld [vmem:[%s231 + $0x790] sm:$0xff]
        %v1278 = vld [vmem:[%s231 + $0x798] sm:$0xff]
        %v1279 = vld [vmem:[%s231 + $0x7a0] sm:$0xff]
        %v1280 = vld [vmem:[%s231 + $0x7a8] sm:$0xff]
        %v1281 = vld [vmem:[%s231 + $0x7b0] sm:$0xff]
        %v1282 = vld [vmem:[%s231 + $0x7b8] sm:$0xff]
        %v1283 = vld [vmem:[%s231 + $0x7c0] sm:$0xff]
        %v1284 = vld [vmem:[%s231 + $0x7c8] sm:$0xff]
        %v1285 = vld [vmem:[%s231 + $0x7d0] sm:$0xff]
        %v1286 = vld [vmem:[%s231 + $0x7d8] sm:$0xff]
        %v1287 = vld [vmem:[%s231 + $0x7e0] sm:$0xff]
        %v1288 = vld [vmem:[%s231 + $0x7e8] sm:$0xff]
        %v1289 = vld [vmem:[%s231 + $0x7f0] sm:$0xff]
        %v1290 = vld [vmem:[%s231 + $0x7f8] sm:$0xff]
        %v1291 = vsub.f32 %v523, %v779
        %v1292 = vsub.f32 %v524, %v780
        %v1293 = vsub.f32 %v525, %v781
        %v1294 = vsub.f32 %v526, %v782
        %v1295 = vsub.f32 %v527, %v783
        %v1296 = vsub.f32 %v528, %v784
        %v1297 = vsub.f32 %v529, %v785
        %v1298 = vsub.f32 %v530, %v786
        %v1299 = vsub.f32 %v531, %v787
        %v1300 = vsub.f32 %v532, %v788
        %v1301 = vsub.f32 %v533, %v789
        %v1302 = vsub.f32 %v534, %v790
        %v1303 = vsub.f32 %v535, %v791
        %v1304 = vsub.f32 %v536, %v792
        %v1305 = vsub.f32 %v537, %v793
        %v1306 = vsub.f32 %v538, %v794
        %v1307 = vsub.f32 %v539, %v795
        %v1308 = vsub.f32 %v540, %v796
        %v1309 = vsub.f32 %v541, %v797
        %v1310 = vsub.f32 %v542, %v798
        %v1311 = vsub.f32 %v543, %v799
        %v1312 = vsub.f32 %v544, %v800
        %v1313 = vsub.f32 %v545, %v801
        %v1314 = vsub.f32 %v546, %v802
        %v1315 = vsub.f32 %v547, %v803
        %v1316 = vsub.f32 %v548, %v804
        %v1317 = vsub.f32 %v549, %v805
        %v1318 = vsub.f32 %v550, %v806
        %v1319 = vsub.f32 %v551, %v807
        %v1320 = vsub.f32 %v552, %v808
        %v1321 = vsub.f32 %v553, %v809
        %v1322 = vsub.f32 %v554, %v810
        %v1323 = vsub.f32 %v555, %v811
        %v1324 = vsub.f32 %v556, %v812
        %v1325 = vsub.f32 %v557, %v813
        %v1326 = vsub.f32 %v558, %v814
        %v1327 = vsub.f32 %v559, %v815
        %v1328 = vsub.f32 %v560, %v816
        %v1329 = vsub.f32 %v561, %v817
        %v1330 = vsub.f32 %v562, %v818
        %v1331 = vsub.f32 %v563, %v819
        %v1332 = vsub.f32 %v564, %v820
        %v1333 = vsub.f32 %v565, %v821
        %v1334 = vsub.f32 %v566, %v822
        %v1335 = vsub.f32 %v567, %v823
        %v1336 = vsub.f32 %v568, %v824
        %v1337 = vsub.f32 %v569, %v825
        %v1338 = vsub.f32 %v570, %v826
        %v1339 = vsub.f32 %v571, %v827
        %v1340 = vsub.f32 %v572, %v828
        %v1341 = vsub.f32 %v573, %v829
        %v1342 = vsub.f32 %v574, %v830
        %v1343 = vsub.f32 %v575, %v831
        %v1344 = vsub.f32 %v576, %v832
        %v1345 = vsub.f32 %v577, %v833
        %v1346 = vsub.f32 %v578, %v834
        %v1347 = vsub.f32 %v579, %v835
        %v1348 = vsub.f32 %v580, %v836
        %v1349 = vsub.f32 %v581, %v837
        %v1350 = vsub.f32 %v582, %v838
        %v1351 = vsub.f32 %v583, %v839
        %v1352 = vsub.f32 %v584, %v840
        %v1353 = vsub.f32 %v585, %v841
        %v1354 = vsub.f32 %v586, %v842
        %v1355 = vsub.f32 %v587, %v843
        %v1356 = vsub.f32 %v588, %v844
        %v1357 = vsub.f32 %v589, %v845
        %v1358 = vsub.f32 %v590, %v846
        %v1359 = vsub.f32 %v591, %v847
        %v1360 = vsub.f32 %v592, %v848
        %v1361 = vsub.f32 %v593, %v849
        %v1362 = vsub.f32 %v594, %v850
        %v1363 = vsub.f32 %v595, %v851
        %v1364 = vsub.f32 %v596, %v852
        %v1365 = vsub.f32 %v597, %v853
        %v1366 = vsub.f32 %v598, %v854
        %v1367 = vsub.f32 %v599, %v855
        %v1368 = vsub.f32 %v600, %v856
        %v1369 = vsub.f32 %v601, %v857
        %v1370 = vsub.f32 %v602, %v858
        %v1371 = vsub.f32 %v603, %v859
        %v1372 = vsub.f32 %v604, %v860
        %v1373 = vsub.f32 %v605, %v861
        %v1374 = vsub.f32 %v606, %v862
        %v1375 = vsub.f32 %v607, %v863
        %v1376 = vsub.f32 %v608, %v864
        %v1377 = vsub.f32 %v609, %v865
        %v1378 = vsub.f32 %v610, %v866
        %v1379 = vsub.f32 %v611, %v867
        %v1380 = vsub.f32 %v612, %v868
        %v1381 = vsub.f32 %v613, %v869
        %v1382 = vsub.f32 %v614, %v870
        %v1383 = vsub.f32 %v615, %v871
        %v1384 = vsub.f32 %v616, %v872
        %v1385 = vsub.f32 %v617, %v873
        %v1386 = vsub.f32 %v618, %v874
        %v1387 = vsub.f32 %v619, %v875
        %v1388 = vsub.f32 %v620, %v876
        %v1389 = vsub.f32 %v621, %v877
        %v1390 = vsub.f32 %v622, %v878
        %v1391 = vsub.f32 %v623, %v879
        %v1392 = vsub.f32 %v624, %v880
        %v1393 = vsub.f32 %v625, %v881
        %v1394 = vsub.f32 %v626, %v882
        %v1395 = vsub.f32 %v627, %v883
        %v1396 = vsub.f32 %v628, %v884
        %v1397 = vsub.f32 %v629, %v885
        %v1398 = vsub.f32 %v630, %v886
        %v1399 = vsub.f32 %v631, %v887
        %v1400 = vsub.f32 %v632, %v888
        %v1401 = vsub.f32 %v633, %v889
        %v1402 = vsub.f32 %v634, %v890
        %v1403 = vsub.f32 %v635, %v891
        %v1404 = vsub.f32 %v636, %v892
        %v1405 = vsub.f32 %v637, %v893
        %v1406 = vsub.f32 %v638, %v894
        %v1407 = vsub.f32 %v639, %v895
        %v1408 = vsub.f32 %v640, %v896
        %v1409 = vsub.f32 %v641, %v897
        %v1410 = vsub.f32 %v642, %v898
        %v1411 = vsub.f32 %v643, %v899
        %v1412 = vsub.f32 %v644, %v900
        %v1413 = vsub.f32 %v645, %v901
        %v1414 = vsub.f32 %v646, %v902
        %v1415 = vsub.f32 %v647, %v903
        %v1416 = vsub.f32 %v648, %v904
        %v1417 = vsub.f32 %v649, %v905
        %v1418 = vsub.f32 %v650, %v906
        %v1419 = vsub.f32 %v651, %v907
        %v1420 = vsub.f32 %v652, %v908
        %v1421 = vsub.f32 %v653, %v909
        %v1422 = vsub.f32 %v654, %v910
        %v1423 = vsub.f32 %v655, %v911
        %v1424 = vsub.f32 %v656, %v912
        %v1425 = vsub.f32 %v657, %v913
        %v1426 = vsub.f32 %v658, %v914
        %v1427 = vsub.f32 %v659, %v915
        %v1428 = vsub.f32 %v660, %v916
        %v1429 = vsub.f32 %v661, %v917
        %v1430 = vsub.f32 %v662, %v918
        %v1431 = vsub.f32 %v663, %v919
        %v1432 = vsub.f32 %v664, %v920
        %v1433 = vsub.f32 %v665, %v921
        %v1434 = vsub.f32 %v666, %v922
        %v1435 = vsub.f32 %v667, %v923
        %v1436 = vsub.f32 %v668, %v924
        %v1437 = vsub.f32 %v669, %v925
        %v1438 = vsub.f32 %v670, %v926
        %v1439 = vsub.f32 %v671, %v927
        %v1440 = vsub.f32 %v672, %v928
        %v1441 = vsub.f32 %v673, %v929
        %v1442 = vsub.f32 %v674, %v930
        %v1443 = vsub.f32 %v675, %v931
        %v1444 = vsub.f32 %v676, %v932
        %v1445 = vsub.f32 %v677, %v933
        %v1446 = vsub.f32 %v678, %v934
        %v1447 = vsub.f32 %v679, %v935
        %v1448 = vsub.f32 %v680, %v936
        %v1449 = vsub.f32 %v681, %v937
        %v1450 = vsub.f32 %v682, %v938
        %v1451 = vsub.f32 %v683, %v939
        %v1452 = vsub.f32 %v684, %v940
        %v1453 = vsub.f32 %v685, %v941
        %v1454 = vsub.f32 %v686, %v942
        %v1455 = vsub.f32 %v687, %v943
        %v1456 = vsub.f32 %v688, %v944
        %v1457 = vsub.f32 %v689, %v945
        %v1458 = vsub.f32 %v690, %v946
        %v1459 = vsub.f32 %v691, %v947
        %v1460 = vsub.f32 %v692, %v948
        %v1461 = vsub.f32 %v693, %v949
        %v1462 = vsub.f32 %v694, %v950
        %v1463 = vsub.f32 %v695, %v951
        %v1464 = vsub.f32 %v696, %v952
        %v1465 = vsub.f32 %v697, %v953
        %v1466 = vsub.f32 %v698, %v954
        %v1467 = vsub.f32 %v699, %v955
        %v1468 = vsub.f32 %v700, %v956
        %v1469 = vsub.f32 %v701, %v957
        %v1470 = vsub.f32 %v702, %v958
        %v1471 = vsub.f32 %v703, %v959
        %v1472 = vsub.f32 %v704, %v960
        %v1473 = vsub.f32 %v705, %v961
        %v1474 = vsub.f32 %v706, %v962
        %v1475 = vsub.f32 %v707, %v963
        %v1476 = vsub.f32 %v708, %v964
        %v1477 = vsub.f32 %v709, %v965
        %v1478 = vsub.f32 %v710, %v966
        %v1479 = vsub.f32 %v711, %v967
        %v1480 = vsub.f32 %v712, %v968
        %v1481 = vsub.f32 %v713, %v969
        %v1482 = vsub.f32 %v714, %v970
        %v1483 = vsub.f32 %v715, %v971
        %v1484 = vsub.f32 %v716, %v972
        %v1485 = vsub.f32 %v717, %v973
        %v1486 = vsub.f32 %v718, %v974
        %v1487 = vsub.f32 %v719, %v975
        %v1488 = vsub.f32 %v720, %v976
        %v1489 = vsub.f32 %v721, %v977
        %v1490 = vsub.f32 %v722, %v978
        %v1491 = vsub.f32 %v723, %v979
        %v1492 = vsub.f32 %v724, %v980
        %v1493 = vsub.f32 %v725, %v981
        %v1494 = vsub.f32 %v726, %v982
        %v1495 = vsub.f32 %v727, %v983
        %v1496 = vsub.f32 %v728, %v984
        %v1497 = vsub.f32 %v729, %v985
        %v1498 = vsub.f32 %v730, %v986
        %v1499 = vsub.f32 %v731, %v987
        %v1500 = vsub.f32 %v732, %v988
        %v1501 = vsub.f32 %v733, %v989
        %v1502 = vsub.f32 %v734, %v990
        %v1503 = vsub.f32 %v735, %v991
        %v1504 = vsub.f32 %v736, %v992
        %v1505 = vsub.f32 %v737, %v993
        %v1506 = vsub.f32 %v738, %v994
        %v1507 = vsub.f32 %v739, %v995
        %v1508 = vsub.f32 %v740, %v996
        %v1509 = vsub.f32 %v741, %v997
        %v1510 = vsub.f32 %v742, %v998
        %v1511 = vsub.f32 %v743, %v999
        %v1512 = vsub.f32 %v744, %v1000
        %v1513 = vsub.f32 %v745, %v1001
        %v1514 = vsub.f32 %v746, %v1002
        %v1515 = vsub.f32 %v747, %v1003
        %v1516 = vsub.f32 %v748, %v1004
        %v1517 = vsub.f32 %v749, %v1005
        %v1518 = vsub.f32 %v750, %v1006
        %v1519 = vsub.f32 %v751, %v1007
        %v1520 = vsub.f32 %v752, %v1008
        %v1521 = vsub.f32 %v753, %v1009
        %v1522 = vsub.f32 %v754, %v1010
        %v1523 = vsub.f32 %v755, %v1011
        %v1524 = vsub.f32 %v756, %v1012
        %v1525 = vsub.f32 %v757, %v1013
        %v1526 = vsub.f32 %v758, %v1014
        %v1527 = vsub.f32 %v759, %v1015
        %v1528 = vsub.f32 %v760, %v1016
        %v1529 = vsub.f32 %v761, %v1017
        %v1530 = vsub.f32 %v762, %v1018
        %v1531 = vsub.f32 %v763, %v1019
        %v1532 = vsub.f32 %v764, %v1020
        %v1533 = vsub.f32 %v765, %v1021
        %v1534 = vsub.f32 %v766, %v1022
        %v1535 = vsub.f32 %v767, %v1023
        %v1536 = vsub.f32 %v768, %v1024
        %v1537 = vsub.f32 %v769, %v1025
        %v1538 = vsub.f32 %v770, %v1026
        %v1539 = vsub.f32 %v771, %v1027
        %v1540 = vsub.f32 %v772, %v1028
        %v1541 = vsub.f32 %v773, %v1029
        %v1542 = vsub.f32 %v774, %v1030
        %v1543 = vsub.f32 %v775, %v1031
        %v1544 = vsub.f32 %v776, %v1032
        %v1545 = vsub.f32 %v777, %v1033
        %v1546 = vsub.f32 %v778, %v1034
        %v1547 = vld [vmem:[#allocation2] sm:$0xff]
        %v1548 = vld [vmem:[#allocation2 + $0x8] sm:$0xff]
        %v1549 = vld [vmem:[#allocation2 + $0x10] sm:$0xff]
        %v1550 = vld [vmem:[#allocation2 + $0x18] sm:$0xff]
        %v1551 = vld [vmem:[#allocation2 + $0x20] sm:$0xff]
        %v1552 = vld [vmem:[#allocation2 + $0x28] sm:$0xff]
        %v1553 = vld [vmem:[#allocation2 + $0x30] sm:$0xff]
        %v1554 = vld [vmem:[#allocation2 + $0x38] sm:$0xff]
        %v1555 = vld [vmem:[#allocation2 + $0x40] sm:$0xff]
        %v1556 = vld [vmem:[#allocation2 + $0x48] sm:$0xff]
        %v1557 = vld [vmem:[#allocation2 + $0x50] sm:$0xff]
        %v1558 = vld [vmem:[#allocation2 + $0x58] sm:$0xff]
        %v1559 = vld [vmem:[#allocation2 + $0x60] sm:$0xff]
        %v1560 = vld [vmem:[#allocation2 + $0x68] sm:$0xff]
        %v1561 = vld [vmem:[#allocation2 + $0x70] sm:$0xff]
        %v1562 = vld [vmem:[#allocation2 + $0x78] sm:$0xff]
        %v1563 = vld [vmem:[#allocation2 + $0x80] sm:$0xff]
        %v1564 = vld [vmem:[#allocation2 + $0x88] sm:$0xff]
        %v1565 = vld [vmem:[#allocation2 + $0x90] sm:$0xff]
        %v1566 = vld [vmem:[#allocation2 + $0x98] sm:$0xff]
        %v1567 = vld [vmem:[#allocation2 + $0xa0] sm:$0xff]
        %v1568 = vld [vmem:[#allocation2 + $0xa8] sm:$0xff]
        %v1569 = vld [vmem:[#allocation2 + $0xb0] sm:$0xff]
        %v1570 = vld [vmem:[#allocation2 + $0xb8] sm:$0xff]
        %v1571 = vld [vmem:[#allocation2 + $0xc0] sm:$0xff]
        %v1572 = vld [vmem:[#allocation2 + $0xc8] sm:$0xff]
        %v1573 = vld [vmem:[#allocation2 + $0xd0] sm:$0xff]
        %v1574 = vld [vmem:[#allocation2 + $0xd8] sm:$0xff]
        %v1575 = vld [vmem:[#allocation2 + $0xe0] sm:$0xff]
        %v1576 = vld [vmem:[#allocation2 + $0xe8] sm:$0xff]
        %v1577 = vld [vmem:[#allocation2 + $0xf0] sm:$0xff]
        %v1578 = vld [vmem:[#allocation2 + $0xf8] sm:$0xff]
        %v1579 = vld [vmem:[#allocation2 + $0x100] sm:$0xff]
        %v1580 = vld [vmem:[#allocation2 + $0x108] sm:$0xff]
        %v1581 = vld [vmem:[#allocation2 + $0x110] sm:$0xff]
        %v1582 = vld [vmem:[#allocation2 + $0x118] sm:$0xff]
        %v1583 = vld [vmem:[#allocation2 + $0x120] sm:$0xff]
        %v1584 = vld [vmem:[#allocation2 + $0x128] sm:$0xff]
        %v1585 = vld [vmem:[#allocation2 + $0x130] sm:$0xff]
        %v1586 = vld [vmem:[#allocation2 + $0x138] sm:$0xff]
        %v1587 = vld [vmem:[#allocation2 + $0x140] sm:$0xff]
        %v1588 = vld [vmem:[#allocation2 + $0x148] sm:$0xff]
        %v1589 = vld [vmem:[#allocation2 + $0x150] sm:$0xff]
        %v1590 = vld [vmem:[#allocation2 + $0x158] sm:$0xff]
        %v1591 = vld [vmem:[#allocation2 + $0x160] sm:$0xff]
        %v1592 = vld [vmem:[#allocation2 + $0x168] sm:$0xff]
        %v1593 = vld [vmem:[#allocation2 + $0x170] sm:$0xff]
        %v1594 = vld [vmem:[#allocation2 + $0x178] sm:$0xff]
        %v1595 = vld [vmem:[#allocation2 + $0x180] sm:$0xff]
        %v1596 = vld [vmem:[#allocation2 + $0x188] sm:$0xff]
        %v1597 = vld [vmem:[#allocation2 + $0x190] sm:$0xff]
        %v1598 = vld [vmem:[#allocation2 + $0x198] sm:$0xff]
        %v1599 = vld [vmem:[#allocation2 + $0x1a0] sm:$0xff]
        %v1600 = vld [vmem:[#allocation2 + $0x1a8] sm:$0xff]
        %v1601 = vld [vmem:[#allocation2 + $0x1b0] sm:$0xff]
        %v1602 = vld [vmem:[#allocation2 + $0x1b8] sm:$0xff]
        %v1603 = vld [vmem:[#allocation2 + $0x1c0] sm:$0xff]
        %v1604 = vld [vmem:[#allocation2 + $0x1c8] sm:$0xff]
        %v1605 = vld [vmem:[#allocation2 + $0x1d0] sm:$0xff]
        %v1606 = vld [vmem:[#allocation2 + $0x1d8] sm:$0xff]
        %v1607 = vld [vmem:[#allocation2 + $0x1e0] sm:$0xff]
        %v1608 = vld [vmem:[#allocation2 + $0x1e8] sm:$0xff]
        %v1609 = vld [vmem:[#allocation2 + $0x1f0] sm:$0xff]
        %v1610 = vld [vmem:[#allocation2 + $0x1f8] sm:$0xff]
        %v1611 = vld [vmem:[#allocation2 + $0x200] sm:$0xff]
        %v1612 = vld [vmem:[#allocation2 + $0x208] sm:$0xff]
        %v1613 = vld [vmem:[#allocation2 + $0x210] sm:$0xff]
        %v1614 = vld [vmem:[#allocation2 + $0x218] sm:$0xff]
        %v1615 = vld [vmem:[#allocation2 + $0x220] sm:$0xff]
        %v1616 = vld [vmem:[#allocation2 + $0x228] sm:$0xff]
        %v1617 = vld [vmem:[#allocation2 + $0x230] sm:$0xff]
        %v1618 = vld [vmem:[#allocation2 + $0x238] sm:$0xff]
        %v1619 = vld [vmem:[#allocation2 + $0x240] sm:$0xff]
        %v1620 = vld [vmem:[#allocation2 + $0x248] sm:$0xff]
        %v1621 = vld [vmem:[#allocation2 + $0x250] sm:$0xff]
        %v1622 = vld [vmem:[#allocation2 + $0x258] sm:$0xff]
        %v1623 = vld [vmem:[#allocation2 + $0x260] sm:$0xff]
        %v1624 = vld [vmem:[#allocation2 + $0x268] sm:$0xff]
        %v1625 = vld [vmem:[#allocation2 + $0x270] sm:$0xff]
        %v1626 = vld [vmem:[#allocation2 + $0x278] sm:$0xff]
        %v1627 = vld [vmem:[#allocation2 + $0x280] sm:$0xff]
        %v1628 = vld [vmem:[#allocation2 + $0x288] sm:$0xff]
        %v1629 = vld [vmem:[#allocation2 + $0x290] sm:$0xff]
        %v1630 = vld [vmem:[#allocation2 + $0x298] sm:$0xff]
        %v1631 = vld [vmem:[#allocation2 + $0x2a0] sm:$0xff]
        %v1632 = vld [vmem:[#allocation2 + $0x2a8] sm:$0xff]
        %v1633 = vld [vmem:[#allocation2 + $0x2b0] sm:$0xff]
        %v1634 = vld [vmem:[#allocation2 + $0x2b8] sm:$0xff]
        %v1635 = vld [vmem:[#allocation2 + $0x2c0] sm:$0xff]
        %v1636 = vld [vmem:[#allocation2 + $0x2c8] sm:$0xff]
        %v1637 = vld [vmem:[#allocation2 + $0x2d0] sm:$0xff]
        %v1638 = vld [vmem:[#allocation2 + $0x2d8] sm:$0xff]
        %v1639 = vld [vmem:[#allocation2 + $0x2e0] sm:$0xff]
        %v1640 = vld [vmem:[#allocation2 + $0x2e8] sm:$0xff]
        %v1641 = vld [vmem:[#allocation2 + $0x2f0] sm:$0xff]
        %v1642 = vld [vmem:[#allocation2 + $0x2f8] sm:$0xff]
        %v1643 = vld [vmem:[#allocation2 + $0x300] sm:$0xff]
        %v1644 = vld [vmem:[#allocation2 + $0x308] sm:$0xff]
        %v1645 = vld [vmem:[#allocation2 + $0x310] sm:$0xff]
        %v1646 = vld [vmem:[#allocation2 + $0x318] sm:$0xff]
        %v1647 = vld [vmem:[#allocation2 + $0x320] sm:$0xff]
        %v1648 = vld [vmem:[#allocation2 + $0x328] sm:$0xff]
        %v1649 = vld [vmem:[#allocation2 + $0x330] sm:$0xff]
        %v1650 = vld [vmem:[#allocation2 + $0x338] sm:$0xff]
        %v1651 = vld [vmem:[#allocation2 + $0x340] sm:$0xff]
        %v1652 = vld [vmem:[#allocation2 + $0x348] sm:$0xff]
        %v1653 = vld [vmem:[#allocation2 + $0x350] sm:$0xff]
        %v1654 = vld [vmem:[#allocation2 + $0x358] sm:$0xff]
        %v1655 = vld [vmem:[#allocation2 + $0x360] sm:$0xff]
        %v1656 = vld [vmem:[#allocation2 + $0x368] sm:$0xff]
        %v1657 = vld [vmem:[#allocation2 + $0x370] sm:$0xff]
        %v1658 = vld [vmem:[#allocation2 + $0x378] sm:$0xff]
        %v1659 = vld [vmem:[#allocation2 + $0x380] sm:$0xff]
        %v1660 = vld [vmem:[#allocation2 + $0x388] sm:$0xff]
        %v1661 = vld [vmem:[#allocation2 + $0x390] sm:$0xff]
        %v1662 = vld [vmem:[#allocation2 + $0x398] sm:$0xff]
        %v1663 = vld [vmem:[#allocation2 + $0x3a0] sm:$0xff]
        %v1664 = vld [vmem:[#allocation2 + $0x3a8] sm:$0xff]
        %v1665 = vld [vmem:[#allocation2 + $0x3b0] sm:$0xff]
        %v1666 = vld [vmem:[#allocation2 + $0x3b8] sm:$0xff]
        %v1667 = vld [vmem:[#allocation2 + $0x3c0] sm:$0xff]
        %v1668 = vld [vmem:[#allocation2 + $0x3c8] sm:$0xff]
        %v1669 = vld [vmem:[#allocation2 + $0x3d0] sm:$0xff]
        %v1670 = vld [vmem:[#allocation2 + $0x3d8] sm:$0xff]
        %v1671 = vld [vmem:[#allocation2 + $0x3e0] sm:$0xff]
        %v1672 = vld [vmem:[#allocation2 + $0x3e8] sm:$0xff]
        %v1673 = vld [vmem:[#allocation2 + $0x3f0] sm:$0xff]
        %v1674 = vld [vmem:[#allocation2 + $0x3f8] sm:$0xff]
        %v1675 = vld [vmem:[#allocation2 + $0x400] sm:$0xff]
        %v1676 = vld [vmem:[#allocation2 + $0x408] sm:$0xff]
        %v1677 = vld [vmem:[#allocation2 + $0x410] sm:$0xff]
        %v1678 = vld [vmem:[#allocation2 + $0x418] sm:$0xff]
        %v1679 = vld [vmem:[#allocation2 + $0x420] sm:$0xff]
        %v1680 = vld [vmem:[#allocation2 + $0x428] sm:$0xff]
        %v1681 = vld [vmem:[#allocation2 + $0x430] sm:$0xff]
        %v1682 = vld [vmem:[#allocation2 + $0x438] sm:$0xff]
        %v1683 = vld [vmem:[#allocation2 + $0x440] sm:$0xff]
        %v1684 = vld [vmem:[#allocation2 + $0x448] sm:$0xff]
        %v1685 = vld [vmem:[#allocation2 + $0x450] sm:$0xff]
        %v1686 = vld [vmem:[#allocation2 + $0x458] sm:$0xff]
        %v1687 = vld [vmem:[#allocation2 + $0x460] sm:$0xff]
        %v1688 = vld [vmem:[#allocation2 + $0x468] sm:$0xff]
        %v1689 = vld [vmem:[#allocation2 + $0x470] sm:$0xff]
        %v1690 = vld [vmem:[#allocation2 + $0x478] sm:$0xff]
        %v1691 = vld [vmem:[#allocation2 + $0x480] sm:$0xff]
        %v1692 = vld [vmem:[#allocation2 + $0x488] sm:$0xff]
        %v1693 = vld [vmem:[#allocation2 + $0x490] sm:$0xff]
        %v1694 = vld [vmem:[#allocation2 + $0x498] sm:$0xff]
        %v1695 = vld [vmem:[#allocation2 + $0x4a0] sm:$0xff]
        %v1696 = vld [vmem:[#allocation2 + $0x4a8] sm:$0xff]
        %v1697 = vld [vmem:[#allocation2 + $0x4b0] sm:$0xff]
        %v1698 = vld [vmem:[#allocation2 + $0x4b8] sm:$0xff]
        %v1699 = vld [vmem:[#allocation2 + $0x4c0] sm:$0xff]
        %v1700 = vld [vmem:[#allocation2 + $0x4c8] sm:$0xff]
        %v1701 = vld [vmem:[#allocation2 + $0x4d0] sm:$0xff]
        %v1702 = vld [vmem:[#allocation2 + $0x4d8] sm:$0xff]
        %v1703 = vld [vmem:[#allocation2 + $0x4e0] sm:$0xff]
        %v1704 = vld [vmem:[#allocation2 + $0x4e8] sm:$0xff]
        %v1705 = vld [vmem:[#allocation2 + $0x4f0] sm:$0xff]
        %v1706 = vld [vmem:[#allocation2 + $0x4f8] sm:$0xff]
        %v1707 = vld [vmem:[#allocation2 + $0x500] sm:$0xff]
        %v1708 = vld [vmem:[#allocation2 + $0x508] sm:$0xff]
        %v1709 = vld [vmem:[#allocation2 + $0x510] sm:$0xff]
        %v1710 = vld [vmem:[#allocation2 + $0x518] sm:$0xff]
        %v1711 = vld [vmem:[#allocation2 + $0x520] sm:$0xff]
        %v1712 = vld [vmem:[#allocation2 + $0x528] sm:$0xff]
        %v1713 = vld [vmem:[#allocation2 + $0x530] sm:$0xff]
        %v1714 = vld [vmem:[#allocation2 + $0x538] sm:$0xff]
        %v1715 = vld [vmem:[#allocation2 + $0x540] sm:$0xff]
        %v1716 = vld [vmem:[#allocation2 + $0x548] sm:$0xff]
        %v1717 = vld [vmem:[#allocation2 + $0x550] sm:$0xff]
        %v1718 = vld [vmem:[#allocation2 + $0x558] sm:$0xff]
        %v1719 = vld [vmem:[#allocation2 + $0x560] sm:$0xff]
        %v1720 = vld [vmem:[#allocation2 + $0x568] sm:$0xff]
        %v1721 = vld [vmem:[#allocation2 + $0x570] sm:$0xff]
        %v1722 = vld [vmem:[#allocation2 + $0x578] sm:$0xff]
        %v1723 = vld [vmem:[#allocation2 + $0x580] sm:$0xff]
        %v1724 = vld [vmem:[#allocation2 + $0x588] sm:$0xff]
        %v1725 = vld [vmem:[#allocation2 + $0x590] sm:$0xff]
        %v1726 = vld [vmem:[#allocation2 + $0x598] sm:$0xff]
        %v1727 = vld [vmem:[#allocation2 + $0x5a0] sm:$0xff]
        %v1728 = vld [vmem:[#allocation2 + $0x5a8] sm:$0xff]
        %v1729 = vld [vmem:[#allocation2 + $0x5b0] sm:$0xff]
        %v1730 = vld [vmem:[#allocation2 + $0x5b8] sm:$0xff]
        %v1731 = vld [vmem:[#allocation2 + $0x5c0] sm:$0xff]
        %v1732 = vld [vmem:[#allocation2 + $0x5c8] sm:$0xff]
        %v1733 = vld [vmem:[#allocation2 + $0x5d0] sm:$0xff]
        %v1734 = vld [vmem:[#allocation2 + $0x5d8] sm:$0xff]
        %v1735 = vld [vmem:[#allocation2 + $0x5e0] sm:$0xff]
        %v1736 = vld [vmem:[#allocation2 + $0x5e8] sm:$0xff]
        %v1737 = vld [vmem:[#allocation2 + $0x5f0] sm:$0xff]
        %v1738 = vld [vmem:[#allocation2 + $0x5f8] sm:$0xff]
        %v1739 = vld [vmem:[#allocation2 + $0x600] sm:$0xff]
        %v1740 = vld [vmem:[#allocation2 + $0x608] sm:$0xff]
        %v1741 = vld [vmem:[#allocation2 + $0x610] sm:$0xff]
        %v1742 = vld [vmem:[#allocation2 + $0x618] sm:$0xff]
        %v1743 = vld [vmem:[#allocation2 + $0x620] sm:$0xff]
        %v1744 = vld [vmem:[#allocation2 + $0x628] sm:$0xff]
        %v1745 = vld [vmem:[#allocation2 + $0x630] sm:$0xff]
        %v1746 = vld [vmem:[#allocation2 + $0x638] sm:$0xff]
        %v1747 = vld [vmem:[#allocation2 + $0x640] sm:$0xff]
        %v1748 = vld [vmem:[#allocation2 + $0x648] sm:$0xff]
        %v1749 = vld [vmem:[#allocation2 + $0x650] sm:$0xff]
        %v1750 = vld [vmem:[#allocation2 + $0x658] sm:$0xff]
        %v1751 = vld [vmem:[#allocation2 + $0x660] sm:$0xff]
        %v1752 = vld [vmem:[#allocation2 + $0x668] sm:$0xff]
        %v1753 = vld [vmem:[#allocation2 + $0x670] sm:$0xff]
        %v1754 = vld [vmem:[#allocation2 + $0x678] sm:$0xff]
        %v1755 = vld [vmem:[#allocation2 + $0x680] sm:$0xff]
        %v1756 = vld [vmem:[#allocation2 + $0x688] sm:$0xff]
        %v1757 = vld [vmem:[#allocation2 + $0x690] sm:$0xff]
        %v1758 = vld [vmem:[#allocation2 + $0x698] sm:$0xff]
        %v1759 = vld [vmem:[#allocation2 + $0x6a0] sm:$0xff]
        %v1760 = vld [vmem:[#allocation2 + $0x6a8] sm:$0xff]
        %v1761 = vld [vmem:[#allocation2 + $0x6b0] sm:$0xff]
        %v1762 = vld [vmem:[#allocation2 + $0x6b8] sm:$0xff]
        %v1763 = vld [vmem:[#allocation2 + $0x6c0] sm:$0xff]
        %v1764 = vld [vmem:[#allocation2 + $0x6c8] sm:$0xff]
        %v1765 = vld [vmem:[#allocation2 + $0x6d0] sm:$0xff]
        %v1766 = vld [vmem:[#allocation2 + $0x6d8] sm:$0xff]
        %v1767 = vld [vmem:[#allocation2 + $0x6e0] sm:$0xff]
        %v1768 = vld [vmem:[#allocation2 + $0x6e8] sm:$0xff]
        %v1769 = vld [vmem:[#allocation2 + $0x6f0] sm:$0xff]
        %v1770 = vld [vmem:[#allocation2 + $0x6f8] sm:$0xff]
        %v1771 = vld [vmem:[#allocation2 + $0x700] sm:$0xff]
        %v1772 = vld [vmem:[#allocation2 + $0x708] sm:$0xff]
        %v1773 = vld [vmem:[#allocation2 + $0x710] sm:$0xff]
        %v1774 = vld [vmem:[#allocation2 + $0x718] sm:$0xff]
        %v1775 = vld [vmem:[#allocation2 + $0x720] sm:$0xff]
        %v1776 = vld [vmem:[#allocation2 + $0x728] sm:$0xff]
        %v1777 = vld [vmem:[#allocation2 + $0x730] sm:$0xff]
        %v1778 = vld [vmem:[#allocation2 + $0x738] sm:$0xff]
        %v1779 = vld [vmem:[#allocation2 + $0x740] sm:$0xff]
        %v1780 = vld [vmem:[#allocation2 + $0x748] sm:$0xff]
        %v1781 = vld [vmem:[#allocation2 + $0x750] sm:$0xff]
        %v1782 = vld [vmem:[#allocation2 + $0x758] sm:$0xff]
        %v1783 = vld [vmem:[#allocation2 + $0x760] sm:$0xff]
        %v1784 = vld [vmem:[#allocation2 + $0x768] sm:$0xff]
        %v1785 = vld [vmem:[#allocation2 + $0x770] sm:$0xff]
        %v1786 = vld [vmem:[#allocation2 + $0x778] sm:$0xff]
        %v1787 = vld [vmem:[#allocation2 + $0x780] sm:$0xff]
        %v1788 = vld [vmem:[#allocation2 + $0x788] sm:$0xff]
        %v1789 = vld [vmem:[#allocation2 + $0x790] sm:$0xff]
        %v1790 = vld [vmem:[#allocation2 + $0x798] sm:$0xff]
        %v1791 = vld [vmem:[#allocation2 + $0x7a0] sm:$0xff]
        %v1792 = vld [vmem:[#allocation2 + $0x7a8] sm:$0xff]
        %v1793 = vld [vmem:[#allocation2 + $0x7b0] sm:$0xff]
        %v1794 = vld [vmem:[#allocation2 + $0x7b8] sm:$0xff]
        %v1795 = vld [vmem:[#allocation2 + $0x7c0] sm:$0xff]
        %v1796 = vld [vmem:[#allocation2 + $0x7c8] sm:$0xff]
        %v1797 = vld [vmem:[#allocation2 + $0x7d0] sm:$0xff]
        %v1798 = vld [vmem:[#allocation2 + $0x7d8] sm:$0xff]
        %v1799 = vld [vmem:[#allocation2 + $0x7e0] sm:$0xff]
        %v1800 = vld [vmem:[#allocation2 + $0x7e8] sm:$0xff]
        %v1801 = vld [vmem:[#allocation2 + $0x7f0] sm:$0xff]
        %v1802 = vld [vmem:[#allocation2 + $0x7f8] sm:$0xff]
        %v1803 = vmul.f32 %v1035, %v1291
        %v1804 = vmul.f32 %v1036, %v1292
        %v1805 = vmul.f32 %v1037, %v1293
        %v1806 = vmul.f32 %v1038, %v1294
        %v1807 = vmul.f32 %v1039, %v1295
        %v1808 = vmul.f32 %v1040, %v1296
        %v1809 = vmul.f32 %v1041, %v1297
        %v1810 = vmul.f32 %v1042, %v1298
        %v1811 = vmul.f32 %v1043, %v1299
        %v1812 = vmul.f32 %v1044, %v1300
        %v1813 = vmul.f32 %v1045, %v1301
        %v1814 = vmul.f32 %v1046, %v1302
        %v1815 = vmul.f32 %v1047, %v1303
        %v1816 = vmul.f32 %v1048, %v1304
        %v1817 = vmul.f32 %v1049, %v1305
        %v1818 = vmul.f32 %v1050, %v1306
        %v1819 = vmul.f32 %v1051, %v1307
        %v1820 = vmul.f32 %v1052, %v1308
        %v1821 = vmul.f32 %v1053, %v1309
        %v1822 = vmul.f32 %v1054, %v1310
        %v1823 = vmul.f32 %v1055, %v1311
        %v1824 = vmul.f32 %v1056, %v1312
        %v1825 = vmul.f32 %v1057, %v1313
        %v1826 = vmul.f32 %v1058, %v1314
        %v1827 = vmul.f32 %v1059, %v1315
        %v1828 = vmul.f32 %v1060, %v1316
        %v1829 = vmul.f32 %v1061, %v1317
        %v1830 = vmul.f32 %v1062, %v1318
        %v1831 = vmul.f32 %v1063, %v1319
        %v1832 = vmul.f32 %v1064, %v1320
        %v1833 = vmul.f32 %v1065, %v1321
        %v1834 = vmul.f32 %v1066, %v1322
        %v1835 = vmul.f32 %v1067, %v1323
        %v1836 = vmul.f32 %v1068, %v1324
        %v1837 = vmul.f32 %v1069, %v1325
        %v1838 = vmul.f32 %v1070, %v1326
        %v1839 = vmul.f32 %v1071, %v1327
        %v1840 = vmul.f32 %v1072, %v1328
        %v1841 = vmul.f32 %v1073, %v1329
        %v1842 = vmul.f32 %v1074, %v1330
        %v1843 = vmul.f32 %v1075, %v1331
        %v1844 = vmul.f32 %v1076, %v1332
        %v1845 = vmul.f32 %v1077, %v1333
        %v1846 = vmul.f32 %v1078, %v1334
        %v1847 = vmul.f32 %v1079, %v1335
        %v1848 = vmul.f32 %v1080, %v1336
        %v1849 = vmul.f32 %v1081, %v1337
        %v1850 = vmul.f32 %v1082, %v1338
        %v1851 = vmul.f32 %v1083, %v1339
        %v1852 = vmul.f32 %v1084, %v1340
        %v1853 = vmul.f32 %v1085, %v1341
        %v1854 = vmul.f32 %v1086, %v1342
        %v1855 = vmul.f32 %v1087, %v1343
        %v1856 = vmul.f32 %v1088, %v1344
        %v1857 = vmul.f32 %v1089, %v1345
        %v1858 = vmul.f32 %v1090, %v1346
        %v1859 = vmul.f32 %v1091, %v1347
        %v1860 = vmul.f32 %v1092, %v1348
        %v1861 = vmul.f32 %v1093, %v1349
        %v1862 = vmul.f32 %v1094, %v1350
        %v1863 = vmul.f32 %v1095, %v1351
        %v1864 = vmul.f32 %v1096, %v1352
        %v1865 = vmul.f32 %v1097, %v1353
        %v1866 = vmul.f32 %v1098, %v1354
        %v1867 = vmul.f32 %v1099, %v1355
        %v1868 = vmul.f32 %v1100, %v1356
        %v1869 = vmul.f32 %v1101, %v1357
        %v1870 = vmul.f32 %v1102, %v1358
        %v1871 = vmul.f32 %v1103, %v1359
        %v1872 = vmul.f32 %v1104, %v1360
        %v1873 = vmul.f32 %v1105, %v1361
        %v1874 = vmul.f32 %v1106, %v1362
        %v1875 = vmul.f32 %v1107, %v1363
        %v1876 = vmul.f32 %v1108, %v1364
        %v1877 = vmul.f32 %v1109, %v1365
        %v1878 = vmul.f32 %v1110, %v1366
        %v1879 = vmul.f32 %v1111, %v1367
        %v1880 = vmul.f32 %v1112, %v1368
        %v1881 = vmul.f32 %v1113, %v1369
        %v1882 = vmul.f32 %v1114, %v1370
        %v1883 = vmul.f32 %v1115, %v1371
        %v1884 = vmul.f32 %v1116, %v1372
        %v1885 = vmul.f32 %v1117, %v1373
        %v1886 = vmul.f32 %v1118, %v1374
        %v1887 = vmul.f32 %v1119, %v1375
        %v1888 = vmul.f32 %v1120, %v1376
        %v1889 = vmul.f32 %v1121, %v1377
        %v1890 = vmul.f32 %v1122, %v1378
        %v1891 = vmul.f32 %v1123, %v1379
        %v1892 = vmul.f32 %v1124, %v1380
        %v1893 = vmul.f32 %v1125, %v1381
        %v1894 = vmul.f32 %v1126, %v1382
        %v1895 = vmul.f32 %v1127, %v1383
        %v1896 = vmul.f32 %v1128, %v1384
        %v1897 = vmul.f32 %v1129, %v1385
        %v1898 = vmul.f32 %v1130, %v1386
        %v1899 = vmul.f32 %v1131, %v1387
        %v1900 = vmul.f32 %v1132, %v1388
        %v1901 = vmul.f32 %v1133, %v1389
        %v1902 = vmul.f32 %v1134, %v1390
        %v1903 = vmul.f32 %v1135, %v1391
        %v1904 = vmul.f32 %v1136, %v1392
        %v1905 = vmul.f32 %v1137, %v1393
        %v1906 = vmul.f32 %v1138, %v1394
        %v1907 = vmul.f32 %v1139, %v1395
        %v1908 = vmul.f32 %v1140, %v1396
        %v1909 = vmul.f32 %v1141, %v1397
        %v1910 = vmul.f32 %v1142, %v1398
        %v1911 = vmul.f32 %v1143, %v1399
        %v1912 = vmul.f32 %v1144, %v1400
        %v1913 = vmul.f32 %v1145, %v1401
        %v1914 = vmul.f32 %v1146, %v1402
        %v1915 = vmul.f32 %v1147, %v1403
        %v1916 = vmul.f32 %v1148, %v1404
        %v1917 = vmul.f32 %v1149, %v1405
        %v1918 = vmul.f32 %v1150, %v1406
        %v1919 = vmul.f32 %v1151, %v1407
        %v1920 = vmul.f32 %v1152, %v1408
        %v1921 = vmul.f32 %v1153, %v1409
        %v1922 = vmul.f32 %v1154, %v1410
        %v1923 = vmul.f32 %v1155, %v1411
        %v1924 = vmul.f32 %v1156, %v1412
        %v1925 = vmul.f32 %v1157, %v1413
        %v1926 = vmul.f32 %v1158, %v1414
        %v1927 = vmul.f32 %v1159, %v1415
        %v1928 = vmul.f32 %v1160, %v1416
        %v1929 = vmul.f32 %v1161, %v1417
        %v1930 = vmul.f32 %v1162, %v1418
        %v1931 = vmul.f32 %v1163, %v1419
        %v1932 = vmul.f32 %v1164, %v1420
        %v1933 = vmul.f32 %v1165, %v1421
        %v1934 = vmul.f32 %v1166, %v1422
        %v1935 = vmul.f32 %v1167, %v1423
        %v1936 = vmul.f32 %v1168, %v1424
        %v1937 = vmul.f32 %v1169, %v1425
        %v1938 = vmul.f32 %v1170, %v1426
        %v1939 = vmul.f32 %v1171, %v1427
        %v1940 = vmul.f32 %v1172, %v1428
        %v1941 = vmul.f32 %v1173, %v1429
        %v1942 = vmul.f32 %v1174, %v1430
        %v1943 = vmul.f32 %v1175, %v1431
        %v1944 = vmul.f32 %v1176, %v1432
        %v1945 = vmul.f32 %v1177, %v1433
        %v1946 = vmul.f32 %v1178, %v1434
        %v1947 = vmul.f32 %v1179, %v1435
        %v1948 = vmul.f32 %v1180, %v1436
        %v1949 = vmul.f32 %v1181, %v1437
        %v1950 = vmul.f32 %v1182, %v1438
        %v1951 = vmul.f32 %v1183, %v1439
        %v1952 = vmul.f32 %v1184, %v1440
        %v1953 = vmul.f32 %v1185, %v1441
        %v1954 = vmul.f32 %v1186, %v1442
        %v1955 = vmul.f32 %v1187, %v1443
        %v1956 = vmul.f32 %v1188, %v1444
        %v1957 = vmul.f32 %v1189, %v1445
        %v1958 = vmul.f32 %v1190, %v1446
        %v1959 = vmul.f32 %v1191, %v1447
        %v1960 = vmul.f32 %v1192, %v1448
        %v1961 = vmul.f32 %v1193, %v1449
        %v1962 = vmul.f32 %v1194, %v1450
        %v1963 = vmul.f32 %v1195, %v1451
        %v1964 = vmul.f32 %v1196, %v1452
        %v1965 = vmul.f32 %v1197, %v1453
        %v1966 = vmul.f32 %v1198, %v1454
        %v1967 = vmul.f32 %v1199, %v1455
        %v1968 = vmul.f32 %v1200, %v1456
        %v1969 = vmul.f32 %v1201, %v1457
        %v1970 = vmul.f32 %v1202, %v1458
        %v1971 = vmul.f32 %v1203, %v1459
        %v1972 = vmul.f32 %v1204, %v1460
        %v1973 = vmul.f32 %v1205, %v1461
        %v1974 = vmul.f32 %v1206, %v1462
        %v1975 = vmul.f32 %v1207, %v1463
        %v1976 = vmul.f32 %v1208, %v1464
        %v1977 = vmul.f32 %v1209, %v1465
        %v1978 = vmul.f32 %v1210, %v1466
        %v1979 = vmul.f32 %v1211, %v1467
        %v1980 = vmul.f32 %v1212, %v1468
        %v1981 = vmul.f32 %v1213, %v1469
        %v1982 = vmul.f32 %v1214, %v1470
        %v1983 = vmul.f32 %v1215, %v1471
        %v1984 = vmul.f32 %v1216, %v1472
        %v1985 = vmul.f32 %v1217, %v1473
        %v1986 = vmul.f32 %v1218, %v1474
        %v1987 = vmul.f32 %v1219, %v1475
        %v1988 = vmul.f32 %v1220, %v1476
        %v1989 = vmul.f32 %v1221, %v1477
        %v1990 = vmul.f32 %v1222, %v1478
        %v1991 = vmul.f32 %v1223, %v1479
        %v1992 = vmul.f32 %v1224, %v1480
        %v1993 = vmul.f32 %v1225, %v1481
        %v1994 = vmul.f32 %v1226, %v1482
        %v1995 = vmul.f32 %v1227, %v1483
        %v1996 = vmul.f32 %v1228, %v1484
        %v1997 = vmul.f32 %v1229, %v1485
        %v1998 = vmul.f32 %v1230, %v1486
        %v1999 = vmul.f32 %v1231, %v1487
        %v2000 = vmul.f32 %v1232, %v1488
        %v2001 = vmul.f32 %v1233, %v1489
        %v2002 = vmul.f32 %v1234, %v1490
        %v2003 = vmul.f32 %v1235, %v1491
        %v2004 = vmul.f32 %v1236, %v1492
        %v2005 = vmul.f32 %v1237, %v1493
        %v2006 = vmul.f32 %v1238, %v1494
        %v2007 = vmul.f32 %v1239, %v1495
        %v2008 = vmul.f32 %v1240, %v1496
        %v2009 = vmul.f32 %v1241, %v1497
        %v2010 = vmul.f32 %v1242, %v1498
        %v2011 = vmul.f32 %v1243, %v1499
        %v2012 = vmul.f32 %v1244, %v1500
        %v2013 = vmul.f32 %v1245, %v1501
        %v2014 = vmul.f32 %v1246, %v1502
        %v2015 = vmul.f32 %v1247, %v1503
        %v2016 = vmul.f32 %v1248, %v1504
        %v2017 = vmul.f32 %v1249, %v1505
        %v2018 = vmul.f32 %v1250, %v1506
        %v2019 = vmul.f32 %v1251, %v1507
        %v2020 = vmul.f32 %v1252, %v1508
        %v2021 = vmul.f32 %v1253, %v1509
        %v2022 = vmul.f32 %v1254, %v1510
        %v2023 = vmul.f32 %v1255, %v1511
        %v2024 = vmul.f32 %v1256, %v1512
        %v2025 = vmul.f32 %v1257, %v1513
        %v2026 = vmul.f32 %v1258, %v1514
        %v2027 = vmul.f32 %v1259, %v1515
        %v2028 = vmul.f32 %v1260, %v1516
        %v2029 = vmul.f32 %v1261, %v1517
        %v2030 = vmul.f32 %v1262, %v1518
        %v2031 = vmul.f32 %v1263, %v1519
        %v2032 = vmul.f32 %v1264, %v1520
        %v2033 = vmul.f32 %v1265, %v1521
        %v2034 = vmul.f32 %v1266, %v1522
        %v2035 = vmul.f32 %v1267, %v1523
        %v2036 = vmul.f32 %v1268, %v1524
        %v2037 = vmul.f32 %v1269, %v1525
        %v2038 = vmul.f32 %v1270, %v1526
        %v2039 = vmul.f32 %v1271, %v1527
        %v2040 = vmul.f32 %v1272, %v1528
        %v2041 = vmul.f32 %v1273, %v1529
        %v2042 = vmul.f32 %v1274, %v1530
        %v2043 = vmul.f32 %v1275, %v1531
        %v2044 = vmul.f32 %v1276, %v1532
        %v2045 = vmul.f32 %v1277, %v1533
        %v2046 = vmul.f32 %v1278, %v1534
        %v2047 = vmul.f32 %v1279, %v1535
        %v2048 = vmul.f32 %v1280, %v1536
        %v2049 = vmul.f32 %v1281, %v1537
        %v2050 = vmul.f32 %v1282, %v1538
        %v2051 = vmul.f32 %v1283, %v1539
        %v2052 = vmul.f32 %v1284, %v1540
        %v2053 = vmul.f32 %v1285, %v1541
        %v2054 = vmul.f32 %v1286, %v1542
        %v2055 = vmul.f32 %v1287, %v1543
        %v2056 = vmul.f32 %v1288, %v1544
        %v2057 = vmul.f32 %v1289, %v1545
        %v2058 = vmul.f32 %v1290, %v1546
        %v2059 = vmul.f32 %v1803, %v1291
        %v2060 = vmul.f32 %v1804, %v1292
        %v2061 = vmul.f32 %v1805, %v1293
        %v2062 = vmul.f32 %v1806, %v1294
        %v2063 = vmul.f32 %v1807, %v1295
        %v2064 = vmul.f32 %v1808, %v1296
        %v2065 = vmul.f32 %v1809, %v1297
        %v2066 = vmul.f32 %v1810, %v1298
        %v2067 = vmul.f32 %v1811, %v1299
        %v2068 = vmul.f32 %v1812, %v1300
        %v2069 = vmul.f32 %v1813, %v1301
        %v2070 = vmul.f32 %v1814, %v1302
        %v2071 = vmul.f32 %v1815, %v1303
        %v2072 = vmul.f32 %v1816, %v1304
        %v2073 = vmul.f32 %v1817, %v1305
        %v2074 = vmul.f32 %v1818, %v1306
        %v2075 = vmul.f32 %v1819, %v1307
        %v2076 = vmul.f32 %v1820, %v1308
        %v2077 = vmul.f32 %v1821, %v1309
        %v2078 = vmul.f32 %v1822, %v1310
        %v2079 = vmul.f32 %v1823, %v1311
        %v2080 = vmul.f32 %v1824, %v1312
        %v2081 = vmul.f32 %v1825, %v1313
        %v2082 = vmul.f32 %v1826, %v1314
        %v2083 = vmul.f32 %v1827, %v1315
        %v2084 = vmul.f32 %v1828, %v1316
        %v2085 = vmul.f32 %v1829, %v1317
        %v2086 = vmul.f32 %v1830, %v1318
        %v2087 = vmul.f32 %v1831, %v1319
        %v2088 = vmul.f32 %v1832, %v1320
        %v2089 = vmul.f32 %v1833, %v1321
        %v2090 = vmul.f32 %v1834, %v1322
        %v2091 = vmul.f32 %v1835, %v1323
        %v2092 = vmul.f32 %v1836, %v1324
        %v2093 = vmul.f32 %v1837, %v1325
        %v2094 = vmul.f32 %v1838, %v1326
        %v2095 = vmul.f32 %v1839, %v1327
        %v2096 = vmul.f32 %v1840, %v1328
        %v2097 = vmul.f32 %v1841, %v1329
        %v2098 = vmul.f32 %v1842, %v1330
        %v2099 = vmul.f32 %v1843, %v1331
        %v2100 = vmul.f32 %v1844, %v1332
        %v2101 = vmul.f32 %v1845, %v1333
        %v2102 = vmul.f32 %v1846, %v1334
        %v2103 = vmul.f32 %v1847, %v1335
        %v2104 = vmul.f32 %v1848, %v1336
        %v2105 = vmul.f32 %v1849, %v1337
        %v2106 = vmul.f32 %v1850, %v1338
        %v2107 = vmul.f32 %v1851, %v1339
        %v2108 = vmul.f32 %v1852, %v1340
        %v2109 = vmul.f32 %v1853, %v1341
        %v2110 = vmul.f32 %v1854, %v1342
        %v2111 = vmul.f32 %v1855, %v1343
        %v2112 = vmul.f32 %v1856, %v1344
        %v2113 = vmul.f32 %v1857, %v1345
        %v2114 = vmul.f32 %v1858, %v1346
        %v2115 = vmul.f32 %v1859, %v1347
        %v2116 = vmul.f32 %v1860, %v1348
        %v2117 = vmul.f32 %v1861, %v1349
        %v2118 = vmul.f32 %v1862, %v1350
        %v2119 = vmul.f32 %v1863, %v1351
        %v2120 = vmul.f32 %v1864, %v1352
        %v2121 = vmul.f32 %v1865, %v1353
        %v2122 = vmul.f32 %v1866, %v1354
        %v2123 = vmul.f32 %v1867, %v1355
        %v2124 = vmul.f32 %v1868, %v1356
        %v2125 = vmul.f32 %v1869, %v1357
        %v2126 = vmul.f32 %v1870, %v1358
        %v2127 = vmul.f32 %v1871, %v1359
        %v2128 = vmul.f32 %v1872, %v1360
        %v2129 = vmul.f32 %v1873, %v1361
        %v2130 = vmul.f32 %v1874, %v1362
        %v2131 = vmul.f32 %v1875, %v1363
        %v2132 = vmul.f32 %v1876, %v1364
        %v2133 = vmul.f32 %v1877, %v1365
        %v2134 = vmul.f32 %v1878, %v1366
        %v2135 = vmul.f32 %v1879, %v1367
        %v2136 = vmul.f32 %v1880, %v1368
        %v2137 = vmul.f32 %v1881, %v1369
        %v2138 = vmul.f32 %v1882, %v1370
        %v2139 = vmul.f32 %v1883, %v1371
        %v2140 = vmul.f32 %v1884, %v1372
        %v2141 = vmul.f32 %v1885, %v1373
        %v2142 = vmul.f32 %v1886, %v1374
        %v2143 = vmul.f32 %v1887, %v1375
        %v2144 = vmul.f32 %v1888, %v1376
        %v2145 = vmul.f32 %v1889, %v1377
        %v2146 = vmul.f32 %v1890, %v1378
        %v2147 = vmul.f32 %v1891, %v1379
        %v2148 = vmul.f32 %v1892, %v1380
        %v2149 = vmul.f32 %v1893, %v1381
        %v2150 = vmul.f32 %v1894, %v1382
        %v2151 = vmul.f32 %v1895, %v1383
        %v2152 = vmul.f32 %v1896, %v1384
        %v2153 = vmul.f32 %v1897, %v1385
        %v2154 = vmul.f32 %v1898, %v1386
        %v2155 = vmul.f32 %v1899, %v1387
        %v2156 = vmul.f32 %v1900, %v1388
        %v2157 = vmul.f32 %v1901, %v1389
        %v2158 = vmul.f32 %v1902, %v1390
        %v2159 = vmul.f32 %v1903, %v1391
        %v2160 = vmul.f32 %v1904, %v1392
        %v2161 = vmul.f32 %v1905, %v1393
        %v2162 = vmul.f32 %v1906, %v1394
        %v2163 = vmul.f32 %v1907, %v1395
        %v2164 = vmul.f32 %v1908, %v1396
        %v2165 = vmul.f32 %v1909, %v1397
        %v2166 = vmul.f32 %v1910, %v1398
        %v2167 = vmul.f32 %v1911, %v1399
        %v2168 = vmul.f32 %v1912, %v1400
        %v2169 = vmul.f32 %v1913, %v1401
        %v2170 = vmul.f32 %v1914, %v1402
        %v2171 = vmul.f32 %v1915, %v1403
        %v2172 = vmul.f32 %v1916, %v1404
        %v2173 = vmul.f32 %v1917, %v1405
        %v2174 = vmul.f32 %v1918, %v1406
        %v2175 = vmul.f32 %v1919, %v1407
        %v2176 = vmul.f32 %v1920, %v1408
        %v2177 = vmul.f32 %v1921, %v1409
        %v2178 = vmul.f32 %v1922, %v1410
        %v2179 = vmul.f32 %v1923, %v1411
        %v2180 = vmul.f32 %v1924, %v1412
        %v2181 = vmul.f32 %v1925, %v1413
        %v2182 = vmul.f32 %v1926, %v1414
        %v2183 = vmul.f32 %v1927, %v1415
        %v2184 = vmul.f32 %v1928, %v1416
        %v2185 = vmul.f32 %v1929, %v1417
        %v2186 = vmul.f32 %v1930, %v1418
        %v2187 = vmul.f32 %v1931, %v1419
        %v2188 = vmul.f32 %v1932, %v1420
        %v2189 = vmul.f32 %v1933, %v1421
        %v2190 = vmul.f32 %v1934, %v1422
        %v2191 = vmul.f32 %v1935, %v1423
        %v2192 = vmul.f32 %v1936, %v1424
        %v2193 = vmul.f32 %v1937, %v1425
        %v2194 = vmul.f32 %v1938, %v1426
        %v2195 = vmul.f32 %v1939, %v1427
        %v2196 = vmul.f32 %v1940, %v1428
        %v2197 = vmul.f32 %v1941, %v1429
        %v2198 = vmul.f32 %v1942, %v1430
        %v2199 = vmul.f32 %v1943, %v1431
        %v2200 = vmul.f32 %v1944, %v1432
        %v2201 = vmul.f32 %v1945, %v1433
        %v2202 = vmul.f32 %v1946, %v1434
        %v2203 = vmul.f32 %v1947, %v1435
        %v2204 = vmul.f32 %v1948, %v1436
        %v2205 = vmul.f32 %v1949, %v1437
        %v2206 = vmul.f32 %v1950, %v1438
        %v2207 = vmul.f32 %v1951, %v1439
        %v2208 = vmul.f32 %v1952, %v1440
        %v2209 = vmul.f32 %v1953, %v1441
        %v2210 = vmul.f32 %v1954, %v1442
        %v2211 = vmul.f32 %v1955, %v1443
        %v2212 = vmul.f32 %v1956, %v1444
        %v2213 = vmul.f32 %v1957, %v1445
        %v2214 = vmul.f32 %v1958, %v1446
        %v2215 = vmul.f32 %v1959, %v1447
        %v2216 = vmul.f32 %v1960, %v1448
        %v2217 = vmul.f32 %v1961, %v1449
        %v2218 = vmul.f32 %v1962, %v1450
        %v2219 = vmul.f32 %v1963, %v1451
        %v2220 = vmul.f32 %v1964, %v1452
        %v2221 = vmul.f32 %v1965, %v1453
        %v2222 = vmul.f32 %v1966, %v1454
        %v2223 = vmul.f32 %v1967, %v1455
        %v2224 = vmul.f32 %v1968, %v1456
        %v2225 = vmul.f32 %v1969, %v1457
        %v2226 = vmul.f32 %v1970, %v1458
        %v2227 = vmul.f32 %v1971, %v1459
        %v2228 = vmul.f32 %v1972, %v1460
        %v2229 = vmul.f32 %v1973, %v1461
        %v2230 = vmul.f32 %v1974, %v1462
        %v2231 = vmul.f32 %v1975, %v1463
        %v2232 = vmul.f32 %v1976, %v1464
        %v2233 = vmul.f32 %v1977, %v1465
        %v2234 = vmul.f32 %v1978, %v1466
        %v2235 = vmul.f32 %v1979, %v1467
        %v2236 = vmul.f32 %v1980, %v1468
        %v2237 = vmul.f32 %v1981, %v1469
        %v2238 = vmul.f32 %v1982, %v1470
        %v2239 = vmul.f32 %v1983, %v1471
        %v2240 = vmul.f32 %v1984, %v1472
        %v2241 = vmul.f32 %v1985, %v1473
        %v2242 = vmul.f32 %v1986, %v1474
        %v2243 = vmul.f32 %v1987, %v1475
        %v2244 = vmul.f32 %v1988, %v1476
        %v2245 = vmul.f32 %v1989, %v1477
        %v2246 = vmul.f32 %v1990, %v1478
        %v2247 = vmul.f32 %v1991, %v1479
        %v2248 = vmul.f32 %v1992, %v1480
        %v2249 = vmul.f32 %v1993, %v1481
        %v2250 = vmul.f32 %v1994, %v1482
        %v2251 = vmul.f32 %v1995, %v1483
        %v2252 = vmul.f32 %v1996, %v1484
        %v2253 = vmul.f32 %v1997, %v1485
        %v2254 = vmul.f32 %v1998, %v1486
        %v2255 = vmul.f32 %v1999, %v1487
        %v2256 = vmul.f32 %v2000, %v1488
        %v2257 = vmul.f32 %v2001, %v1489
        %v2258 = vmul.f32 %v2002, %v1490
        %v2259 = vmul.f32 %v2003, %v1491
        %v2260 = vmul.f32 %v2004, %v1492
        %v2261 = vmul.f32 %v2005, %v1493
        %v2262 = vmul.f32 %v2006, %v1494
        %v2263 = vmul.f32 %v2007, %v1495
        %v2264 = vmul.f32 %v2008, %v1496
        %v2265 = vmul.f32 %v2009, %v1497
        %v2266 = vmul.f32 %v2010, %v1498
        %v2267 = vmul.f32 %v2011, %v1499
        %v2268 = vmul.f32 %v2012, %v1500
        %v2269 = vmul.f32 %v2013, %v1501
        %v2270 = vmul.f32 %v2014, %v1502
        %v2271 = vmul.f32 %v2015, %v1503
        %v2272 = vmul.f32 %v2016, %v1504
        %v2273 = vmul.f32 %v2017, %v1505
        %v2274 = vmul.f32 %v2018, %v1506
        %v2275 = vmul.f32 %v2019, %v1507
        %v2276 = vmul.f32 %v2020, %v1508
        %v2277 = vmul.f32 %v2021, %v1509
        %v2278 = vmul.f32 %v2022, %v1510
        %v2279 = vmul.f32 %v2023, %v1511
        %v2280 = vmul.f32 %v2024, %v1512
        %v2281 = vmul.f32 %v2025, %v1513
        %v2282 = vmul.f32 %v2026, %v1514
        %v2283 = vmul.f32 %v2027, %v1515
        %v2284 = vmul.f32 %v2028, %v1516
        %v2285 = vmul.f32 %v2029, %v1517
        %v2286 = vmul.f32 %v2030, %v1518
        %v2287 = vmul.f32 %v2031, %v1519
        %v2288 = vmul.f32 %v2032, %v1520
        %v2289 = vmul.f32 %v2033, %v1521
        %v2290 = vmul.f32 %v2034, %v1522
        %v2291 = vmul.f32 %v2035, %v1523
        %v2292 = vmul.f32 %v2036, %v1524
        %v2293 = vmul.f32 %v2037, %v1525
        %v2294 = vmul.f32 %v2038, %v1526
        %v2295 = vmul.f32 %v2039, %v1527
        %v2296 = vmul.f32 %v2040, %v1528
        %v2297 = vmul.f32 %v2041, %v1529
        %v2298 = vmul.f32 %v2042, %v1530
        %v2299 = vmul.f32 %v2043, %v1531
        %v2300 = vmul.f32 %v2044, %v1532
        %v2301 = vmul.f32 %v2045, %v1533
        %v2302 = vmul.f32 %v2046, %v1534
        %v2303 = vmul.f32 %v2047, %v1535
        %v2304 = vmul.f32 %v2048, %v1536
        %v2305 = vmul.f32 %v2049, %v1537
        %v2306 = vmul.f32 %v2050, %v1538
        %v2307 = vmul.f32 %v2051, %v1539
        %v2308 = vmul.f32 %v2052, %v1540
        %v2309 = vmul.f32 %v2053, %v1541
        %v2310 = vmul.f32 %v2054, %v1542
        %v2311 = vmul.f32 %v2055, %v1543
        %v2312 = vmul.f32 %v2056, %v1544
        %v2313 = vmul.f32 %v2057, %v1545
        %v2314 = vmul.f32 %v2058, %v1546
        %v2315 = vadd.f32 %v1547, %v2059
        %v2316 = vadd.f32 %v1548, %v2060
        %v2317 = vadd.f32 %v1549, %v2061
        %v2318 = vadd.f32 %v1550, %v2062
        %v2319 = vadd.f32 %v1551, %v2063
        %v2320 = vadd.f32 %v1552, %v2064
        %v2321 = vadd.f32 %v1553, %v2065
        %v2322 = vadd.f32 %v1554, %v2066
        %v2323 = vadd.f32 %v1555, %v2067
        %v2324 = vadd.f32 %v1556, %v2068
        %v2325 = vadd.f32 %v1557, %v2069
        %v2326 = vadd.f32 %v1558, %v2070
        %v2327 = vadd.f32 %v1559, %v2071
        %v2328 = vadd.f32 %v1560, %v2072
        %v2329 = vadd.f32 %v1561, %v2073
        %v2330 = vadd.f32 %v1562, %v2074
        %v2331 = vadd.f32 %v1563, %v2075
        %v2332 = vadd.f32 %v1564, %v2076
        %v2333 = vadd.f32 %v1565, %v2077
        %v2334 = vadd.f32 %v1566, %v2078
        %v2335 = vadd.f32 %v1567, %v2079
        %v2336 = vadd.f32 %v1568, %v2080
        %v2337 = vadd.f32 %v1569, %v2081
        %v2338 = vadd.f32 %v1570, %v2082
        %v2339 = vadd.f32 %v1571, %v2083
        %v2340 = vadd.f32 %v1572, %v2084
        %v2341 = vadd.f32 %v1573, %v2085
        %v2342 = vadd.f32 %v1574, %v2086
        %v2343 = vadd.f32 %v1575, %v2087
        %v2344 = vadd.f32 %v1576, %v2088
        %v2345 = vadd.f32 %v1577, %v2089
        %v2346 = vadd.f32 %v1578, %v2090
        %v2347 = vadd.f32 %v1579, %v2091
        %v2348 = vadd.f32 %v1580, %v2092
        %v2349 = vadd.f32 %v1581, %v2093
        %v2350 = vadd.f32 %v1582, %v2094
        %v2351 = vadd.f32 %v1583, %v2095
        %v2352 = vadd.f32 %v1584, %v2096
        %v2353 = vadd.f32 %v1585, %v2097
        %v2354 = vadd.f32 %v1586, %v2098
        %v2355 = vadd.f32 %v1587, %v2099
        %v2356 = vadd.f32 %v1588, %v2100
        %v2357 = vadd.f32 %v1589, %v2101
        %v2358 = vadd.f32 %v1590, %v2102
        %v2359 = vadd.f32 %v1591, %v2103
        %v2360 = vadd.f32 %v1592, %v2104
        %v2361 = vadd.f32 %v1593, %v2105
        %v2362 = vadd.f32 %v1594, %v2106
        %v2363 = vadd.f32 %v1595, %v2107
        %v2364 = vadd.f32 %v1596, %v2108
        %v2365 = vadd.f32 %v1597, %v2109
        %v2366 = vadd.f32 %v1598, %v2110
        %v2367 = vadd.f32 %v1599, %v2111
        %v2368 = vadd.f32 %v1600, %v2112
        %v2369 = vadd.f32 %v1601, %v2113
        %v2370 = vadd.f32 %v1602, %v2114
        %v2371 = vadd.f32 %v1603, %v2115
        %v2372 = vadd.f32 %v1604, %v2116
        %v2373 = vadd.f32 %v1605, %v2117
        %v2374 = vadd.f32 %v1606, %v2118
        %v2375 = vadd.f32 %v1607, %v2119
        %v2376 = vadd.f32 %v1608, %v2120
        %v2377 = vadd.f32 %v1609, %v2121
        %v2378 = vadd.f32 %v1610, %v2122
        %v2379 = vadd.f32 %v1611, %v2123
        %v2380 = vadd.f32 %v1612, %v2124
        %v2381 = vadd.f32 %v1613, %v2125
        %v2382 = vadd.f32 %v1614, %v2126
        %v2383 = vadd.f32 %v1615, %v2127
        %v2384 = vadd.f32 %v1616, %v2128
        %v2385 = vadd.f32 %v1617, %v2129
        %v2386 = vadd.f32 %v1618, %v2130
        %v2387 = vadd.f32 %v1619, %v2131
        %v2388 = vadd.f32 %v1620, %v2132
        %v2389 = vadd.f32 %v1621, %v2133
        %v2390 = vadd.f32 %v1622, %v2134
        %v2391 = vadd.f32 %v1623, %v2135
        %v2392 = vadd.f32 %v1624, %v2136
        %v2393 = vadd.f32 %v1625, %v2137
        %v2394 = vadd.f32 %v1626, %v2138
        %v2395 = vadd.f32 %v1627, %v2139
        %v2396 = vadd.f32 %v1628, %v2140
        %v2397 = vadd.f32 %v1629, %v2141
        %v2398 = vadd.f32 %v1630, %v2142
        %v2399 = vadd.f32 %v1631, %v2143
        %v2400 = vadd.f32 %v1632, %v2144
        %v2401 = vadd.f32 %v1633, %v2145
        %v2402 = vadd.f32 %v1634, %v2146
        %v2403 = vadd.f32 %v1635, %v2147
        %v2404 = vadd.f32 %v1636, %v2148
        %v2405 = vadd.f32 %v1637, %v2149
        %v2406 = vadd.f32 %v1638, %v2150
        %v2407 = vadd.f32 %v1639, %v2151
        %v2408 = vadd.f32 %v1640, %v2152
        %v2409 = vadd.f32 %v1641, %v2153
        %v2410 = vadd.f32 %v1642, %v2154
        %v2411 = vadd.f32 %v1643, %v2155
        %v2412 = vadd.f32 %v1644, %v2156
        %v2413 = vadd.f32 %v1645, %v2157
        %v2414 = vadd.f32 %v1646, %v2158
        %v2415 = vadd.f32 %v1647, %v2159
        %v2416 = vadd.f32 %v1648, %v2160
        %v2417 = vadd.f32 %v1649, %v2161
        %v2418 = vadd.f32 %v1650, %v2162
        %v2419 = vadd.f32 %v1651, %v2163
        %v2420 = vadd.f32 %v1652, %v2164
        %v2421 = vadd.f32 %v1653, %v2165
        %v2422 = vadd.f32 %v1654, %v2166
        %v2423 = vadd.f32 %v1655, %v2167
        %v2424 = vadd.f32 %v1656, %v2168
        %v2425 = vadd.f32 %v1657, %v2169
        %v2426 = vadd.f32 %v1658, %v2170
        %v2427 = vadd.f32 %v1659, %v2171
        %v2428 = vadd.f32 %v1660, %v2172
        %v2429 = vadd.f32 %v1661, %v2173
        %v2430 = vadd.f32 %v1662, %v2174
        %v2431 = vadd.f32 %v1663, %v2175
        %v2432 = vadd.f32 %v1664, %v2176
        %v2433 = vadd.f32 %v1665, %v2177
        %v2434 = vadd.f32 %v1666, %v2178
        %v2435 = vadd.f32 %v1667, %v2179
        %v2436 = vadd.f32 %v1668, %v2180
        %v2437 = vadd.f32 %v1669, %v2181
        %v2438 = vadd.f32 %v1670, %v2182
        %v2439 = vadd.f32 %v1671, %v2183
        %v2440 = vadd.f32 %v1672, %v2184
        %v2441 = vadd.f32 %v1673, %v2185
        %v2442 = vadd.f32 %v1674, %v2186
        %v2443 = vadd.f32 %v1675, %v2187
        %v2444 = vadd.f32 %v1676, %v2188
        %v2445 = vadd.f32 %v1677, %v2189
        %v2446 = vadd.f32 %v1678, %v2190
        %v2447 = vadd.f32 %v1679, %v2191
        %v2448 = vadd.f32 %v1680, %v2192
        %v2449 = vadd.f32 %v1681, %v2193
        %v2450 = vadd.f32 %v1682, %v2194
        %v2451 = vadd.f32 %v1683, %v2195
        %v2452 = vadd.f32 %v1684, %v2196
        %v2453 = vadd.f32 %v1685, %v2197
        %v2454 = vadd.f32 %v1686, %v2198
        %v2455 = vadd.f32 %v1687, %v2199
        %v2456 = vadd.f32 %v1688, %v2200
        %v2457 = vadd.f32 %v1689, %v2201
        %v2458 = vadd.f32 %v1690, %v2202
        %v2459 = vadd.f32 %v1691, %v2203
        %v2460 = vadd.f32 %v1692, %v2204
        %v2461 = vadd.f32 %v1693, %v2205
        %v2462 = vadd.f32 %v1694, %v2206
        %v2463 = vadd.f32 %v1695, %v2207
        %v2464 = vadd.f32 %v1696, %v2208
        %v2465 = vadd.f32 %v1697, %v2209
        %v2466 = vadd.f32 %v1698, %v2210
        %v2467 = vadd.f32 %v1699, %v2211
        %v2468 = vadd.f32 %v1700, %v2212
        %v2469 = vadd.f32 %v1701, %v2213
        %v2470 = vadd.f32 %v1702, %v2214
        %v2471 = vadd.f32 %v1703, %v2215
        %v2472 = vadd.f32 %v1704, %v2216
        %v2473 = vadd.f32 %v1705, %v2217
        %v2474 = vadd.f32 %v1706, %v2218
        %v2475 = vadd.f32 %v1707, %v2219
        %v2476 = vadd.f32 %v1708, %v2220
        %v2477 = vadd.f32 %v1709, %v2221
        %v2478 = vadd.f32 %v1710, %v2222
        %v2479 = vadd.f32 %v1711, %v2223
        %v2480 = vadd.f32 %v1712, %v2224
        %v2481 = vadd.f32 %v1713, %v2225
        %v2482 = vadd.f32 %v1714, %v2226
        %v2483 = vadd.f32 %v1715, %v2227
        %v2484 = vadd.f32 %v1716, %v2228
        %v2485 = vadd.f32 %v1717, %v2229
        %v2486 = vadd.f32 %v1718, %v2230
        %v2487 = vadd.f32 %v1719, %v2231
        %v2488 = vadd.f32 %v1720, %v2232
        %v2489 = vadd.f32 %v1721, %v2233
        %v2490 = vadd.f32 %v1722, %v2234
        %v2491 = vadd.f32 %v1723, %v2235
        %v2492 = vadd.f32 %v1724, %v2236
        %v2493 = vadd.f32 %v1725, %v2237
        %v2494 = vadd.f32 %v1726, %v2238
        %v2495 = vadd.f32 %v1727, %v2239
        %v2496 = vadd.f32 %v1728, %v2240
        %v2497 = vadd.f32 %v1729, %v2241
        %v2498 = vadd.f32 %v1730, %v2242
        %v2499 = vadd.f32 %v1731, %v2243
        %v2500 = vadd.f32 %v1732, %v2244
        %v2501 = vadd.f32 %v1733, %v2245
        %v2502 = vadd.f32 %v1734, %v2246
        %v2503 = vadd.f32 %v1735, %v2247
        %v2504 = vadd.f32 %v1736, %v2248
        %v2505 = vadd.f32 %v1737, %v2249
        %v2506 = vadd.f32 %v1738, %v2250
        %v2507 = vadd.f32 %v1739, %v2251
        %v2508 = vadd.f32 %v1740, %v2252
        %v2509 = vadd.f32 %v1741, %v2253
        %v2510 = vadd.f32 %v1742, %v2254
        %v2511 = vadd.f32 %v1743, %v2255
        %v2512 = vadd.f32 %v1744, %v2256
        %v2513 = vadd.f32 %v1745, %v2257
        %v2514 = vadd.f32 %v1746, %v2258
        %v2515 = vadd.f32 %v1747, %v2259
        %v2516 = vadd.f32 %v1748, %v2260
        %v2517 = vadd.f32 %v1749, %v2261
        %v2518 = vadd.f32 %v1750, %v2262
        %v2519 = vadd.f32 %v1751, %v2263
        %v2520 = vadd.f32 %v1752, %v2264
        %v2521 = vadd.f32 %v1753, %v2265
        %v2522 = vadd.f32 %v1754, %v2266
        %v2523 = vadd.f32 %v1755, %v2267
        %v2524 = vadd.f32 %v1756, %v2268
        %v2525 = vadd.f32 %v1757, %v2269
        %v2526 = vadd.f32 %v1758, %v2270
        %v2527 = vadd.f32 %v1759, %v2271
        %v2528 = vadd.f32 %v1760, %v2272
        %v2529 = vadd.f32 %v1761, %v2273
        %v2530 = vadd.f32 %v1762, %v2274
        %v2531 = vadd.f32 %v1763, %v2275
        %v2532 = vadd.f32 %v1764, %v2276
        %v2533 = vadd.f32 %v1765, %v2277
        %v2534 = vadd.f32 %v1766, %v2278
        %v2535 = vadd.f32 %v1767, %v2279
        %v2536 = vadd.f32 %v1768, %v2280
        %v2537 = vadd.f32 %v1769, %v2281
        %v2538 = vadd.f32 %v1770, %v2282
        %v2539 = vadd.f32 %v1771, %v2283
        %v2540 = vadd.f32 %v1772, %v2284
        %v2541 = vadd.f32 %v1773, %v2285
        %v2542 = vadd.f32 %v1774, %v2286
        %v2543 = vadd.f32 %v1775, %v2287
        %v2544 = vadd.f32 %v1776, %v2288
        %v2545 = vadd.f32 %v1777, %v2289
        %v2546 = vadd.f32 %v1778, %v2290
        %v2547 = vadd.f32 %v1779, %v2291
        %v2548 = vadd.f32 %v1780, %v2292
        %v2549 = vadd.f32 %v1781, %v2293
        %v2550 = vadd.f32 %v1782, %v2294
        %v2551 = vadd.f32 %v1783, %v2295
        %v2552 = vadd.f32 %v1784, %v2296
        %v2553 = vadd.f32 %v1785, %v2297
        %v2554 = vadd.f32 %v1786, %v2298
        %v2555 = vadd.f32 %v1787, %v2299
        %v2556 = vadd.f32 %v1788, %v2300
        %v2557 = vadd.f32 %v1789, %v2301
        %v2558 = vadd.f32 %v1790, %v2302
        %v2559 = vadd.f32 %v1791, %v2303
        %v2560 = vadd.f32 %v1792, %v2304
        %v2561 = vadd.f32 %v1793, %v2305
        %v2562 = vadd.f32 %v1794, %v2306
        %v2563 = vadd.f32 %v1795, %v2307
        %v2564 = vadd.f32 %v1796, %v2308
        %v2565 = vadd.f32 %v1797, %v2309
        %v2566 = vadd.f32 %v1798, %v2310
        %v2567 = vadd.f32 %v1799, %v2311
        %v2568 = vadd.f32 %v1800, %v2312
        %v2569 = vadd.f32 %v1801, %v2313
        %v2570 = vadd.f32 %v1802, %v2314
        %2571 = vst [vmem:[#allocation2] sm:$0xff] %v2315
        %2572 = vst [vmem:[#allocation2 + $0x8] sm:$0xff] %v2316
        %2573 = vst [vmem:[#allocation2 + $0x10] sm:$0xff] %v2317
        %2574 = vst [vmem:[#allocation2 + $0x18] sm:$0xff] %v2318
        %2575 = vst [vmem:[#allocation2 + $0x20] sm:$0xff] %v2319
        %2576 = vst [vmem:[#allocation2 + $0x28] sm:$0xff] %v2320
        %2577 = vst [vmem:[#allocation2 + $0x30] sm:$0xff] %v2321
        %2578 = vst [vmem:[#allocation2 + $0x38] sm:$0xff] %v2322
        %2579 = vst [vmem:[#allocation2 + $0x40] sm:$0xff] %v2323
        %2580 = vst [vmem:[#allocation2 + $0x48] sm:$0xff] %v2324
        %2581 = vst [vmem:[#allocation2 + $0x50] sm:$0xff] %v2325
        %2582 = vst [vmem:[#allocation2 + $0x58] sm:$0xff] %v2326
        %2583 = vst [vmem:[#allocation2 + $0x60] sm:$0xff] %v2327
        %2584 = vst [vmem:[#allocation2 + $0x68] sm:$0xff] %v2328
        %2585 = vst [vmem:[#allocation2 + $0x70] sm:$0xff] %v2329
        %2586 = vst [vmem:[#allocation2 + $0x78] sm:$0xff] %v2330
        %2587 = vst [vmem:[#allocation2 + $0x80] sm:$0xff] %v2331
        %2588 = vst [vmem:[#allocation2 + $0x88] sm:$0xff] %v2332
        %2589 = vst [vmem:[#allocation2 + $0x90] sm:$0xff] %v2333
        %2590 = vst [vmem:[#allocation2 + $0x98] sm:$0xff] %v2334
        %2591 = vst [vmem:[#allocation2 + $0xa0] sm:$0xff] %v2335
        %2592 = vst [vmem:[#allocation2 + $0xa8] sm:$0xff] %v2336
        %2593 = vst [vmem:[#allocation2 + $0xb0] sm:$0xff] %v2337
        %2594 = vst [vmem:[#allocation2 + $0xb8] sm:$0xff] %v2338
        %2595 = vst [vmem:[#allocation2 + $0xc0] sm:$0xff] %v2339
        %2596 = vst [vmem:[#allocation2 + $0xc8] sm:$0xff] %v2340
        %2597 = vst [vmem:[#allocation2 + $0xd0] sm:$0xff] %v2341
        %2598 = vst [vmem:[#allocation2 + $0xd8] sm:$0xff] %v2342
        %2599 = vst [vmem:[#allocation2 + $0xe0] sm:$0xff] %v2343
        %2600 = vst [vmem:[#allocation2 + $0xe8] sm:$0xff] %v2344
        %2601 = vst [vmem:[#allocation2 + $0xf0] sm:$0xff] %v2345
        %2602 = vst [vmem:[#allocation2 + $0xf8] sm:$0xff] %v2346
        %2603 = vst [vmem:[#allocation2 + $0x100] sm:$0xff] %v2347
        %2604 = vst [vmem:[#allocation2 + $0x108] sm:$0xff] %v2348
        %2605 = vst [vmem:[#allocation2 + $0x110] sm:$0xff] %v2349
        %2606 = vst [vmem:[#allocation2 + $0x118] sm:$0xff] %v2350
        %2607 = vst [vmem:[#allocation2 + $0x120] sm:$0xff] %v2351
        %2608 = vst [vmem:[#allocation2 + $0x128] sm:$0xff] %v2352
        %2609 = vst [vmem:[#allocation2 + $0x130] sm:$0xff] %v2353
        %2610 = vst [vmem:[#allocation2 + $0x138] sm:$0xff] %v2354
        %2611 = vst [vmem:[#allocation2 + $0x140] sm:$0xff] %v2355
        %2612 = vst [vmem:[#allocation2 + $0x148] sm:$0xff] %v2356
        %2613 = vst [vmem:[#allocation2 + $0x150] sm:$0xff] %v2357
        %2614 = vst [vmem:[#allocation2 + $0x158] sm:$0xff] %v2358
        %2615 = vst [vmem:[#allocation2 + $0x160] sm:$0xff] %v2359
        %2616 = vst [vmem:[#allocation2 + $0x168] sm:$0xff] %v2360
        %2617 = vst [vmem:[#allocation2 + $0x170] sm:$0xff] %v2361
        %2618 = vst [vmem:[#allocation2 + $0x178] sm:$0xff] %v2362
        %2619 = vst [vmem:[#allocation2 + $0x180] sm:$0xff] %v2363
        %2620 = vst [vmem:[#allocation2 + $0x188] sm:$0xff] %v2364
        %2621 = vst [vmem:[#allocation2 + $0x190] sm:$0xff] %v2365
        %2622 = vst [vmem:[#allocation2 + $0x198] sm:$0xff] %v2366
        %2623 = vst [vmem:[#allocation2 + $0x1a0] sm:$0xff] %v2367
        %2624 = vst [vmem:[#allocation2 + $0x1a8] sm:$0xff] %v2368
        %2625 = vst [vmem:[#allocation2 + $0x1b0] sm:$0xff] %v2369
        %2626 = vst [vmem:[#allocation2 + $0x1b8] sm:$0xff] %v2370
        %2627 = vst [vmem:[#allocation2 + $0x1c0] sm:$0xff] %v2371
        %2628 = vst [vmem:[#allocation2 + $0x1c8] sm:$0xff] %v2372
        %2629 = vst [vmem:[#allocation2 + $0x1d0] sm:$0xff] %v2373
        %2630 = vst [vmem:[#allocation2 + $0x1d8] sm:$0xff] %v2374
        %2631 = vst [vmem:[#allocation2 + $0x1e0] sm:$0xff] %v2375
        %2632 = vst [vmem:[#allocation2 + $0x1e8] sm:$0xff] %v2376
        %2633 = vst [vmem:[#allocation2 + $0x1f0] sm:$0xff] %v2377
        %2634 = vst [vmem:[#allocation2 + $0x1f8] sm:$0xff] %v2378
        %2635 = vst [vmem:[#allocation2 + $0x200] sm:$0xff] %v2379
        %2636 = vst [vmem:[#allocation2 + $0x208] sm:$0xff] %v2380
        %2637 = vst [vmem:[#allocation2 + $0x210] sm:$0xff] %v2381
        %2638 = vst [vmem:[#allocation2 + $0x218] sm:$0xff] %v2382
        %2639 = vst [vmem:[#allocation2 + $0x220] sm:$0xff] %v2383
        %2640 = vst [vmem:[#allocation2 + $0x228] sm:$0xff] %v2384
        %2641 = vst [vmem:[#allocation2 + $0x230] sm:$0xff] %v2385
        %2642 = vst [vmem:[#allocation2 + $0x238] sm:$0xff] %v2386
        %2643 = vst [vmem:[#allocation2 + $0x240] sm:$0xff] %v2387
        %2644 = vst [vmem:[#allocation2 + $0x248] sm:$0xff] %v2388
        %2645 = vst [vmem:[#allocation2 + $0x250] sm:$0xff] %v2389
        %2646 = vst [vmem:[#allocation2 + $0x258] sm:$0xff] %v2390
        %2647 = vst [vmem:[#allocation2 + $0x260] sm:$0xff] %v2391
        %2648 = vst [vmem:[#allocation2 + $0x268] sm:$0xff] %v2392
        %2649 = vst [vmem:[#allocation2 + $0x270] sm:$0xff] %v2393
        %2650 = vst [vmem:[#allocation2 + $0x278] sm:$0xff] %v2394
        %2651 = vst [vmem:[#allocation2 + $0x280] sm:$0xff] %v2395
        %2652 = vst [vmem:[#allocation2 + $0x288] sm:$0xff] %v2396
        %2653 = vst [vmem:[#allocation2 + $0x290] sm:$0xff] %v2397
        %2654 = vst [vmem:[#allocation2 + $0x298] sm:$0xff] %v2398
        %2655 = vst [vmem:[#allocation2 + $0x2a0] sm:$0xff] %v2399
        %2656 = vst [vmem:[#allocation2 + $0x2a8] sm:$0xff] %v2400
        %2657 = vst [vmem:[#allocation2 + $0x2b0] sm:$0xff] %v2401
        %2658 = vst [vmem:[#allocation2 + $0x2b8] sm:$0xff] %v2402
        %2659 = vst [vmem:[#allocation2 + $0x2c0] sm:$0xff] %v2403
        %2660 = vst [vmem:[#allocation2 + $0x2c8] sm:$0xff] %v2404
        %2661 = vst [vmem:[#allocation2 + $0x2d0] sm:$0xff] %v2405
        %2662 = vst [vmem:[#allocation2 + $0x2d8] sm:$0xff] %v2406
        %2663 = vst [vmem:[#allocation2 + $0x2e0] sm:$0xff] %v2407
        %2664 = vst [vmem:[#allocation2 + $0x2e8] sm:$0xff] %v2408
        %2665 = vst [vmem:[#allocation2 + $0x2f0] sm:$0xff] %v2409
        %2666 = vst [vmem:[#allocation2 + $0x2f8] sm:$0xff] %v2410
        %2667 = vst [vmem:[#allocation2 + $0x300] sm:$0xff] %v2411
        %2668 = vst [vmem:[#allocation2 + $0x308] sm:$0xff] %v2412
        %2669 = vst [vmem:[#allocation2 + $0x310] sm:$0xff] %v2413
        %2670 = vst [vmem:[#allocation2 + $0x318] sm:$0xff] %v2414
        %2671 = vst [vmem:[#allocation2 + $0x320] sm:$0xff] %v2415
        %2672 = vst [vmem:[#allocation2 + $0x328] sm:$0xff] %v2416
        %2673 = vst [vmem:[#allocation2 + $0x330] sm:$0xff] %v2417
        %2674 = vst [vmem:[#allocation2 + $0x338] sm:$0xff] %v2418
        %2675 = vst [vmem:[#allocation2 + $0x340] sm:$0xff] %v2419
        %2676 = vst [vmem:[#allocation2 + $0x348] sm:$0xff] %v2420
        %2677 = vst [vmem:[#allocation2 + $0x350] sm:$0xff] %v2421
        %2678 = vst [vmem:[#allocation2 + $0x358] sm:$0xff] %v2422
        %2679 = vst [vmem:[#allocation2 + $0x360] sm:$0xff] %v2423
        %2680 = vst [vmem:[#allocation2 + $0x368] sm:$0xff] %v2424
        %2681 = vst [vmem:[#allocation2 + $0x370] sm:$0xff] %v2425
        %2682 = vst [vmem:[#allocation2 + $0x378] sm:$0xff] %v2426
        %2683 = vst [vmem:[#allocation2 + $0x380] sm:$0xff] %v2427
        %2684 = vst [vmem:[#allocation2 + $0x388] sm:$0xff] %v2428
        %2685 = vst [vmem:[#allocation2 + $0x390] sm:$0xff] %v2429
        %2686 = vst [vmem:[#allocation2 + $0x398] sm:$0xff] %v2430
        %2687 = vst [vmem:[#allocation2 + $0x3a0] sm:$0xff] %v2431
        %2688 = vst [vmem:[#allocation2 + $0x3a8] sm:$0xff] %v2432
        %2689 = vst [vmem:[#allocation2 + $0x3b0] sm:$0xff] %v2433
        %2690 = vst [vmem:[#allocation2 + $0x3b8] sm:$0xff] %v2434
        %2691 = vst [vmem:[#allocation2 + $0x3c0] sm:$0xff] %v2435
        %2692 = vst [vmem:[#allocation2 + $0x3c8] sm:$0xff] %v2436
        %2693 = vst [vmem:[#allocation2 + $0x3d0] sm:$0xff] %v2437
        %2694 = vst [vmem:[#allocation2 + $0x3d8] sm:$0xff] %v2438
        %2695 = vst [vmem:[#allocation2 + $0x3e0] sm:$0xff] %v2439
        %2696 = vst [vmem:[#allocation2 + $0x3e8] sm:$0xff] %v2440
        %2697 = vst [vmem:[#allocation2 + $0x3f0] sm:$0xff] %v2441
        %2698 = vst [vmem:[#allocation2 + $0x3f8] sm:$0xff] %v2442
        %2699 = vst [vmem:[#allocation2 + $0x400] sm:$0xff] %v2443
        %2700 = vst [vmem:[#allocation2 + $0x408] sm:$0xff] %v2444
        %2701 = vst [vmem:[#allocation2 + $0x410] sm:$0xff] %v2445
        %2702 = vst [vmem:[#allocation2 + $0x418] sm:$0xff] %v2446
        %2703 = vst [vmem:[#allocation2 + $0x420] sm:$0xff] %v2447
        %2704 = vst [vmem:[#allocation2 + $0x428] sm:$0xff] %v2448
        %2705 = vst [vmem:[#allocation2 + $0x430] sm:$0xff] %v2449
        %2706 = vst [vmem:[#allocation2 + $0x438] sm:$0xff] %v2450
        %2707 = vst [vmem:[#allocation2 + $0x440] sm:$0xff] %v2451
        %2708 = vst [vmem:[#allocation2 + $0x448] sm:$0xff] %v2452
        %2709 = vst [vmem:[#allocation2 + $0x450] sm:$0xff] %v2453
        %2710 = vst [vmem:[#allocation2 + $0x458] sm:$0xff] %v2454
        %2711 = vst [vmem:[#allocation2 + $0x460] sm:$0xff] %v2455
        %2712 = vst [vmem:[#allocation2 + $0x468] sm:$0xff] %v2456
        %2713 = vst [vmem:[#allocation2 + $0x470] sm:$0xff] %v2457
        %2714 = vst [vmem:[#allocation2 + $0x478] sm:$0xff] %v2458
        %2715 = vst [vmem:[#allocation2 + $0x480] sm:$0xff] %v2459
        %2716 = vst [vmem:[#allocation2 + $0x488] sm:$0xff] %v2460
        %2717 = vst [vmem:[#allocation2 + $0x490] sm:$0xff] %v2461
        %2718 = vst [vmem:[#allocation2 + $0x498] sm:$0xff] %v2462
        %2719 = vst [vmem:[#allocation2 + $0x4a0] sm:$0xff] %v2463
        %2720 = vst [vmem:[#allocation2 + $0x4a8] sm:$0xff] %v2464
        %2721 = vst [vmem:[#allocation2 + $0x4b0] sm:$0xff] %v2465
        %2722 = vst [vmem:[#allocation2 + $0x4b8] sm:$0xff] %v2466
        %2723 = vst [vmem:[#allocation2 + $0x4c0] sm:$0xff] %v2467
        %2724 = vst [vmem:[#allocation2 + $0x4c8] sm:$0xff] %v2468
        %2725 = vst [vmem:[#allocation2 + $0x4d0] sm:$0xff] %v2469
        %2726 = vst [vmem:[#allocation2 + $0x4d8] sm:$0xff] %v2470
        %2727 = vst [vmem:[#allocation2 + $0x4e0] sm:$0xff] %v2471
        %2728 = vst [vmem:[#allocation2 + $0x4e8] sm:$0xff] %v2472
        %2729 = vst [vmem:[#allocation2 + $0x4f0] sm:$0xff] %v2473
        %2730 = vst [vmem:[#allocation2 + $0x4f8] sm:$0xff] %v2474
        %2731 = vst [vmem:[#allocation2 + $0x500] sm:$0xff] %v2475
        %2732 = vst [vmem:[#allocation2 + $0x508] sm:$0xff] %v2476
        %2733 = vst [vmem:[#allocation2 + $0x510] sm:$0xff] %v2477
        %2734 = vst [vmem:[#allocation2 + $0x518] sm:$0xff] %v2478
        %2735 = vst [vmem:[#allocation2 + $0x520] sm:$0xff] %v2479
        %2736 = vst [vmem:[#allocation2 + $0x528] sm:$0xff] %v2480
        %2737 = vst [vmem:[#allocation2 + $0x530] sm:$0xff] %v2481
        %2738 = vst [vmem:[#allocation2 + $0x538] sm:$0xff] %v2482
        %2739 = vst [vmem:[#allocation2 + $0x540] sm:$0xff] %v2483
        %2740 = vst [vmem:[#allocation2 + $0x548] sm:$0xff] %v2484
        %2741 = vst [vmem:[#allocation2 + $0x550] sm:$0xff] %v2485
        %2742 = vst [vmem:[#allocation2 + $0x558] sm:$0xff] %v2486
        %2743 = vst [vmem:[#allocation2 + $0x560] sm:$0xff] %v2487
        %2744 = vst [vmem:[#allocation2 + $0x568] sm:$0xff] %v2488
        %2745 = vst [vmem:[#allocation2 + $0x570] sm:$0xff] %v2489
        %2746 = vst [vmem:[#allocation2 + $0x578] sm:$0xff] %v2490
        %2747 = vst [vmem:[#allocation2 + $0x580] sm:$0xff] %v2491
        %2748 = vst [vmem:[#allocation2 + $0x588] sm:$0xff] %v2492
        %2749 = vst [vmem:[#allocation2 + $0x590] sm:$0xff] %v2493
        %2750 = vst [vmem:[#allocation2 + $0x598] sm:$0xff] %v2494
        %2751 = vst [vmem:[#allocation2 + $0x5a0] sm:$0xff] %v2495
        %2752 = vst [vmem:[#allocation2 + $0x5a8] sm:$0xff] %v2496
        %2753 = vst [vmem:[#allocation2 + $0x5b0] sm:$0xff] %v2497
        %2754 = vst [vmem:[#allocation2 + $0x5b8] sm:$0xff] %v2498
        %2755 = vst [vmem:[#allocation2 + $0x5c0] sm:$0xff] %v2499
        %2756 = vst [vmem:[#allocation2 + $0x5c8] sm:$0xff] %v2500
        %2757 = vst [vmem:[#allocation2 + $0x5d0] sm:$0xff] %v2501
        %2758 = vst [vmem:[#allocation2 + $0x5d8] sm:$0xff] %v2502
        %2759 = vst [vmem:[#allocation2 + $0x5e0] sm:$0xff] %v2503
        %2760 = vst [vmem:[#allocation2 + $0x5e8] sm:$0xff] %v2504
        %2761 = vst [vmem:[#allocation2 + $0x5f0] sm:$0xff] %v2505
        %2762 = vst [vmem:[#allocation2 + $0x5f8] sm:$0xff] %v2506
        %2763 = vst [vmem:[#allocation2 + $0x600] sm:$0xff] %v2507
        %2764 = vst [vmem:[#allocation2 + $0x608] sm:$0xff] %v2508
        %2765 = vst [vmem:[#allocation2 + $0x610] sm:$0xff] %v2509
        %2766 = vst [vmem:[#allocation2 + $0x618] sm:$0xff] %v2510
        %2767 = vst [vmem:[#allocation2 + $0x620] sm:$0xff] %v2511
        %2768 = vst [vmem:[#allocation2 + $0x628] sm:$0xff] %v2512
        %2769 = vst [vmem:[#allocation2 + $0x630] sm:$0xff] %v2513
        %2770 = vst [vmem:[#allocation2 + $0x638] sm:$0xff] %v2514
        %2771 = vst [vmem:[#allocation2 + $0x640] sm:$0xff] %v2515
        %2772 = vst [vmem:[#allocation2 + $0x648] sm:$0xff] %v2516
        %2773 = vst [vmem:[#allocation2 + $0x650] sm:$0xff] %v2517
        %2774 = vst [vmem:[#allocation2 + $0x658] sm:$0xff] %v2518
        %2775 = vst [vmem:[#allocation2 + $0x660] sm:$0xff] %v2519
        %2776 = vst [vmem:[#allocation2 + $0x668] sm:$0xff] %v2520
        %2777 = vst [vmem:[#allocation2 + $0x670] sm:$0xff] %v2521
        %2778 = vst [vmem:[#allocation2 + $0x678] sm:$0xff] %v2522
        %2779 = vst [vmem:[#allocation2 + $0x680] sm:$0xff] %v2523
        %2780 = vst [vmem:[#allocation2 + $0x688] sm:$0xff] %v2524
        %2781 = vst [vmem:[#allocation2 + $0x690] sm:$0xff] %v2525
        %2782 = vst [vmem:[#allocation2 + $0x698] sm:$0xff] %v2526
        %2783 = vst [vmem:[#allocation2 + $0x6a0] sm:$0xff] %v2527
        %2784 = vst [vmem:[#allocation2 + $0x6a8] sm:$0xff] %v2528
        %2785 = vst [vmem:[#allocation2 + $0x6b0] sm:$0xff] %v2529
        %2786 = vst [vmem:[#allocation2 + $0x6b8] sm:$0xff] %v2530
        %2787 = vst [vmem:[#allocation2 + $0x6c0] sm:$0xff] %v2531
        %2788 = vst [vmem:[#allocation2 + $0x6c8] sm:$0xff] %v2532
        %2789 = vst [vmem:[#allocation2 + $0x6d0] sm:$0xff] %v2533
        %2790 = vst [vmem:[#allocation2 + $0x6d8] sm:$0xff] %v2534
        %2791 = vst [vmem:[#allocation2 + $0x6e0] sm:$0xff] %v2535
        %2792 = vst [vmem:[#allocation2 + $0x6e8] sm:$0xff] %v2536
        %2793 = vst [vmem:[#allocation2 + $0x6f0] sm:$0xff] %v2537
        %2794 = vst [vmem:[#allocation2 + $0x6f8] sm:$0xff] %v2538
        %2795 = vst [vmem:[#allocation2 + $0x700] sm:$0xff] %v2539
        %2796 = vst [vmem:[#allocation2 + $0x708] sm:$0xff] %v2540
        %2797 = vst [vmem:[#allocation2 + $0x710] sm:$0xff] %v2541
        %2798 = vst [vmem:[#allocation2 + $0x718] sm:$0xff] %v2542
        %2799 = vst [vmem:[#allocation2 + $0x720] sm:$0xff] %v2543
        %2800 = vst [vmem:[#allocation2 + $0x728] sm:$0xff] %v2544
        %2801 = vst [vmem:[#allocation2 + $0x730] sm:$0xff] %v2545
        %2802 = vst [vmem:[#allocation2 + $0x738] sm:$0xff] %v2546
        %2803 = vst [vmem:[#allocation2 + $0x740] sm:$0xff] %v2547
        %2804 = vst [vmem:[#allocation2 + $0x748] sm:$0xff] %v2548
        %2805 = vst [vmem:[#allocation2 + $0x750] sm:$0xff] %v2549
        %2806 = vst [vmem:[#allocation2 + $0x758] sm:$0xff] %v2550
        %2807 = vst [vmem:[#allocation2 + $0x760] sm:$0xff] %v2551
        %2808 = vst [vmem:[#allocation2 + $0x768] sm:$0xff] %v2552
        %2809 = vst [vmem:[#allocation2 + $0x770] sm:$0xff] %v2553
        %2810 = vst [vmem:[#allocation2 + $0x778] sm:$0xff] %v2554
        %2811 = vst [vmem:[#allocation2 + $0x780] sm:$0xff] %v2555
        %2812 = vst [vmem:[#allocation2 + $0x788] sm:$0xff] %v2556
        %2813 = vst [vmem:[#allocation2 + $0x790] sm:$0xff] %v2557
        %2814 = vst [vmem:[#allocation2 + $0x798] sm:$0xff] %v2558
        %2815 = vst [vmem:[#allocation2 + $0x7a0] sm:$0xff] %v2559
        %2816 = vst [vmem:[#allocation2 + $0x7a8] sm:$0xff] %v2560
        %2817 = vst [vmem:[#allocation2 + $0x7b0] sm:$0xff] %v2561
        %2818 = vst [vmem:[#allocation2 + $0x7b8] sm:$0xff] %v2562
        %2819 = vst [vmem:[#allocation2 + $0x7c0] sm:$0xff] %v2563
        %2820 = vst [vmem:[#allocation2 + $0x7c8] sm:$0xff] %v2564
        %2821 = vst [vmem:[#allocation2 + $0x7d0] sm:$0xff] %v2565
        %2822 = vst [vmem:[#allocation2 + $0x7d8] sm:$0xff] %v2566
        %2823 = vst [vmem:[#allocation2 + $0x7e0] sm:$0xff] %v2567
        %2824 = vst [vmem:[#allocation2 + $0x7e8] sm:$0xff] %v2568
        %2825 = vst [vmem:[#allocation2 + $0x7f0] sm:$0xff] %v2569
        %2826 = vst [vmem:[#allocation2 + $0x7f8] sm:$0xff] %v2570
        %p2827 = scmp.eq.s32.totalorder %s21, 2
        // Predicated region
        $region49: #{tpu_custom_call.1} parent=31 // pred_check
          %p2828 = pneg %p2827
        $region50: #{tpu_custom_call.1} parent=31 // pred_check_branch
          %2830 = sbr.rel (%p2828) target = $region52
        $region51: #{tpu_custom_call.1} parent=31 // pred_region
          %v2831 = vld [vmem:[#allocation2] sm:$0xff]
          %v2832 = vld [vmem:[#allocation2 + $0x8] sm:$0xff]
          %v2833 = vld [vmem:[#allocation2 + $0x10] sm:$0xff]
          %v2834 = vld [vmem:[#allocation2 + $0x18] sm:$0xff]
          %v2835 = vld [vmem:[#allocation2 + $0x20] sm:$0xff]
          %v2836 = vld [vmem:[#allocation2 + $0x28] sm:$0xff]
          %v2837 = vld [vmem:[#allocation2 + $0x30] sm:$0xff]
          %v2838 = vld [vmem:[#allocation2 + $0x38] sm:$0xff]
          %v2839 = vld [vmem:[#allocation2 + $0x40] sm:$0xff]
          %v2840 = vld [vmem:[#allocation2 + $0x48] sm:$0xff]
          %v2841 = vld [vmem:[#allocation2 + $0x50] sm:$0xff]
          %v2842 = vld [vmem:[#allocation2 + $0x58] sm:$0xff]
          %v2843 = vld [vmem:[#allocation2 + $0x60] sm:$0xff]
          %v2844 = vld [vmem:[#allocation2 + $0x68] sm:$0xff]
          %v2845 = vld [vmem:[#allocation2 + $0x70] sm:$0xff]
          %v2846 = vld [vmem:[#allocation2 + $0x78] sm:$0xff]
          %v2847 = vld [vmem:[#allocation2 + $0x80] sm:$0xff]
          %v2848 = vld [vmem:[#allocation2 + $0x88] sm:$0xff]
          %v2849 = vld [vmem:[#allocation2 + $0x90] sm:$0xff]
          %v2850 = vld [vmem:[#allocation2 + $0x98] sm:$0xff]
          %v2851 = vld [vmem:[#allocation2 + $0xa0] sm:$0xff]
          %v2852 = vld [vmem:[#allocation2 + $0xa8] sm:$0xff]
          %v2853 = vld [vmem:[#allocation2 + $0xb0] sm:$0xff]
          %v2854 = vld [vmem:[#allocation2 + $0xb8] sm:$0xff]
          %v2855 = vld [vmem:[#allocation2 + $0xc0] sm:$0xff]
          %v2856 = vld [vmem:[#allocation2 + $0xc8] sm:$0xff]
          %v2857 = vld [vmem:[#allocation2 + $0xd0] sm:$0xff]
          %v2858 = vld [vmem:[#allocation2 + $0xd8] sm:$0xff]
          %v2859 = vld [vmem:[#allocation2 + $0xe0] sm:$0xff]
          %v2860 = vld [vmem:[#allocation2 + $0xe8] sm:$0xff]
          %v2861 = vld [vmem:[#allocation2 + $0xf0] sm:$0xff]
          %v2862 = vld [vmem:[#allocation2 + $0xf8] sm:$0xff]
          %v2863 = vld [vmem:[#allocation2 + $0x100] sm:$0xff]
          %v2864 = vld [vmem:[#allocation2 + $0x108] sm:$0xff]
          %v2865 = vld [vmem:[#allocation2 + $0x110] sm:$0xff]
          %v2866 = vld [vmem:[#allocation2 + $0x118] sm:$0xff]
          %v2867 = vld [vmem:[#allocation2 + $0x120] sm:$0xff]
          %v2868 = vld [vmem:[#allocation2 + $0x128] sm:$0xff]
          %v2869 = vld [vmem:[#allocation2 + $0x130] sm:$0xff]
          %v2870 = vld [vmem:[#allocation2 + $0x138] sm:$0xff]
          %v2871 = vld [vmem:[#allocation2 + $0x140] sm:$0xff]
          %v2872 = vld [vmem:[#allocation2 + $0x148] sm:$0xff]
          %v2873 = vld [vmem:[#allocation2 + $0x150] sm:$0xff]
          %v2874 = vld [vmem:[#allocation2 + $0x158] sm:$0xff]
          %v2875 = vld [vmem:[#allocation2 + $0x160] sm:$0xff]
          %v2876 = vld [vmem:[#allocation2 + $0x168] sm:$0xff]
          %v2877 = vld [vmem:[#allocation2 + $0x170] sm:$0xff]
          %v2878 = vld [vmem:[#allocation2 + $0x178] sm:$0xff]
          %v2879 = vld [vmem:[#allocation2 + $0x180] sm:$0xff]
          %v2880 = vld [vmem:[#allocation2 + $0x188] sm:$0xff]
          %v2881 = vld [vmem:[#allocation2 + $0x190] sm:$0xff]
          %v2882 = vld [vmem:[#allocation2 + $0x198] sm:$0xff]
          %v2883 = vld [vmem:[#allocation2 + $0x1a0] sm:$0xff]
          %v2884 = vld [vmem:[#allocation2 + $0x1a8] sm:$0xff]
          %v2885 = vld [vmem:[#allocation2 + $0x1b0] sm:$0xff]
          %v2886 = vld [vmem:[#allocation2 + $0x1b8] sm:$0xff]
          %v2887 = vld [vmem:[#allocation2 + $0x1c0] sm:$0xff]
          %v2888 = vld [vmem:[#allocation2 + $0x1c8] sm:$0xff]
          %v2889 = vld [vmem:[#allocation2 + $0x1d0] sm:$0xff]
          %v2890 = vld [vmem:[#allocation2 + $0x1d8] sm:$0xff]
          %v2891 = vld [vmem:[#allocation2 + $0x1e0] sm:$0xff]
          %v2892 = vld [vmem:[#allocation2 + $0x1e8] sm:$0xff]
          %v2893 = vld [vmem:[#allocation2 + $0x1f0] sm:$0xff]
          %v2894 = vld [vmem:[#allocation2 + $0x1f8] sm:$0xff]
          %v2895 = vld [vmem:[#allocation2 + $0x200] sm:$0xff]
          %v2896 = vld [vmem:[#allocation2 + $0x208] sm:$0xff]
          %v2897 = vld [vmem:[#allocation2 + $0x210] sm:$0xff]
          %v2898 = vld [vmem:[#allocation2 + $0x218] sm:$0xff]
          %v2899 = vld [vmem:[#allocation2 + $0x220] sm:$0xff]
          %v2900 = vld [vmem:[#allocation2 + $0x228] sm:$0xff]
          %v2901 = vld [vmem:[#allocation2 + $0x230] sm:$0xff]
          %v2902 = vld [vmem:[#allocation2 + $0x238] sm:$0xff]
          %v2903 = vld [vmem:[#allocation2 + $0x240] sm:$0xff]
          %v2904 = vld [vmem:[#allocation2 + $0x248] sm:$0xff]
          %v2905 = vld [vmem:[#allocation2 + $0x250] sm:$0xff]
          %v2906 = vld [vmem:[#allocation2 + $0x258] sm:$0xff]
          %v2907 = vld [vmem:[#allocation2 + $0x260] sm:$0xff]
          %v2908 = vld [vmem:[#allocation2 + $0x268] sm:$0xff]
          %v2909 = vld [vmem:[#allocation2 + $0x270] sm:$0xff]
          %v2910 = vld [vmem:[#allocation2 + $0x278] sm:$0xff]
          %v2911 = vld [vmem:[#allocation2 + $0x280] sm:$0xff]
          %v2912 = vld [vmem:[#allocation2 + $0x288] sm:$0xff]
          %v2913 = vld [vmem:[#allocation2 + $0x290] sm:$0xff]
          %v2914 = vld [vmem:[#allocation2 + $0x298] sm:$0xff]
          %v2915 = vld [vmem:[#allocation2 + $0x2a0] sm:$0xff]
          %v2916 = vld [vmem:[#allocation2 + $0x2a8] sm:$0xff]
          %v2917 = vld [vmem:[#allocation2 + $0x2b0] sm:$0xff]
          %v2918 = vld [vmem:[#allocation2 + $0x2b8] sm:$0xff]
          %v2919 = vld [vmem:[#allocation2 + $0x2c0] sm:$0xff]
          %v2920 = vld [vmem:[#allocation2 + $0x2c8] sm:$0xff]
          %v2921 = vld [vmem:[#allocation2 + $0x2d0] sm:$0xff]
          %v2922 = vld [vmem:[#allocation2 + $0x2d8] sm:$0xff]
          %v2923 = vld [vmem:[#allocation2 + $0x2e0] sm:$0xff]
          %v2924 = vld [vmem:[#allocation2 + $0x2e8] sm:$0xff]
          %v2925 = vld [vmem:[#allocation2 + $0x2f0] sm:$0xff]
          %v2926 = vld [vmem:[#allocation2 + $0x2f8] sm:$0xff]
          %v2927 = vld [vmem:[#allocation2 + $0x300] sm:$0xff]
          %v2928 = vld [vmem:[#allocation2 + $0x308] sm:$0xff]
          %v2929 = vld [vmem:[#allocation2 + $0x310] sm:$0xff]
          %v2930 = vld [vmem:[#allocation2 + $0x318] sm:$0xff]
          %v2931 = vld [vmem:[#allocation2 + $0x320] sm:$0xff]
          %v2932 = vld [vmem:[#allocation2 + $0x328] sm:$0xff]
          %v2933 = vld [vmem:[#allocation2 + $0x330] sm:$0xff]
          %v2934 = vld [vmem:[#allocation2 + $0x338] sm:$0xff]
          %v2935 = vld [vmem:[#allocation2 + $0x340] sm:$0xff]
          %v2936 = vld [vmem:[#allocation2 + $0x348] sm:$0xff]
          %v2937 = vld [vmem:[#allocation2 + $0x350] sm:$0xff]
          %v2938 = vld [vmem:[#allocation2 + $0x358] sm:$0xff]
          %v2939 = vld [vmem:[#allocation2 + $0x360] sm:$0xff]
          %v2940 = vld [vmem:[#allocation2 + $0x368] sm:$0xff]
          %v2941 = vld [vmem:[#allocation2 + $0x370] sm:$0xff]
          %v2942 = vld [vmem:[#allocation2 + $0x378] sm:$0xff]
          %v2943 = vld [vmem:[#allocation2 + $0x380] sm:$0xff]
          %v2944 = vld [vmem:[#allocation2 + $0x388] sm:$0xff]
          %v2945 = vld [vmem:[#allocation2 + $0x390] sm:$0xff]
          %v2946 = vld [vmem:[#allocation2 + $0x398] sm:$0xff]
          %v2947 = vld [vmem:[#allocation2 + $0x3a0] sm:$0xff]
          %v2948 = vld [vmem:[#allocation2 + $0x3a8] sm:$0xff]
          %v2949 = vld [vmem:[#allocation2 + $0x3b0] sm:$0xff]
          %v2950 = vld [vmem:[#allocation2 + $0x3b8] sm:$0xff]
          %v2951 = vld [vmem:[#allocation2 + $0x3c0] sm:$0xff]
          %v2952 = vld [vmem:[#allocation2 + $0x3c8] sm:$0xff]
          %v2953 = vld [vmem:[#allocation2 + $0x3d0] sm:$0xff]
          %v2954 = vld [vmem:[#allocation2 + $0x3d8] sm:$0xff]
          %v2955 = vld [vmem:[#allocation2 + $0x3e0] sm:$0xff]
          %v2956 = vld [vmem:[#allocation2 + $0x3e8] sm:$0xff]
          %v2957 = vld [vmem:[#allocation2 + $0x3f0] sm:$0xff]
          %v2958 = vld [vmem:[#allocation2 + $0x3f8] sm:$0xff]
          %v2959 = vld [vmem:[#allocation2 + $0x400] sm:$0xff]
          %v2960 = vld [vmem:[#allocation2 + $0x408] sm:$0xff]
          %v2961 = vld [vmem:[#allocation2 + $0x410] sm:$0xff]
          %v2962 = vld [vmem:[#allocation2 + $0x418] sm:$0xff]
          %v2963 = vld [vmem:[#allocation2 + $0x420] sm:$0xff]
          %v2964 = vld [vmem:[#allocation2 + $0x428] sm:$0xff]
          %v2965 = vld [vmem:[#allocation2 + $0x430] sm:$0xff]
          %v2966 = vld [vmem:[#allocation2 + $0x438] sm:$0xff]
          %v2967 = vld [vmem:[#allocation2 + $0x440] sm:$0xff]
          %v2968 = vld [vmem:[#allocation2 + $0x448] sm:$0xff]
          %v2969 = vld [vmem:[#allocation2 + $0x450] sm:$0xff]
          %v2970 = vld [vmem:[#allocation2 + $0x458] sm:$0xff]
          %v2971 = vld [vmem:[#allocation2 + $0x460] sm:$0xff]
          %v2972 = vld [vmem:[#allocation2 + $0x468] sm:$0xff]
          %v2973 = vld [vmem:[#allocation2 + $0x470] sm:$0xff]
          %v2974 = vld [vmem:[#allocation2 + $0x478] sm:$0xff]
          %v2975 = vld [vmem:[#allocation2 + $0x480] sm:$0xff]
          %v2976 = vld [vmem:[#allocation2 + $0x488] sm:$0xff]
          %v2977 = vld [vmem:[#allocation2 + $0x490] sm:$0xff]
          %v2978 = vld [vmem:[#allocation2 + $0x498] sm:$0xff]
          %v2979 = vld [vmem:[#allocation2 + $0x4a0] sm:$0xff]
          %v2980 = vld [vmem:[#allocation2 + $0x4a8] sm:$0xff]
          %v2981 = vld [vmem:[#allocation2 + $0x4b0] sm:$0xff]
          %v2982 = vld [vmem:[#allocation2 + $0x4b8] sm:$0xff]
          %v2983 = vld [vmem:[#allocation2 + $0x4c0] sm:$0xff]
          %v2984 = vld [vmem:[#allocation2 + $0x4c8] sm:$0xff]
          %v2985 = vld [vmem:[#allocation2 + $0x4d0] sm:$0xff]
          %v2986 = vld [vmem:[#allocation2 + $0x4d8] sm:$0xff]
          %v2987 = vld [vmem:[#allocation2 + $0x4e0] sm:$0xff]
          %v2988 = vld [vmem:[#allocation2 + $0x4e8] sm:$0xff]
          %v2989 = vld [vmem:[#allocation2 + $0x4f0] sm:$0xff]
          %v2990 = vld [vmem:[#allocation2 + $0x4f8] sm:$0xff]
          %v2991 = vld [vmem:[#allocation2 + $0x500] sm:$0xff]
          %v2992 = vld [vmem:[#allocation2 + $0x508] sm:$0xff]
          %v2993 = vld [vmem:[#allocation2 + $0x510] sm:$0xff]
          %v2994 = vld [vmem:[#allocation2 + $0x518] sm:$0xff]
          %v2995 = vld [vmem:[#allocation2 + $0x520] sm:$0xff]
          %v2996 = vld [vmem:[#allocation2 + $0x528] sm:$0xff]
          %v2997 = vld [vmem:[#allocation2 + $0x530] sm:$0xff]
          %v2998 = vld [vmem:[#allocation2 + $0x538] sm:$0xff]
          %v2999 = vld [vmem:[#allocation2 + $0x540] sm:$0xff]
          %v3000 = vld [vmem:[#allocation2 + $0x548] sm:$0xff]
          %v3001 = vld [vmem:[#allocation2 + $0x550] sm:$0xff]
          %v3002 = vld [vmem:[#allocation2 + $0x558] sm:$0xff]
          %v3003 = vld [vmem:[#allocation2 + $0x560] sm:$0xff]
          %v3004 = vld [vmem:[#allocation2 + $0x568] sm:$0xff]
          %v3005 = vld [vmem:[#allocation2 + $0x570] sm:$0xff]
          %v3006 = vld [vmem:[#allocation2 + $0x578] sm:$0xff]
          %v3007 = vld [vmem:[#allocation2 + $0x580] sm:$0xff]
          %v3008 = vld [vmem:[#allocation2 + $0x588] sm:$0xff]
          %v3009 = vld [vmem:[#allocation2 + $0x590] sm:$0xff]
          %v3010 = vld [vmem:[#allocation2 + $0x598] sm:$0xff]
          %v3011 = vld [vmem:[#allocation2 + $0x5a0] sm:$0xff]
          %v3012 = vld [vmem:[#allocation2 + $0x5a8] sm:$0xff]
          %v3013 = vld [vmem:[#allocation2 + $0x5b0] sm:$0xff]
          %v3014 = vld [vmem:[#allocation2 + $0x5b8] sm:$0xff]
          %v3015 = vld [vmem:[#allocation2 + $0x5c0] sm:$0xff]
          %v3016 = vld [vmem:[#allocation2 + $0x5c8] sm:$0xff]
          %v3017 = vld [vmem:[#allocation2 + $0x5d0] sm:$0xff]
          %v3018 = vld [vmem:[#allocation2 + $0x5d8] sm:$0xff]
          %v3019 = vld [vmem:[#allocation2 + $0x5e0] sm:$0xff]
          %v3020 = vld [vmem:[#allocation2 + $0x5e8] sm:$0xff]
          %v3021 = vld [vmem:[#allocation2 + $0x5f0] sm:$0xff]
          %v3022 = vld [vmem:[#allocation2 + $0x5f8] sm:$0xff]
          %v3023 = vld [vmem:[#allocation2 + $0x600] sm:$0xff]
          %v3024 = vld [vmem:[#allocation2 + $0x608] sm:$0xff]
          %v3025 = vld [vmem:[#allocation2 + $0x610] sm:$0xff]
          %v3026 = vld [vmem:[#allocation2 + $0x618] sm:$0xff]
          %v3027 = vld [vmem:[#allocation2 + $0x620] sm:$0xff]
          %v3028 = vld [vmem:[#allocation2 + $0x628] sm:$0xff]
          %v3029 = vld [vmem:[#allocation2 + $0x630] sm:$0xff]
          %v3030 = vld [vmem:[#allocation2 + $0x638] sm:$0xff]
          %v3031 = vld [vmem:[#allocation2 + $0x640] sm:$0xff]
          %v3032 = vld [vmem:[#allocation2 + $0x648] sm:$0xff]
          %v3033 = vld [vmem:[#allocation2 + $0x650] sm:$0xff]
          %v3034 = vld [vmem:[#allocation2 + $0x658] sm:$0xff]
          %v3035 = vld [vmem:[#allocation2 + $0x660] sm:$0xff]
          %v3036 = vld [vmem:[#allocation2 + $0x668] sm:$0xff]
          %v3037 = vld [vmem:[#allocation2 + $0x670] sm:$0xff]
          %v3038 = vld [vmem:[#allocation2 + $0x678] sm:$0xff]
          %v3039 = vld [vmem:[#allocation2 + $0x680] sm:$0xff]
          %v3040 = vld [vmem:[#allocation2 + $0x688] sm:$0xff]
          %v3041 = vld [vmem:[#allocation2 + $0x690] sm:$0xff]
          %v3042 = vld [vmem:[#allocation2 + $0x698] sm:$0xff]
          %v3043 = vld [vmem:[#allocation2 + $0x6a0] sm:$0xff]
          %v3044 = vld [vmem:[#allocation2 + $0x6a8] sm:$0xff]
          %v3045 = vld [vmem:[#allocation2 + $0x6b0] sm:$0xff]
          %v3046 = vld [vmem:[#allocation2 + $0x6b8] sm:$0xff]
          %v3047 = vld [vmem:[#allocation2 + $0x6c0] sm:$0xff]
          %v3048 = vld [vmem:[#allocation2 + $0x6c8] sm:$0xff]
          %v3049 = vld [vmem:[#allocation2 + $0x6d0] sm:$0xff]
          %v3050 = vld [vmem:[#allocation2 + $0x6d8] sm:$0xff]
          %v3051 = vld [vmem:[#allocation2 + $0x6e0] sm:$0xff]
          %v3052 = vld [vmem:[#allocation2 + $0x6e8] sm:$0xff]
          %v3053 = vld [vmem:[#allocation2 + $0x6f0] sm:$0xff]
          %v3054 = vld [vmem:[#allocation2 + $0x6f8] sm:$0xff]
          %v3055 = vld [vmem:[#allocation2 + $0x700] sm:$0xff]
          %v3056 = vld [vmem:[#allocation2 + $0x708] sm:$0xff]
          %v3057 = vld [vmem:[#allocation2 + $0x710] sm:$0xff]
          %v3058 = vld [vmem:[#allocation2 + $0x718] sm:$0xff]
          %v3059 = vld [vmem:[#allocation2 + $0x720] sm:$0xff]
          %v3060 = vld [vmem:[#allocation2 + $0x728] sm:$0xff]
          %v3061 = vld [vmem:[#allocation2 + $0x730] sm:$0xff]
          %v3062 = vld [vmem:[#allocation2 + $0x738] sm:$0xff]
          %v3063 = vld [vmem:[#allocation2 + $0x740] sm:$0xff]
          %v3064 = vld [vmem:[#allocation2 + $0x748] sm:$0xff]
          %v3065 = vld [vmem:[#allocation2 + $0x750] sm:$0xff]
          %v3066 = vld [vmem:[#allocation2 + $0x758] sm:$0xff]
          %v3067 = vld [vmem:[#allocation2 + $0x760] sm:$0xff]
          %v3068 = vld [vmem:[#allocation2 + $0x768] sm:$0xff]
          %v3069 = vld [vmem:[#allocation2 + $0x770] sm:$0xff]
          %v3070 = vld [vmem:[#allocation2 + $0x778] sm:$0xff]
          %v3071 = vld [vmem:[#allocation2 + $0x780] sm:$0xff]
          %v3072 = vld [vmem:[#allocation2 + $0x788] sm:$0xff]
          %v3073 = vld [vmem:[#allocation2 + $0x790] sm:$0xff]
          %v3074 = vld [vmem:[#allocation2 + $0x798] sm:$0xff]
          %v3075 = vld [vmem:[#allocation2 + $0x7a0] sm:$0xff]
          %v3076 = vld [vmem:[#allocation2 + $0x7a8] sm:$0xff]
          %v3077 = vld [vmem:[#allocation2 + $0x7b0] sm:$0xff]
          %v3078 = vld [vmem:[#allocation2 + $0x7b8] sm:$0xff]
          %v3079 = vld [vmem:[#allocation2 + $0x7c0] sm:$0xff]
          %v3080 = vld [vmem:[#allocation2 + $0x7c8] sm:$0xff]
          %v3081 = vld [vmem:[#allocation2 + $0x7d0] sm:$0xff]
          %v3082 = vld [vmem:[#allocation2 + $0x7d8] sm:$0xff]
          %v3083 = vld [vmem:[#allocation2 + $0x7e0] sm:$0xff]
          %v3084 = vld [vmem:[#allocation2 + $0x7e8] sm:$0xff]
          %v3085 = vld [vmem:[#allocation2 + $0x7f0] sm:$0xff]
          %v3086 = vld [vmem:[#allocation2 + $0x7f8] sm:$0xff]
          %v3087 = vadd.f32 %v2831, %v2832
          %v3088 = vadd.f32 %v3087, %v2833
          %v3089 = vadd.f32 %v3088, %v2834
          %v3090 = vadd.f32 %v3089, %v2835
          %v3091 = vadd.f32 %v3090, %v2836
          %v3092 = vadd.f32 %v3091, %v2837
          %v3093 = vadd.f32 %v3092, %v2838
          %v3094 = vadd.f32 %v3093, %v2839
          %v3095 = vadd.f32 %v3094, %v2840
          %v3096 = vadd.f32 %v3095, %v2841
          %v3097 = vadd.f32 %v3096, %v2842
          %v3098 = vadd.f32 %v3097, %v2843
          %v3099 = vadd.f32 %v3098, %v2844
          %v3100 = vadd.f32 %v3099, %v2845
          %v3101 = vadd.f32 %v3100, %v2846
          %v3102 = vadd.f32 %v3101, %v2847
          %v3103 = vadd.f32 %v3102, %v2848
          %v3104 = vadd.f32 %v3103, %v2849
          %v3105 = vadd.f32 %v3104, %v2850
          %v3106 = vadd.f32 %v3105, %v2851
          %v3107 = vadd.f32 %v3106, %v2852
          %v3108 = vadd.f32 %v3107, %v2853
          %v3109 = vadd.f32 %v3108, %v2854
          %v3110 = vadd.f32 %v3109, %v2855
          %v3111 = vadd.f32 %v3110, %v2856
          %v3112 = vadd.f32 %v3111, %v2857
          %v3113 = vadd.f32 %v3112, %v2858
          %v3114 = vadd.f32 %v3113, %v2859
          %v3115 = vadd.f32 %v3114, %v2860
          %v3116 = vadd.f32 %v3115, %v2861
          %v3117 = vadd.f32 %v3116, %v2862
          %v3118 = vadd.f32 %v3117, %v2863
          %v3119 = vadd.f32 %v3118, %v2864
          %v3120 = vadd.f32 %v3119, %v2865
          %v3121 = vadd.f32 %v3120, %v2866
          %v3122 = vadd.f32 %v3121, %v2867
          %v3123 = vadd.f32 %v3122, %v2868
          %v3124 = vadd.f32 %v3123, %v2869
          %v3125 = vadd.f32 %v3124, %v2870
          %v3126 = vadd.f32 %v3125, %v2871
          %v3127 = vadd.f32 %v3126, %v2872
          %v3128 = vadd.f32 %v3127, %v2873
          %v3129 = vadd.f32 %v3128, %v2874
          %v3130 = vadd.f32 %v3129, %v2875
          %v3131 = vadd.f32 %v3130, %v2876
          %v3132 = vadd.f32 %v3131, %v2877
          %v3133 = vadd.f32 %v3132, %v2878
          %v3134 = vadd.f32 %v3133, %v2879
          %v3135 = vadd.f32 %v3134, %v2880
          %v3136 = vadd.f32 %v3135, %v2881
          %v3137 = vadd.f32 %v3136, %v2882
          %v3138 = vadd.f32 %v3137, %v2883
          %v3139 = vadd.f32 %v3138, %v2884
          %v3140 = vadd.f32 %v3139, %v2885
          %v3141 = vadd.f32 %v3140, %v2886
          %v3142 = vadd.f32 %v3141, %v2887
          %v3143 = vadd.f32 %v3142, %v2888
          %v3144 = vadd.f32 %v3143, %v2889
          %v3145 = vadd.f32 %v3144, %v2890
          %v3146 = vadd.f32 %v3145, %v2891
          %v3147 = vadd.f32 %v3146, %v2892
          %v3148 = vadd.f32 %v3147, %v2893
          %v3149 = vadd.f32 %v3148, %v2894
          %v3150 = vadd.f32 %v3149, %v2895
          %v3151 = vadd.f32 %v3150, %v2896
          %v3152 = vadd.f32 %v3151, %v2897
          %v3153 = vadd.f32 %v3152, %v2898
          %v3154 = vadd.f32 %v3153, %v2899
          %v3155 = vadd.f32 %v3154, %v2900
          %v3156 = vadd.f32 %v3155, %v2901
          %v3157 = vadd.f32 %v3156, %v2902
          %v3158 = vadd.f32 %v3157, %v2903
          %v3159 = vadd.f32 %v3158, %v2904
          %v3160 = vadd.f32 %v3159, %v2905
          %v3161 = vadd.f32 %v3160, %v2906
          %v3162 = vadd.f32 %v3161, %v2907
          %v3163 = vadd.f32 %v3162, %v2908
          %v3164 = vadd.f32 %v3163, %v2909
          %v3165 = vadd.f32 %v3164, %v2910
          %v3166 = vadd.f32 %v3165, %v2911
          %v3167 = vadd.f32 %v3166, %v2912
          %v3168 = vadd.f32 %v3167, %v2913
          %v3169 = vadd.f32 %v3168, %v2914
          %v3170 = vadd.f32 %v3169, %v2915
          %v3171 = vadd.f32 %v3170, %v2916
          %v3172 = vadd.f32 %v3171, %v2917
          %v3173 = vadd.f32 %v3172, %v2918
          %v3174 = vadd.f32 %v3173, %v2919
          %v3175 = vadd.f32 %v3174, %v2920
          %v3176 = vadd.f32 %v3175, %v2921
          %v3177 = vadd.f32 %v3176, %v2922
          %v3178 = vadd.f32 %v3177, %v2923
          %v3179 = vadd.f32 %v3178, %v2924
          %v3180 = vadd.f32 %v3179, %v2925
          %v3181 = vadd.f32 %v3180, %v2926
          %v3182 = vadd.f32 %v3181, %v2927
          %v3183 = vadd.f32 %v3182, %v2928
          %v3184 = vadd.f32 %v3183, %v2929
          %v3185 = vadd.f32 %v3184, %v2930
          %v3186 = vadd.f32 %v3185, %v2931
          %v3187 = vadd.f32 %v3186, %v2932
          %v3188 = vadd.f32 %v3187, %v2933
          %v3189 = vadd.f32 %v3188, %v2934
          %v3190 = vadd.f32 %v3189, %v2935
          %v3191 = vadd.f32 %v3190, %v2936
          %v3192 = vadd.f32 %v3191, %v2937
          %v3193 = vadd.f32 %v3192, %v2938
          %v3194 = vadd.f32 %v3193, %v2939
          %v3195 = vadd.f32 %v3194, %v2940
          %v3196 = vadd.f32 %v3195, %v2941
          %v3197 = vadd.f32 %v3196, %v2942
          %v3198 = vadd.f32 %v3197, %v2943
          %v3199 = vadd.f32 %v3198, %v2944
          %v3200 = vadd.f32 %v3199, %v2945
          %v3201 = vadd.f32 %v3200, %v2946
          %v3202 = vadd.f32 %v3201, %v2947
          %v3203 = vadd.f32 %v3202, %v2948
          %v3204 = vadd.f32 %v3203, %v2949
          %v3205 = vadd.f32 %v3204, %v2950
          %v3206 = vadd.f32 %v3205, %v2951
          %v3207 = vadd.f32 %v3206, %v2952
          %v3208 = vadd.f32 %v3207, %v2953
          %v3209 = vadd.f32 %v3208, %v2954
          %v3210 = vadd.f32 %v3209, %v2955
          %v3211 = vadd.f32 %v3210, %v2956
          %v3212 = vadd.f32 %v3211, %v2957
          %v3213 = vadd.f32 %v3212, %v2958
          %v3214 = vadd.f32 %v3213, %v2959
          %v3215 = vadd.f32 %v3214, %v2960
          %v3216 = vadd.f32 %v3215, %v2961
          %v3217 = vadd.f32 %v3216, %v2962
          %v3218 = vadd.f32 %v3217, %v2963
          %v3219 = vadd.f32 %v3218, %v2964
          %v3220 = vadd.f32 %v3219, %v2965
          %v3221 = vadd.f32 %v3220, %v2966
          %v3222 = vadd.f32 %v3221, %v2967
          %v3223 = vadd.f32 %v3222, %v2968
          %v3224 = vadd.f32 %v3223, %v2969
          %v3225 = vadd.f32 %v3224, %v2970
          %v3226 = vadd.f32 %v3225, %v2971
          %v3227 = vadd.f32 %v3226, %v2972
          %v3228 = vadd.f32 %v3227, %v2973
          %v3229 = vadd.f32 %v3228, %v2974
          %v3230 = vadd.f32 %v3229, %v2975
          %v3231 = vadd.f32 %v3230, %v2976
          %v3232 = vadd.f32 %v3231, %v2977
          %v3233 = vadd.f32 %v3232, %v2978
          %v3234 = vadd.f32 %v3233, %v2979
          %v3235 = vadd.f32 %v3234, %v2980
          %v3236 = vadd.f32 %v3235, %v2981
          %v3237 = vadd.f32 %v3236, %v2982
          %v3238 = vadd.f32 %v3237, %v2983
          %v3239 = vadd.f32 %v3238, %v2984
          %v3240 = vadd.f32 %v3239, %v2985
          %v3241 = vadd.f32 %v3240, %v2986
          %v3242 = vadd.f32 %v3241, %v2987
          %v3243 = vadd.f32 %v3242, %v2988
          %v3244 = vadd.f32 %v3243, %v2989
          %v3245 = vadd.f32 %v3244, %v2990
          %v3246 = vadd.f32 %v3245, %v2991
          %v3247 = vadd.f32 %v3246, %v2992
          %v3248 = vadd.f32 %v3247, %v2993
          %v3249 = vadd.f32 %v3248, %v2994
          %v3250 = vadd.f32 %v3249, %v2995
          %v3251 = vadd.f32 %v3250, %v2996
          %v3252 = vadd.f32 %v3251, %v2997
          %v3253 = vadd.f32 %v3252, %v2998
          %v3254 = vadd.f32 %v3253, %v2999
          %v3255 = vadd.f32 %v3254, %v3000
          %v3256 = vadd.f32 %v3255, %v3001
          %v3257 = vadd.f32 %v3256, %v3002
          %v3258 = vadd.f32 %v3257, %v3003
          %v3259 = vadd.f32 %v3258, %v3004
          %v3260 = vadd.f32 %v3259, %v3005
          %v3261 = vadd.f32 %v3260, %v3006
          %v3262 = vadd.f32 %v3261, %v3007
          %v3263 = vadd.f32 %v3262, %v3008
          %v3264 = vadd.f32 %v3263, %v3009
          %v3265 = vadd.f32 %v3264, %v3010
          %v3266 = vadd.f32 %v3265, %v3011
          %v3267 = vadd.f32 %v3266, %v3012
          %v3268 = vadd.f32 %v3267, %v3013
          %v3269 = vadd.f32 %v3268, %v3014
          %v3270 = vadd.f32 %v3269, %v3015
          %v3271 = vadd.f32 %v3270, %v3016
          %v3272 = vadd.f32 %v3271, %v3017
          %v3273 = vadd.f32 %v3272, %v3018
          %v3274 = vadd.f32 %v3273, %v3019
          %v3275 = vadd.f32 %v3274, %v3020
          %v3276 = vadd.f32 %v3275, %v3021
          %v3277 = vadd.f32 %v3276, %v3022
          %v3278 = vadd.f32 %v3277, %v3023
          %v3279 = vadd.f32 %v3278, %v3024
          %v3280 = vadd.f32 %v3279, %v3025
          %v3281 = vadd.f32 %v3280, %v3026
          %v3282 = vadd.f32 %v3281, %v3027
          %v3283 = vadd.f32 %v3282, %v3028
          %v3284 = vadd.f32 %v3283, %v3029
          %v3285 = vadd.f32 %v3284, %v3030
          %v3286 = vadd.f32 %v3285, %v3031
          %v3287 = vadd.f32 %v3286, %v3032
          %v3288 = vadd.f32 %v3287, %v3033
          %v3289 = vadd.f32 %v3288, %v3034
          %v3290 = vadd.f32 %v3289, %v3035
          %v3291 = vadd.f32 %v3290, %v3036
          %v3292 = vadd.f32 %v3291, %v3037
          %v3293 = vadd.f32 %v3292, %v3038
          %v3294 = vadd.f32 %v3293, %v3039
          %v3295 = vadd.f32 %v3294, %v3040
          %v3296 = vadd.f32 %v3295, %v3041
          %v3297 = vadd.f32 %v3296, %v3042
          %v3298 = vadd.f32 %v3297, %v3043
          %v3299 = vadd.f32 %v3298, %v3044
          %v3300 = vadd.f32 %v3299, %v3045
          %v3301 = vadd.f32 %v3300, %v3046
          %v3302 = vadd.f32 %v3301, %v3047
          %v3303 = vadd.f32 %v3302, %v3048
          %v3304 = vadd.f32 %v3303, %v3049
          %v3305 = vadd.f32 %v3304, %v3050
          %v3306 = vadd.f32 %v3305, %v3051
          %v3307 = vadd.f32 %v3306, %v3052
          %v3308 = vadd.f32 %v3307, %v3053
          %v3309 = vadd.f32 %v3308, %v3054
          %v3310 = vadd.f32 %v3309, %v3055
          %v3311 = vadd.f32 %v3310, %v3056
          %v3312 = vadd.f32 %v3311, %v3057
          %v3313 = vadd.f32 %v3312, %v3058
          %v3314 = vadd.f32 %v3313, %v3059
          %v3315 = vadd.f32 %v3314, %v3060
          %v3316 = vadd.f32 %v3315, %v3061
          %v3317 = vadd.f32 %v3316, %v3062
          %v3318 = vadd.f32 %v3317, %v3063
          %v3319 = vadd.f32 %v3318, %v3064
          %v3320 = vadd.f32 %v3319, %v3065
          %v3321 = vadd.f32 %v3320, %v3066
          %v3322 = vadd.f32 %v3321, %v3067
          %v3323 = vadd.f32 %v3322, %v3068
          %v3324 = vadd.f32 %v3323, %v3069
          %v3325 = vadd.f32 %v3324, %v3070
          %v3326 = vadd.f32 %v3325, %v3071
          %v3327 = vadd.f32 %v3326, %v3072
          %v3328 = vadd.f32 %v3327, %v3073
          %v3329 = vadd.f32 %v3328, %v3074
          %v3330 = vadd.f32 %v3329, %v3075
          %v3331 = vadd.f32 %v3330, %v3076
          %v3332 = vadd.f32 %v3331, %v3077
          %v3333 = vadd.f32 %v3332, %v3078
          %v3334 = vadd.f32 %v3333, %v3079
          %v3335 = vadd.f32 %v3334, %v3080
          %v3336 = vadd.f32 %v3335, %v3081
          %v3337 = vadd.f32 %v3336, %v3082
          %v3338 = vadd.f32 %v3337, %v3083
          %v3339 = vadd.f32 %v3338, %v3084
          %v3340 = vadd.f32 %v3339, %v3085
          %v3341 = vadd.f32 %v3340, %v3086
          %3342 = vadd.xlane.f32.xlu0 %v3341
          %v3343 = vpop.xlane.xlu0 %3342
          %v3344 = vrot.slane %v3343, 4
          %v3345 = vadd.f32 %v3343, %v3344
          %v3346 = vrot.slane %v3345, 2
          %v3347 = vadd.f32 %v3345, %v3346
          %v3348 = vrot.slane %v3347, 1
          %v3349 = vadd.f32 %v3347, %v3348
          %s3350 = vtos %v3349
          %v3351 = vstv %s3350
          %vm3352 = vcmask 0
          %3353 = vst.msk [vmem:[#allocation9] sm:$0x1] %vm3352, %v3351
        $region52: #{tpu_custom_call.1} parent=31 // pred_fallthru
          _
        // Predicated region
        $region53: #{tpu_custom_call.1} parent=31 // pred_check
          %p3354 = pneg %p112
        $region54: #{tpu_custom_call.1} parent=31 // pred_check_branch
          %3356 = sbr.rel (%p3354) target = $region56
        $region55: #{tpu_custom_call.1} parent=31 // pred_region
          %3358 = vsyncadd [#allocation5], 0
          %s3360 = sshll.u32 [#allocation9], 4
          %s3361 = int_to_ptr.vmem [resolvable:$true] %s3360
          %s3362 = sshll.u32 %s3, 4
          %s3363 = int_to_ptr.hbm [resolvable:$true] %s3362
          %3365 = dma.vmem_to_hbm [thread:$0]  %s3361, 16, %s3363, [#allocation5]
        $region56: #{tpu_custom_call.1} parent=31 // pred_fallthru
          _
        // Predicated region
        $region57: #{tpu_custom_call.1} parent=31 // pred_check
          %p3366 = pneg %p112
        $region58: #{tpu_custom_call.1} parent=31 // pred_check_branch
          %3368 = sbr.rel (%p3366) target = $region60
        $region59: #{tpu_custom_call.1} parent=31 // pred_region
          %3370 = dma.done [#allocation5], 16
        $region60: #{tpu_custom_call.1} parent=31 // pred_fallthru
          _
      $region32: #{tpu_custom_call.1} parent=5 // pred_fallthru
        _
      %p3371 = scmp.le.s32.totalorder 2, %s16
      // Predicated region
      $region61: #{tpu_custom_call.1} parent=5 // pred_check
        %p3372 = pneg %p3371
      $region62: #{tpu_custom_call.1} parent=5 // pred_check_branch
        %3374 = sbr.rel (%p3372) target = $region64
      $region63: #{tpu_custom_call.1} parent=5 // pred_region
        %s3375 = ssub.s32 %s16, 2
      $region64: #{tpu_custom_call.1} parent=5 // pred_fallthru
        _
    $region6: #{tpu_custom_call.1} parent=1 // loop_footer
      %s20 = sadd.s32 1, %s16
    $region7: #{tpu_custom_call.1} parent=1 // loop_footer_branch
      %15 = sbr.rel target = $region3
    $region8: #{tpu_custom_call.1} parent=1 // loop_exit
      _
    %3376 = vsyncpa [#allocation4], 1
    %s3377 = scalar_lea.sflag [#allocation4], 1
    %3378 = vsyncpa %s3377, 1
    %3379 = vsyncpa [#allocation7], 1
    %s3380 = scalar_lea.sflag [#allocation7], 1
    %3381 = vsyncpa %s3380, 1
    %3382 = vsyncpa [#allocation5], 1
    %s3383 = scalar_lea.sflag [#allocation5], 1
    %3384 = vsyncpa %s3383, 1

</llo_original>
